<compile_context>
chip_gen: v7x
topology: tpu7x:2x2x1
jax: 0.10.0
libtpu: 0.0.40
codegen_flags: <defaults>
</compile_context>

<pallas_src>
import functools

import jax
import jax.numpy as jnp
from jax.experimental import pallas as pl
from jax.experimental.pallas import tpu as pltpu


CIN1_PAD = 8      # conv1 input channels padded 3 -> 8 (per-tap K piece)
C_PAD = 128       # lane-dense channel width through the conv chain
C_PW = 192        # pointwise output channels
NC_PAD = 128      # fc2 output padded to at least 128 lanes, sliced at the end


# ----------------------------------------------------------------------------
# The fused kernel: one grid step == one batch element, everything in VMEM.
# ----------------------------------------------------------------------------
def _fused_kernel(x_ref,
                  w1_ref, s1_ref, sh1_ref,
                  w2_ref, s2_ref, sh2_ref,
                  dww_ref, dwb_ref, pww_ref, pwb_ref,
                  f1w_ref, f1b_ref, f2w_ref, f2b_ref,
                  o_ref, *, H, W):
    C = C_PAD
    H2, W2 = H // 2, W // 2

    # ---- conv1 3x3 (stride 1, pad 1) + folded BN + ReLU: ONE K=72 MXU dot ----
    x = x_ref[0]                                              # (H+2, W+2, 8) f32
    taps = [x[kh:kh + H, kw:kw + W, :].reshape(H * W, CIN1_PAD)
            for kh in range(3) for kw in range(3)]
    patch = jnp.concatenate(taps, axis=-1).astype(jnp.bfloat16)   # (H*W, 72)
    y = jnp.dot(patch, w1_ref[...], preferred_element_type=jnp.float32)
    y = jnp.maximum(y * s1_ref[...] + sh1_ref[...], 0.0)          # (H*W, 128) f32

    # ---- maxpool 2x2 / stride 2 (row index of y is i*W + j) ----
    y = y.reshape(H * W2, 2, C)
    y = jnp.maximum(y[:, 0], y[:, 1])                         # pool along W
    y = y.reshape(H2, 2, W2, C)
    y = jnp.maximum(y[:, 0], y[:, 1])                         # pool along H -> (H2,W2,C)

    # ---- conv2 3x3 (pad 1) + folded BN + ReLU: halo by zero-concat,
    #      ONE K=9*128=1152 MXU dot (im2col built in VMEM, 128-lane aligned) ----
    zr = jnp.zeros((1, W2, C), jnp.float32)
    zc = jnp.zeros((H2 + 2, 1, C), jnp.float32)
    yp = jnp.concatenate([zc, jnp.concatenate([zr, y, zr], axis=0), zc], axis=1)
    yp = yp.astype(jnp.bfloat16)                              # (H2+2, W2+2, 128)
    taps = [yp[kh:kh + H2, kw:kw + W2, :].reshape(H2 * W2, C)
            for kh in range(3) for kw in range(3)]
    patch = jnp.concatenate(taps, axis=-1)                    # (H2*W2, 1152) bf16
    y = jnp.dot(patch, w2_ref[...], preferred_element_type=jnp.float32)
    y = jnp.maximum(y * s2_ref[...] + sh2_ref[...], 0.0)      # (H2*W2, 128) f32
    y = y.reshape(H2, W2, C)

    # ---- depthwise 3x3 (+bias): VPU, f32, acc initialised from tap 0 ----
    yp = jnp.concatenate([zc, jnp.concatenate([zr, y, zr], axis=0), zc], axis=1)
    dww = dww_ref[...]                                        # (9, 128) f32
    acc = yp[0:H2, 0:W2, :] * dww[0].reshape(1, 1, C)
    for t in range(1, 9):
        kh, kw = t // 3, t % 3
        acc = acc + yp[kh:kh + H2, kw:kw + W2, :] * dww[t].reshape(1, 1, C)
    dwout = acc + dwb_ref[...].reshape(1, 1, C)               # (H2, W2, 128) f32

    # ---- pointwise 1x1 (+bias) ----
    pw = jnp.dot(dwout.reshape(H2 * W2, C).astype(jnp.bfloat16), pww_ref[...],
                 preferred_element_type=jnp.float32) + pwb_ref[...]   # (64, 192)

    # ---- GAP + fc1 + ReLU + fc2 (all in VMEM, f32 accumulation) ----
    g = jnp.mean(pw, axis=0, keepdims=True)                   # (1, 192) f32
    h1 = jnp.dot(g.astype(jnp.bfloat16), f1w_ref[...],
                 preferred_element_type=jnp.float32) + f1b_ref[...]
    h1 = jnp.maximum(h1, 0.0)
    logits = jnp.dot(h1.astype(jnp.bfloat16), f2w_ref[...],
                     preferred_element_type=jnp.float32) + f2b_ref[...]  # (1, ncp)

    # Output block is (1, 8, ncp) so the store is a dense (8,128) tile;
    # the wrapper reads sublane 0.
    o_ref[0] = jnp.broadcast_to(logits, (8, logits.shape[-1]))


def _fused_forward(xp, weights, *, H, W, ncp):
    """xp: (N, H+2, W+2, CIN1_PAD) f32 spatially/channel-padded NHWC input."""
    N = xp.shape[0]

    def _full(a):
        zeros = (0,) * a.ndim
        return pl.BlockSpec(a.shape, lambda n, _z=zeros: _z)

    return pl.pallas_call(
        functools.partial(_fused_kernel, H=H, W=W),
        out_shape=jax.ShapeDtypeStruct((N, 8, ncp), jnp.float32),
        grid=(N,),
        in_specs=[pl.BlockSpec((1, H + 2, W + 2, CIN1_PAD),
                               lambda n: (n, 0, 0, 0))] +
                 [_full(a) for a in weights],
        out_specs=pl.BlockSpec((1, 8, ncp), lambda n: (n, 0, 0)),
        compiler_params=pltpu.CompilerParams(
            dimension_semantics=("parallel",)),
    )(xp, *weights)


# ----------------------------------------------------------------------------
# Parameter preparation: BN folding, im2col weight layout, lane padding, bf16.
# ----------------------------------------------------------------------------
def _round_up(v, m):
    return ((v + m - 1) // m) * m


def _pad_axis(x, size, axis):
    pad = [(0, 0)] * x.ndim
    pad[axis] = (0, size - x.shape[axis])
    return jnp.pad(x, pad)


def _fold_bn(conv_b, gamma, beta, mean, var, eps=1e-5):
    scale = gamma / jnp.sqrt(var + eps)
    shift = beta + (conv_b - mean) * scale
    return scale, shift


def _conv_w_im2col(w_torch, cin_pad, cout_pad):
    """(Cout, Cin, 3, 3) -> (9*cin_pad, cout_pad) bf16; row = (kh*3+kw)*cin_pad + cin."""
    cout, cin = w_torch.shape[0], w_torch.shape[1]
    w = jnp.transpose(w_torch, (2, 3, 1, 0)).reshape(9, cin, cout)
    w = _pad_axis(_pad_axis(w, cin_pad, 1), cout_pad, 2)
    return w.reshape(9 * cin_pad, cout_pad).astype(jnp.bfloat16)


def prepare_params(p, num_classes=2):
    q = {}
    nc_pad = _round_up(max(num_classes, NC_PAD), 128)

    s1, sh1 = _fold_bn(p["conv1_b"], p["bn1_gamma"], p["bn1_beta"],
                       p["bn1_mean"], p["bn1_var"])
    q["w1"] = _conv_w_im2col(p["conv1_w"], CIN1_PAD, C_PAD)        # (72, 128)
    q["s1"] = _pad_axis(s1.reshape(1, -1), C_PAD, 1).astype(jnp.float32)
    q["sh1"] = _pad_axis(sh1.reshape(1, -1), C_PAD, 1).astype(jnp.float32)

    s2, sh2 = _fold_bn(p["conv2_b"], p["bn2_gamma"], p["bn2_beta"],
                       p["bn2_mean"], p["bn2_var"])
    q["w2"] = _conv_w_im2col(p["conv2_w"], C_PAD, C_PAD)           # (1152, 128)
    q["s2"] = _pad_axis(s2.reshape(1, -1), C_PAD, 1).astype(jnp.float32)
    q["sh2"] = _pad_axis(sh2.reshape(1, -1), C_PAD, 1).astype(jnp.float32)

    dw = p["dw_w"].reshape(p["dw_w"].shape[0], 9).T                # (9, 96) tap-major
    q["dw_w"] = _pad_axis(dw, C_PAD, 1).astype(jnp.float32)
    q["dw_b"] = _pad_axis(p["dw_b"].reshape(1, -1), C_PAD, 1).astype(jnp.float32)

    pw = p["pw_w"].reshape(C_PW, -1).T                             # (96, 192)
    q["pw_w"] = _pad_axis(pw, C_PAD, 0).astype(jnp.bfloat16)       # (128, 192)
    q["pw_b"] = p["pw_b"].reshape(1, C_PW).astype(jnp.float32)

    q["fc1_w"] = p["fc1_w"].T.astype(jnp.bfloat16)                 # (192, 1024)
    q["fc1_b"] = p["fc1_b"].reshape(1, -1).astype(jnp.float32)
    q["fc2_w"] = _pad_axis(p["fc2_w"].T, nc_pad, 1).astype(jnp.bfloat16)
    q["fc2_b"] = _pad_axis(p["fc2_b"].reshape(1, -1), nc_pad, 1).astype(jnp.float32)
    return q


def init_params(key, num_classes=2):
    ks = jax.random.split(key, 24)

    def rnd(k, shape, s=0.05):
        return s * jax.random.normal(k, shape, dtype=jnp.float32)

    p = {}
    p["conv1_w"] = rnd(ks[0], (48, 3, 3, 3))
    p["conv1_b"] = rnd(ks[1], (48,))
    p["bn1_gamma"] = 1.0 + 0.1 * jax.random.normal(ks[2], (48,), jnp.float32)
    p["bn1_beta"] = rnd(ks[3], (48,))
    p["bn1_mean"] = rnd(ks[4], (48,))
    p["bn1_var"] = 1.0 + jnp.abs(rnd(ks[5], (48,)))

    p["conv2_w"] = rnd(ks[6], (96, 48, 3, 3))
    p["conv2_b"] = rnd(ks[7], (96,))
    p["bn2_gamma"] = 1.0 + 0.1 * jax.random.normal(ks[8], (96,), jnp.float32)
    p["bn2_beta"] = rnd(ks[9], (96,))
    p["bn2_mean"] = rnd(ks[10], (96,))
    p["bn2_var"] = 1.0 + jnp.abs(rnd(ks[11], (96,)))

    p["dw_w"] = rnd(ks[12], (96, 1, 3, 3))
    p["dw_b"] = rnd(ks[13], (96,))
    p["pw_w"] = rnd(ks[14], (192, 96, 1, 1))
    p["pw_b"] = rnd(ks[15], (192,))

    p["fc1_w"] = rnd(ks[16], (1024, 192))
    p["fc1_b"] = rnd(ks[17], (1024,))
    p["fc2_w"] = rnd(ks[18], (num_classes, 1024))
    p["fc2_b"] = rnd(ks[19], (num_classes,))
    return p


# ----------------------------------------------------------------------------
# Forward pass
# ----------------------------------------------------------------------------
def efficientnet_b4_forward(q, x_nchw, num_classes=2):
    # NCHW (PyTorch) -> NHWC (kernel layout), once; one tiny XLA pad of the
    # network input (spatial halo + channels 3 -> 8).  Everything downstream
    # happens inside the single fused Pallas kernel.
    x = jnp.transpose(x_nchw, (0, 2, 3, 1)).astype(jnp.float32)
    N, H, W, cin = x.shape
    assert H % 2 == 0 and W % 2 == 0 and cin <= CIN1_PAD
    xp = jnp.pad(x, ((0, 0), (1, 1), (1, 1), (0, CIN1_PAD - cin)))

    weights = (q["w1"], q["s1"], q["sh1"],
               q["w2"], q["s2"], q["sh2"],
               q["dw_w"], q["dw_b"], q["pw_w"], q["pw_b"],
               q["fc1_w"], q["fc1_b"], q["fc2_w"], q["fc2_b"])
    ncp = q["fc2_w"].shape[1]

    out = _fused_forward(xp, weights, H=H, W=W, ncp=ncp)      # (N, 8, ncp) f32
    return out[:, 0, :num_classes]


if __name__ == "__main__":
    root = jax.random.PRNGKey(0)
    pk, xk = jax.random.split(root)
    params = init_params(pk, num_classes=2)
    prep = prepare_params(params, num_classes=2)
    x = jax.random.normal(xk, (2, 3, 16, 16), dtype=jnp.float32)  # NCHW input

    fwd = jax.jit(functools.partial(efficientnet_b4_forward, prep))
    out = jax.block_until_ready(fwd(x))

    assert out.shape == (2, 2), out.shape
    assert bool(jnp.all(jnp.isfinite(out)))
    print("KERNEL_OK")
</pallas_src>

<mosaic_0001>
module attributes {stable_mosaic.version = 11 : i64} {
  func.func @_fused_kernel(%arg0: i32, %arg1: memref<1x18x18x8xf32, #tpu.memory_space<vmem>>, %arg2: memref<72x128xbf16, #tpu.memory_space<vmem>>, %arg3: memref<1x128xf32, #tpu.memory_space<vmem>>, %arg4: memref<1x128xf32, #tpu.memory_space<vmem>>, %arg5: memref<1152x128xbf16, #tpu.memory_space<vmem>>, %arg6: memref<1x128xf32, #tpu.memory_space<vmem>>, %arg7: memref<1x128xf32, #tpu.memory_space<vmem>>, %arg8: memref<9x128xf32, #tpu.memory_space<vmem>>, %arg9: memref<1x128xf32, #tpu.memory_space<vmem>>, %arg10: memref<128x192xbf16, #tpu.memory_space<vmem>>, %arg11: memref<1x192xf32, #tpu.memory_space<vmem>>, %arg12: memref<192x1024xbf16, #tpu.memory_space<vmem>>, %arg13: memref<1x1024xf32, #tpu.memory_space<vmem>>, %arg14: memref<1024x128xbf16, #tpu.memory_space<vmem>>, %arg15: memref<1x128xf32, #tpu.memory_space<vmem>>, %arg16: memref<1x8x128xf32, #tpu.memory_space<vmem>>) attributes {dimension_semantics = [#tpu.dimension_semantics<parallel>], iteration_bounds = array<i64: 2>, scalar_prefetch = 0 : i64, scratch_operands = 0 : i64, tpu.core_type = #tpu.core_type<tc>, window_params = [{transform_indices = @transform_0, window_bounds = array<i64: 1, 18, 18, 8>}, {pipeline_mode = #tpu.pipeline_mode<synchronous>, transform_indices = @transform_1, window_bounds = array<i64: 72, 128>}, {pipeline_mode = #tpu.pipeline_mode<synchronous>, transform_indices = @transform_2, window_bounds = array<i64: 1, 128>}, {pipeline_mode = #tpu.pipeline_mode<synchronous>, transform_indices = @transform_3, window_bounds = array<i64: 1, 128>}, {pipeline_mode = #tpu.pipeline_mode<synchronous>, transform_indices = @transform_4, window_bounds = array<i64: 1152, 128>}, {pipeline_mode = #tpu.pipeline_mode<synchronous>, transform_indices = @transform_5, window_bounds = array<i64: 1, 128>}, {pipeline_mode = #tpu.pipeline_mode<synchronous>, transform_indices = @transform_6, window_bounds = array<i64: 1, 128>}, {pipeline_mode = #tpu.pipeline_mode<synchronous>, transform_indices = @transform_7, window_bounds = array<i64: 9, 128>}, {pipeline_mode = #tpu.pipeline_mode<synchronous>, transform_indices = @transform_8, window_bounds = array<i64: 1, 128>}, {pipeline_mode = #tpu.pipeline_mode<synchronous>, transform_indices = @transform_9, window_bounds = array<i64: 128, 192>}, {pipeline_mode = #tpu.pipeline_mode<synchronous>, transform_indices = @transform_10, window_bounds = array<i64: 1, 192>}, {pipeline_mode = #tpu.pipeline_mode<synchronous>, transform_indices = @transform_11, window_bounds = array<i64: 192, 1024>}, {pipeline_mode = #tpu.pipeline_mode<synchronous>, transform_indices = @transform_12, window_bounds = array<i64: 1, 1024>}, {pipeline_mode = #tpu.pipeline_mode<synchronous>, transform_indices = @transform_13, window_bounds = array<i64: 1024, 128>}, {pipeline_mode = #tpu.pipeline_mode<synchronous>, transform_indices = @transform_14, window_bounds = array<i64: 1, 128>}, {transform_indices = @transform_15, window_bounds = array<i64: 1, 8, 128>}]} {
    %c0 = arith.constant 0 : index
    %c0_0 = arith.constant 0 : index
    %c0_1 = arith.constant 0 : index
    %c0_2 = arith.constant 0 : index
    %0 = vector.load %arg1[%c0, %c0_0, %c0_1, %c0_2] : memref<1x18x18x8xf32, #tpu.memory_space<vmem>>, vector<1x18x18x8xf32>
    %1 = vector.shape_cast %0 : vector<1x18x18x8xf32> to vector<18x18x8xf32>
    %2 = vector.extract_strided_slice %1 {offsets = [0, 0, 0], sizes = [16, 16, 8], strides = [1, 1, 1]} : vector<18x18x8xf32> to vector<16x16x8xf32>
    %3 = vector.shape_cast %2 : vector<16x16x8xf32> to vector<256x8xf32>
    %4 = vector.extract_strided_slice %1 {offsets = [0, 1, 0], sizes = [16, 16, 8], strides = [1, 1, 1]} : vector<18x18x8xf32> to vector<16x16x8xf32>
    %5 = vector.shape_cast %4 : vector<16x16x8xf32> to vector<256x8xf32>
    %6 = vector.extract_strided_slice %1 {offsets = [0, 2, 0], sizes = [16, 16, 8], strides = [1, 1, 1]} : vector<18x18x8xf32> to vector<16x16x8xf32>
    %7 = vector.shape_cast %6 : vector<16x16x8xf32> to vector<256x8xf32>
    %8 = vector.extract_strided_slice %1 {offsets = [1, 0, 0], sizes = [16, 16, 8], strides = [1, 1, 1]} : vector<18x18x8xf32> to vector<16x16x8xf32>
    %9 = vector.shape_cast %8 : vector<16x16x8xf32> to vector<256x8xf32>
    %10 = vector.extract_strided_slice %1 {offsets = [1, 1, 0], sizes = [16, 16, 8], strides = [1, 1, 1]} : vector<18x18x8xf32> to vector<16x16x8xf32>
    %11 = vector.shape_cast %10 : vector<16x16x8xf32> to vector<256x8xf32>
    %12 = vector.extract_strided_slice %1 {offsets = [1, 2, 0], sizes = [16, 16, 8], strides = [1, 1, 1]} : vector<18x18x8xf32> to vector<16x16x8xf32>
    %13 = vector.shape_cast %12 : vector<16x16x8xf32> to vector<256x8xf32>
    %14 = vector.extract_strided_slice %1 {offsets = [2, 0, 0], sizes = [16, 16, 8], strides = [1, 1, 1]} : vector<18x18x8xf32> to vector<16x16x8xf32>
    %15 = vector.shape_cast %14 : vector<16x16x8xf32> to vector<256x8xf32>
    %16 = vector.extract_strided_slice %1 {offsets = [2, 1, 0], sizes = [16, 16, 8], strides = [1, 1, 1]} : vector<18x18x8xf32> to vector<16x16x8xf32>
    %17 = vector.shape_cast %16 : vector<16x16x8xf32> to vector<256x8xf32>
    %18 = vector.extract_strided_slice %1 {offsets = [2, 2, 0], sizes = [16, 16, 8], strides = [1, 1, 1]} : vector<18x18x8xf32> to vector<16x16x8xf32>
    %19 = vector.shape_cast %18 : vector<16x16x8xf32> to vector<256x8xf32>
    %20 = tpu.concatenate %3, %5, %7, %9, %11, %13, %15, %17, %19 in 1 : vector<256x8xf32>, vector<256x8xf32>, vector<256x8xf32>, vector<256x8xf32>, vector<256x8xf32>, vector<256x8xf32>, vector<256x8xf32>, vector<256x8xf32>, vector<256x8xf32> -> vector<256x72xf32>
    %21 = arith.truncf %20 : vector<256x72xf32> to vector<256x72xbf16>
    %c0_3 = arith.constant 0 : index
    %c0_4 = arith.constant 0 : index
    %22 = vector.load %arg2[%c0_3, %c0_4] : memref<72x128xbf16, #tpu.memory_space<vmem>>, vector<72x128xbf16>
    %cst = arith.constant dense<0.000000e+00> : vector<256x128xf32>
    %23 = tpu.matmul %21, %22, %cst {dimension_numbers = #tpu.dot_dimension_numbers<[1], [0], [0], [1], [0, 0, 1, 1], [], []>} : vector<256x72xbf16>, vector<72x128xbf16>, vector<256x128xf32> -> vector<256x128xf32>
    %c0_5 = arith.constant 0 : index
    %c0_6 = arith.constant 0 : index
    %24 = vector.load %arg3[%c0_5, %c0_6] : memref<1x128xf32, #tpu.memory_space<vmem>>, vector<1x128xf32>
    %25 = vector.broadcast %24 : vector<1x128xf32> to vector<256x128xf32>
    %26 = arith.mulf %23, %25 : vector<256x128xf32>
    %c0_7 = arith.constant 0 : index
    %c0_8 = arith.constant 0 : index
    %27 = vector.load %arg4[%c0_7, %c0_8] : memref<1x128xf32, #tpu.memory_space<vmem>>, vector<1x128xf32>
    %28 = vector.broadcast %27 : vector<1x128xf32> to vector<256x128xf32>
    %29 = arith.addf %26, %28 : vector<256x128xf32>
    %cst_9 = arith.constant 0.000000e+00 : f32
    %30 = vector.broadcast %cst_9 : f32 to vector<256x128xf32>
    %31 = arith.maximumf %29, %30 : vector<256x128xf32>
    %32 = vector.shape_cast %31 : vector<256x128xf32> to vector<128x2x128xf32>
    %33 = vector.extract_strided_slice %32 {offsets = [0, 0, 0], sizes = [128, 1, 128], strides = [1, 1, 1]} : vector<128x2x128xf32> to vector<128x1x128xf32>
    %34 = vector.shape_cast %33 : vector<128x1x128xf32> to vector<128x128xf32>
    %35 = vector.extract_strided_slice %32 {offsets = [0, 1, 0], sizes = [128, 1, 128], strides = [1, 1, 1]} : vector<128x2x128xf32> to vector<128x1x128xf32>
    %36 = vector.shape_cast %35 : vector<128x1x128xf32> to vector<128x128xf32>
    %37 = arith.maximumf %34, %36 : vector<128x128xf32>
    %38 = vector.shape_cast %37 : vector<128x128xf32> to vector<8x2x8x128xf32>
    %39 = vector.extract_strided_slice %38 {offsets = [0, 0, 0, 0], sizes = [8, 1, 8, 128], strides = [1, 1, 1, 1]} : vector<8x2x8x128xf32> to vector<8x1x8x128xf32>
    %40 = vector.shape_cast %39 : vector<8x1x8x128xf32> to vector<8x8x128xf32>
    %41 = vector.extract_strided_slice %38 {offsets = [0, 1, 0, 0], sizes = [8, 1, 8, 128], strides = [1, 1, 1, 1]} : vector<8x2x8x128xf32> to vector<8x1x8x128xf32>
    %42 = vector.shape_cast %41 : vector<8x1x8x128xf32> to vector<8x8x128xf32>
    %43 = arith.maximumf %40, %42 : vector<8x8x128xf32>
    %cst_10 = arith.constant 0.000000e+00 : f32
    %44 = vector.broadcast %cst_10 : f32 to vector<1x8x128xf32>
    %cst_11 = arith.constant 0.000000e+00 : f32
    %45 = vector.broadcast %cst_11 : f32 to vector<10x1x128xf32>
    %46 = tpu.concatenate %44, %43, %44 in 0 : vector<1x8x128xf32>, vector<8x8x128xf32>, vector<1x8x128xf32> -> vector<10x8x128xf32>
    %47 = tpu.concatenate %45, %46, %45 in 1 : vector<10x1x128xf32>, vector<10x8x128xf32>, vector<10x1x128xf32> -> vector<10x10x128xf32>
    %48 = arith.truncf %47 : vector<10x10x128xf32> to vector<10x10x128xbf16>
    %49 = vector.extract_strided_slice %48 {offsets = [0, 0, 0], sizes = [8, 8, 128], strides = [1, 1, 1]} : vector<10x10x128xbf16> to vector<8x8x128xbf16>
    %50 = vector.shape_cast %49 : vector<8x8x128xbf16> to vector<64x128xbf16>
    %51 = vector.extract_strided_slice %48 {offsets = [0, 1, 0], sizes = [8, 8, 128], strides = [1, 1, 1]} : vector<10x10x128xbf16> to vector<8x8x128xbf16>
    %52 = vector.shape_cast %51 : vector<8x8x128xbf16> to vector<64x128xbf16>
    %53 = vector.extract_strided_slice %48 {offsets = [0, 2, 0], sizes = [8, 8, 128], strides = [1, 1, 1]} : vector<10x10x128xbf16> to vector<8x8x128xbf16>
    %54 = vector.shape_cast %53 : vector<8x8x128xbf16> to vector<64x128xbf16>
    %55 = vector.extract_strided_slice %48 {offsets = [1, 0, 0], sizes = [8, 8, 128], strides = [1, 1, 1]} : vector<10x10x128xbf16> to vector<8x8x128xbf16>
    %56 = vector.shape_cast %55 : vector<8x8x128xbf16> to vector<64x128xbf16>
    %57 = vector.extract_strided_slice %48 {offsets = [1, 1, 0], sizes = [8, 8, 128], strides = [1, 1, 1]} : vector<10x10x128xbf16> to vector<8x8x128xbf16>
    %58 = vector.shape_cast %57 : vector<8x8x128xbf16> to vector<64x128xbf16>
    %59 = vector.extract_strided_slice %48 {offsets = [1, 2, 0], sizes = [8, 8, 128], strides = [1, 1, 1]} : vector<10x10x128xbf16> to vector<8x8x128xbf16>
    %60 = vector.shape_cast %59 : vector<8x8x128xbf16> to vector<64x128xbf16>
    %61 = vector.extract_strided_slice %48 {offsets = [2, 0, 0], sizes = [8, 8, 128], strides = [1, 1, 1]} : vector<10x10x128xbf16> to vector<8x8x128xbf16>
    %62 = vector.shape_cast %61 : vector<8x8x128xbf16> to vector<64x128xbf16>
    %63 = vector.extract_strided_slice %48 {offsets = [2, 1, 0], sizes = [8, 8, 128], strides = [1, 1, 1]} : vector<10x10x128xbf16> to vector<8x8x128xbf16>
    %64 = vector.shape_cast %63 : vector<8x8x128xbf16> to vector<64x128xbf16>
    %65 = vector.extract_strided_slice %48 {offsets = [2, 2, 0], sizes = [8, 8, 128], strides = [1, 1, 1]} : vector<10x10x128xbf16> to vector<8x8x128xbf16>
    %66 = vector.shape_cast %65 : vector<8x8x128xbf16> to vector<64x128xbf16>
    %67 = tpu.concatenate %50, %52, %54, %56, %58, %60, %62, %64, %66 in 1 : vector<64x128xbf16>, vector<64x128xbf16>, vector<64x128xbf16>, vector<64x128xbf16>, vector<64x128xbf16>, vector<64x128xbf16>, vector<64x128xbf16>, vector<64x128xbf16>, vector<64x128xbf16> -> vector<64x1152xbf16>
    %c0_12 = arith.constant 0 : index
    %c0_13 = arith.constant 0 : index
    %68 = vector.load %arg5[%c0_12, %c0_13] : memref<1152x128xbf16, #tpu.memory_space<vmem>>, vector<1152x128xbf16>
    %cst_14 = arith.constant dense<0.000000e+00> : vector<64x128xf32>
    %69 = tpu.matmul %67, %68, %cst_14 {dimension_numbers = #tpu.dot_dimension_numbers<[1], [0], [0], [1], [0, 0, 1, 1], [], []>} : vector<64x1152xbf16>, vector<1152x128xbf16>, vector<64x128xf32> -> vector<64x128xf32>
    %c0_15 = arith.constant 0 : index
    %c0_16 = arith.constant 0 : index
    %70 = vector.load %arg6[%c0_15, %c0_16] : memref<1x128xf32, #tpu.memory_space<vmem>>, vector<1x128xf32>
    %71 = vector.broadcast %70 : vector<1x128xf32> to vector<64x128xf32>
    %72 = arith.mulf %69, %71 : vector<64x128xf32>
    %c0_17 = arith.constant 0 : index
    %c0_18 = arith.constant 0 : index
    %73 = vector.load %arg7[%c0_17, %c0_18] : memref<1x128xf32, #tpu.memory_space<vmem>>, vector<1x128xf32>
    %74 = vector.broadcast %73 : vector<1x128xf32> to vector<64x128xf32>
    %75 = arith.addf %72, %74 : vector<64x128xf32>
    %cst_19 = arith.constant 0.000000e+00 : f32
    %76 = vector.broadcast %cst_19 : f32 to vector<64x128xf32>
    %77 = arith.maximumf %75, %76 : vector<64x128xf32>
    %78 = vector.shape_cast %77 : vector<64x128xf32> to vector<8x8x128xf32>
    %79 = tpu.concatenate %44, %78, %44 in 0 : vector<1x8x128xf32>, vector<8x8x128xf32>, vector<1x8x128xf32> -> vector<10x8x128xf32>
    %80 = tpu.concatenate %45, %79, %45 in 1 : vector<10x1x128xf32>, vector<10x8x128xf32>, vector<10x1x128xf32> -> vector<10x10x128xf32>
    %c0_20 = arith.constant 0 : index
    %c0_21 = arith.constant 0 : index
    %81 = vector.load %arg8[%c0_20, %c0_21] : memref<9x128xf32, #tpu.memory_space<vmem>>, vector<9x128xf32>
    %82 = vector.extract_strided_slice %80 {offsets = [0, 0, 0], sizes = [8, 8, 128], strides = [1, 1, 1]} : vector<10x10x128xf32> to vector<8x8x128xf32>
    %83 = vector.extract_strided_slice %81 {offsets = [0, 0], sizes = [1, 128], strides = [1, 1]} : vector<9x128xf32> to vector<1x128xf32>
    %84 = vector.shape_cast %83 : vector<1x128xf32> to vector<128xf32>
    %85 = vector.shape_cast %84 : vector<128xf32> to vector<1x1x128xf32>
    %86 = vector.broadcast %85 : vector<1x1x128xf32> to vector<8x8x128xf32>
    %87 = arith.mulf %82, %86 : vector<8x8x128xf32>
    %88 = vector.extract_strided_slice %80 {offsets = [0, 1, 0], sizes = [8, 8, 128], strides = [1, 1, 1]} : vector<10x10x128xf32> to vector<8x8x128xf32>
    %89 = vector.extract_strided_slice %81 {offsets = [1, 0], sizes = [1, 128], strides = [1, 1]} : vector<9x128xf32> to vector<1x128xf32>
    %90 = vector.shape_cast %89 : vector<1x128xf32> to vector<128xf32>
    %91 = vector.shape_cast %90 : vector<128xf32> to vector<1x1x128xf32>
    %92 = vector.broadcast %91 : vector<1x1x128xf32> to vector<8x8x128xf32>
    %93 = arith.mulf %88, %92 : vector<8x8x128xf32>
    %94 = arith.addf %87, %93 : vector<8x8x128xf32>
    %95 = vector.extract_strided_slice %80 {offsets = [0, 2, 0], sizes = [8, 8, 128], strides = [1, 1, 1]} : vector<10x10x128xf32> to vector<8x8x128xf32>
    %96 = vector.extract_strided_slice %81 {offsets = [2, 0], sizes = [1, 128], strides = [1, 1]} : vector<9x128xf32> to vector<1x128xf32>
    %97 = vector.shape_cast %96 : vector<1x128xf32> to vector<128xf32>
    %98 = vector.shape_cast %97 : vector<128xf32> to vector<1x1x128xf32>
    %99 = vector.broadcast %98 : vector<1x1x128xf32> to vector<8x8x128xf32>
    %100 = arith.mulf %95, %99 : vector<8x8x128xf32>
    %101 = arith.addf %94, %100 : vector<8x8x128xf32>
    %102 = vector.extract_strided_slice %80 {offsets = [1, 0, 0], sizes = [8, 8, 128], strides = [1, 1, 1]} : vector<10x10x128xf32> to vector<8x8x128xf32>
    %103 = vector.extract_strided_slice %81 {offsets = [3, 0], sizes = [1, 128], strides = [1, 1]} : vector<9x128xf32> to vector<1x128xf32>
    %104 = vector.shape_cast %103 : vector<1x128xf32> to vector<128xf32>
    %105 = vector.shape_cast %104 : vector<128xf32> to vector<1x1x128xf32>
    %106 = vector.broadcast %105 : vector<1x1x128xf32> to vector<8x8x128xf32>
    %107 = arith.mulf %102, %106 : vector<8x8x128xf32>
    %108 = arith.addf %101, %107 : vector<8x8x128xf32>
    %109 = vector.extract_strided_slice %80 {offsets = [1, 1, 0], sizes = [8, 8, 128], strides = [1, 1, 1]} : vector<10x10x128xf32> to vector<8x8x128xf32>
    %110 = vector.extract_strided_slice %81 {offsets = [4, 0], sizes = [1, 128], strides = [1, 1]} : vector<9x128xf32> to vector<1x128xf32>
    %111 = vector.shape_cast %110 : vector<1x128xf32> to vector<128xf32>
    %112 = vector.shape_cast %111 : vector<128xf32> to vector<1x1x128xf32>
    %113 = vector.broadcast %112 : vector<1x1x128xf32> to vector<8x8x128xf32>
    %114 = arith.mulf %109, %113 : vector<8x8x128xf32>
    %115 = arith.addf %108, %114 : vector<8x8x128xf32>
    %116 = vector.extract_strided_slice %80 {offsets = [1, 2, 0], sizes = [8, 8, 128], strides = [1, 1, 1]} : vector<10x10x128xf32> to vector<8x8x128xf32>
    %117 = vector.extract_strided_slice %81 {offsets = [5, 0], sizes = [1, 128], strides = [1, 1]} : vector<9x128xf32> to vector<1x128xf32>
    %118 = vector.shape_cast %117 : vector<1x128xf32> to vector<128xf32>
    %119 = vector.shape_cast %118 : vector<128xf32> to vector<1x1x128xf32>
    %120 = vector.broadcast %119 : vector<1x1x128xf32> to vector<8x8x128xf32>
    %121 = arith.mulf %116, %120 : vector<8x8x128xf32>
    %122 = arith.addf %115, %121 : vector<8x8x128xf32>
    %123 = vector.extract_strided_slice %80 {offsets = [2, 0, 0], sizes = [8, 8, 128], strides = [1, 1, 1]} : vector<10x10x128xf32> to vector<8x8x128xf32>
    %124 = vector.extract_strided_slice %81 {offsets = [6, 0], sizes = [1, 128], strides = [1, 1]} : vector<9x128xf32> to vector<1x128xf32>
    %125 = vector.shape_cast %124 : vector<1x128xf32> to vector<128xf32>
    %126 = vector.shape_cast %125 : vector<128xf32> to vector<1x1x128xf32>
    %127 = vector.broadcast %126 : vector<1x1x128xf32> to vector<8x8x128xf32>
    %128 = arith.mulf %123, %127 : vector<8x8x128xf32>
    %129 = arith.addf %122, %128 : vector<8x8x128xf32>
    %130 = vector.extract_strided_slice %80 {offsets = [2, 1, 0], sizes = [8, 8, 128], strides = [1, 1, 1]} : vector<10x10x128xf32> to vector<8x8x128xf32>
    %131 = vector.extract_strided_slice %81 {offsets = [7, 0], sizes = [1, 128], strides = [1, 1]} : vector<9x128xf32> to vector<1x128xf32>
    %132 = vector.shape_cast %131 : vector<1x128xf32> to vector<128xf32>
    %133 = vector.shape_cast %132 : vector<128xf32> to vector<1x1x128xf32>
    %134 = vector.broadcast %133 : vector<1x1x128xf32> to vector<8x8x128xf32>
    %135 = arith.mulf %130, %134 : vector<8x8x128xf32>
    %136 = arith.addf %129, %135 : vector<8x8x128xf32>
    %137 = vector.extract_strided_slice %80 {offsets = [2, 2, 0], sizes = [8, 8, 128], strides = [1, 1, 1]} : vector<10x10x128xf32> to vector<8x8x128xf32>
    %138 = vector.extract_strided_slice %81 {offsets = [8, 0], sizes = [1, 128], strides = [1, 1]} : vector<9x128xf32> to vector<1x128xf32>
    %139 = vector.shape_cast %138 : vector<1x128xf32> to vector<128xf32>
    %140 = vector.shape_cast %139 : vector<128xf32> to vector<1x1x128xf32>
    %141 = vector.broadcast %140 : vector<1x1x128xf32> to vector<8x8x128xf32>
    %142 = arith.mulf %137, %141 : vector<8x8x128xf32>
    %143 = arith.addf %136, %142 : vector<8x8x128xf32>
    %c0_22 = arith.constant 0 : index
    %c0_23 = arith.constant 0 : index
    %144 = vector.load %arg9[%c0_22, %c0_23] : memref<1x128xf32, #tpu.memory_space<vmem>>, vector<1x128xf32>
    %145 = vector.shape_cast %144 : vector<1x128xf32> to vector<1x1x128xf32>
    %146 = vector.broadcast %145 : vector<1x1x128xf32> to vector<8x8x128xf32>
    %147 = arith.addf %143, %146 : vector<8x8x128xf32>
    %148 = vector.shape_cast %147 : vector<8x8x128xf32> to vector<64x128xf32>
    %149 = arith.truncf %148 : vector<64x128xf32> to vector<64x128xbf16>
    %c0_24 = arith.constant 0 : index
    %c0_25 = arith.constant 0 : index
    %150 = vector.load %arg10[%c0_24, %c0_25] : memref<128x192xbf16, #tpu.memory_space<vmem>>, vector<128x192xbf16>
    %cst_26 = arith.constant dense<0.000000e+00> : vector<64x192xf32>
    %151 = tpu.matmul %149, %150, %cst_26 {dimension_numbers = #tpu.dot_dimension_numbers<[1], [0], [0], [1], [0, 0, 1, 1], [], []>} : vector<64x128xbf16>, vector<128x192xbf16>, vector<64x192xf32> -> vector<64x192xf32>
    %c0_27 = arith.constant 0 : index
    %c0_28 = arith.constant 0 : index
    %152 = vector.load %arg11[%c0_27, %c0_28] : memref<1x192xf32, #tpu.memory_space<vmem>>, vector<1x192xf32>
    %153 = vector.broadcast %152 : vector<1x192xf32> to vector<64x192xf32>
    %154 = arith.addf %151, %153 : vector<64x192xf32>
    %cst_29 = arith.constant dense<0.000000e+00> : vector<192xf32>
    %155 = vector.multi_reduction <add>, %154, %cst_29 [0] : vector<64x192xf32> to vector<192xf32>
    %156 = vector.shape_cast %155 : vector<192xf32> to vector<1x192xf32>
    %cst_30 = arith.constant 6.400000e+01 : f32
    %157 = vector.broadcast %cst_30 : f32 to vector<1x192xf32>
    %158 = arith.divf %156, %157 : vector<1x192xf32>
    %159 = arith.truncf %158 : vector<1x192xf32> to vector<1x192xbf16>
    %c0_31 = arith.constant 0 : index
    %c0_32 = arith.constant 0 : index
    %160 = vector.load %arg12[%c0_31, %c0_32] : memref<192x1024xbf16, #tpu.memory_space<vmem>>, vector<192x1024xbf16>
    %cst_33 = arith.constant dense<0.000000e+00> : vector<1x1024xf32>
    %161 = tpu.matmul %159, %160, %cst_33 {dimension_numbers = #tpu.dot_dimension_numbers<[1], [0], [0], [1], [0, 0, 1, 1], [], []>} : vector<1x192xbf16>, vector<192x1024xbf16>, vector<1x1024xf32> -> vector<1x1024xf32>
    %c0_34 = arith.constant 0 : index
    %c0_35 = arith.constant 0 : index
    %162 = vector.load %arg13[%c0_34, %c0_35] : memref<1x1024xf32, #tpu.memory_space<vmem>>, vector<1x1024xf32>
    %163 = arith.addf %161, %162 : vector<1x1024xf32>
    %cst_36 = arith.constant 0.000000e+00 : f32
    %164 = vector.broadcast %cst_36 : f32 to vector<1x1024xf32>
    %165 = arith.maximumf %163, %164 : vector<1x1024xf32>
    %166 = arith.truncf %165 : vector<1x1024xf32> to vector<1x1024xbf16>
    %c0_37 = arith.constant 0 : index
    %c0_38 = arith.constant 0 : index
    %167 = vector.load %arg14[%c0_37, %c0_38] : memref<1024x128xbf16, #tpu.memory_space<vmem>>, vector<1024x128xbf16>
    %cst_39 = arith.constant dense<0.000000e+00> : vector<1x128xf32>
    %168 = tpu.matmul %166, %167, %cst_39 {dimension_numbers = #tpu.dot_dimension_numbers<[1], [0], [0], [1], [0, 0, 1, 1], [], []>} : vector<1x1024xbf16>, vector<1024x128xbf16>, vector<1x128xf32> -> vector<1x128xf32>
    %c0_40 = arith.constant 0 : index
    %c0_41 = arith.constant 0 : index
    %169 = vector.load %arg15[%c0_40, %c0_41] : memref<1x128xf32, #tpu.memory_space<vmem>>, vector<1x128xf32>
    %170 = arith.addf %168, %169 : vector<1x128xf32>
    %171 = vector.shape_cast %170 : vector<1x128xf32> to vector<1x128xf32>
    %172 = vector.broadcast %171 : vector<1x128xf32> to vector<8x128xf32>
    %c0_42 = arith.constant 0 : index
    %c0_43 = arith.constant 0 : index
    %c0_44 = arith.constant 0 : index
    %173 = vector.load %arg16[%c0_42, %c0_43, %c0_44] : memref<1x8x128xf32, #tpu.memory_space<vmem>>, vector<1x8x128xf32>
    %174 = vector.shape_cast %173 : vector<1x8x128xf32> to vector<8x128xf32>
    %175 = vector.shape_cast %172 : vector<8x128xf32> to vector<1x8x128xf32>
    tpu.vector_store %arg16[%c0_42, %c0_43, %c0_44], %175 {strides = array<i32>} : memref<1x8x128xf32, #tpu.memory_space<vmem>>, vector<1x8x128xf32>,
    return
  }
  func.func @transform_0(%arg0: i32) -> (i32, i32, i32, i32) {
    %c0_i32 = arith.constant 0 : i32
    %c0_i32_0 = arith.constant 0 : i32
    %c0_i32_1 = arith.constant 0 : i32
    %c0_i32_2 = arith.constant 0 : i32
    return %arg0, %c0_i32, %c0_i32_0, %c0_i32_1 : i32, i32, i32, i32
  }
  func.func @transform_1(%arg0: i32) -> (i32, i32) {
    %c0_i32 = arith.constant 0 : i32
    %c0_i32_0 = arith.constant 0 : i32
    %c0_i32_1 = arith.constant 0 : i32
    return %c0_i32, %c0_i32_0 : i32, i32
  }
  func.func @transform_2(%arg0: i32) -> (i32, i32) {
    %c0_i32 = arith.constant 0 : i32
    %c0_i32_0 = arith.constant 0 : i32
    %c0_i32_1 = arith.constant 0 : i32
    return %c0_i32, %c0_i32_0 : i32, i32
  }
  func.func @transform_3(%arg0: i32) -> (i32, i32) {
    %c0_i32 = arith.constant 0 : i32
    %c0_i32_0 = arith.constant 0 : i32
    %c0_i32_1 = arith.constant 0 : i32
    return %c0_i32, %c0_i32_0 : i32, i32
  }
  func.func @transform_4(%arg0: i32) -> (i32, i32) {
    %c0_i32 = arith.constant 0 : i32
    %c0_i32_0 = arith.constant 0 : i32
    %c0_i32_1 = arith.constant 0 : i32
    return %c0_i32, %c0_i32_0 : i32, i32
  }
  func.func @transform_5(%arg0: i32) -> (i32, i32) {
    %c0_i32 = arith.constant 0 : i32
    %c0_i32_0 = arith.constant 0 : i32
    %c0_i32_1 = arith.constant 0 : i32
    return %c0_i32, %c0_i32_0 : i32, i32
  }
  func.func @transform_6(%arg0: i32) -> (i32, i32) {
    %c0_i32 = arith.constant 0 : i32
    %c0_i32_0 = arith.constant 0 : i32
    %c0_i32_1 = arith.constant 0 : i32
    return %c0_i32, %c0_i32_0 : i32, i32
  }
  func.func @transform_7(%arg0: i32) -> (i32, i32) {
    %c0_i32 = arith.constant 0 : i32
    %c0_i32_0 = arith.constant 0 : i32
    %c0_i32_1 = arith.constant 0 : i32
    return %c0_i32, %c0_i32_0 : i32, i32
  }
  func.func @transform_8(%arg0: i32) -> (i32, i32) {
    %c0_i32 = arith.constant 0 : i32
    %c0_i32_0 = arith.constant 0 : i32
    %c0_i32_1 = arith.constant 0 : i32
    return %c0_i32, %c0_i32_0 : i32, i32
  }
  func.func @transform_9(%arg0: i32) -> (i32, i32) {
    %c0_i32 = arith.constant 0 : i32
    %c0_i32_0 = arith.constant 0 : i32
    %c0_i32_1 = arith.constant 0 : i32
    return %c0_i32, %c0_i32_0 : i32, i32
  }
  func.func @transform_10(%arg0: i32) -> (i32, i32) {
    %c0_i32 = arith.constant 0 : i32
    %c0_i32_0 = arith.constant 0 : i32
    %c0_i32_1 = arith.constant 0 : i32
    return %c0_i32, %c0_i32_0 : i32, i32
  }
  func.func @transform_11(%arg0: i32) -> (i32, i32) {
    %c0_i32 = arith.constant 0 : i32
    %c0_i32_0 = arith.constant 0 : i32
    %c0_i32_1 = arith.constant 0 : i32
    return %c0_i32, %c0_i32_0 : i32, i32
  }
  func.func @transform_12(%arg0: i32) -> (i32, i32) {
    %c0_i32 = arith.constant 0 : i32
    %c0_i32_0 = arith.constant 0 : i32
    %c0_i32_1 = arith.constant 0 : i32
    return %c0_i32, %c0_i32_0 : i32, i32
  }
  func.func @transform_13(%arg0: i32) -> (i32, i32) {
    %c0_i32 = arith.constant 0 : i32
    %c0_i32_0 = arith.constant 0 : i32
    %c0_i32_1 = arith.constant 0 : i32
    return %c0_i32, %c0_i32_0 : i32, i32
  }
  func.func @transform_14(%arg0: i32) -> (i32, i32) {
    %c0_i32 = arith.constant 0 : i32
    %c0_i32_0 = arith.constant 0 : i32
    %c0_i32_1 = arith.constant 0 : i32
    return %c0_i32, %c0_i32_0 : i32, i32
  }
  func.func @transform_15(%arg0: i32) -> (i32, i32, i32) {
    %c0_i32 = arith.constant 0 : i32
    %c0_i32_0 = arith.constant 0 : i32
    %c0_i32_1 = arith.constant 0 : i32
    return %arg0, %c0_i32, %c0_i32_0 : i32, i32, i32
  }
}

</mosaic_0001>

<llo_original>
// kernel: efficientnet_b4_forward.1
$region0: #{efficientnet_b4_forward.1}
  #allocation0 [shape = 'u32[]', space=smem, size = 0x4, offset = 0x4, fixed_abs, tag = 'smem constant byte address 0x4 - core index']
  #allocation1 [shape = 'u32[144,128]{1,0:T(1,128)}', space=vmem, size = 0x12000, scoped, tag = 'internal scratch']
  %s0 = inlined_call_operand.vmem [shape: f32[2,18,18,8], index: 0, kind: input, shape index: {}]
  %s1 = inlined_call_operand.vmem [shape: bf16[72,128], index: 1, kind: input, shape index: {}]
  %s2 = inlined_call_operand.vmem [shape: f32[1,128], index: 2, kind: input, shape index: {}]
  %s3 = inlined_call_operand.vmem [shape: f32[1,128], index: 3, kind: input, shape index: {}]
  %s4 = inlined_call_operand.vmem [shape: bf16[1152,128], index: 4, kind: input, shape index: {}]
  %s5 = inlined_call_operand.vmem [shape: f32[1,128], index: 5, kind: input, shape index: {}]
  %s6 = inlined_call_operand.vmem [shape: f32[1,128], index: 6, kind: input, shape index: {}]
  %s7 = inlined_call_operand.vmem [shape: f32[9,128], index: 7, kind: input, shape index: {}]
  %s8 = inlined_call_operand.vmem [shape: f32[1,128], index: 8, kind: input, shape index: {}]
  %s9 = inlined_call_operand.vmem [shape: bf16[128,192], index: 9, kind: input, shape index: {}]
  %s10 = inlined_call_operand.vmem [shape: f32[1,192], index: 10, kind: input, shape index: {}]
  %s11 = inlined_call_operand.vmem [shape: bf16[192,1024], index: 11, kind: input, shape index: {}]
  %s12 = inlined_call_operand.vmem [shape: f32[1,1024], index: 12, kind: input, shape index: {}]
  %s13 = inlined_call_operand.vmem [shape: bf16[1024,128], index: 13, kind: input, shape index: {}]
  %s14 = inlined_call_operand.vmem [shape: f32[1,128], index: 14, kind: input, shape index: {}]
  %s15 = inlined_call_operand.vmem [shape: f32[2,8,128], index: 15, kind: output, shape index: {}]
  %s16 = sld [smem:[#allocation0]]
  $region93: #{efficientnet_b4_forward.1} parent=0
    _
  %s18 = ssub.s32 1, %s16
  %s19 = scalar_select 0, %s18, %s16
  loop: start=0, step=1, limit=4
  $region2: #{efficientnet_b4_forward.1} parent=0 // loop_pre_header
    _
  $region3: #{efficientnet_b4_forward.1} parent=0 // loop_header
    %s21 = sphi 0, %s25
    %p22 = scmp.ge.s32.totalorder %s21, 4
    %s31 = sphi 0, %s33
    %s34 = sphi 0, %s31
    %s35 = sphi 0, %s34
    %s51 = sphi 0, %s35
    %s55 = sphi 0, %s55
    %s57 = sphi 0, %s55
    %s58 = sphi 0, %s57
    %s72 = sphi 0, %s58
    %s76 = sphi 0, %s76
    %s78 = sphi 0, %s76
    %s79 = sphi 0, %s78
    %s93 = sphi 0, %s79
    %s97 = sphi 0, %s97
    %s99 = sphi 0, %s97
    %s100 = sphi 0, %s99
    %s114 = sphi 0, %s100
    %s118 = sphi 0, %s118
    %s120 = sphi 0, %s118
    %s121 = sphi 0, %s120
    %s135 = sphi 0, %s121
    %s139 = sphi 0, %s139
    %s141 = sphi 0, %s139
    %s142 = sphi 0, %s141
    %s156 = sphi 0, %s142
    %s160 = sphi 0, %s160
    %s162 = sphi 0, %s160
    %s163 = sphi 0, %s162
    %s177 = sphi 0, %s163
    %s181 = sphi 0, %s181
    %s183 = sphi 0, %s181
    %s184 = sphi 0, %s183
    %s198 = sphi 0, %s184
    %s202 = sphi 0, %s202
    %s204 = sphi 0, %s202
    %s205 = sphi 0, %s204
    %s219 = sphi 0, %s205
    %s223 = sphi 0, %s223
    %s225 = sphi 0, %s223
    %s226 = sphi 0, %s225
    %s240 = sphi 0, %s226
    %s244 = sphi 0, %s244
    %s246 = sphi 0, %s244
    %s247 = sphi 0, %s246
    %s261 = sphi 0, %s247
    %s265 = sphi 0, %s265
    %s267 = sphi 0, %s265
    %s268 = sphi 0, %s267
    %s282 = sphi 0, %s268
    %s286 = sphi 0, %s286
    %s288 = sphi 0, %s286
    %s289 = sphi 0, %s288
    %s303 = sphi 0, %s289
    %s307 = sphi 0, %s307
    %s309 = sphi 0, %s307
    %s310 = sphi 0, %s309
    %s324 = sphi 0, %s310
    %s328 = sphi 0, %s328
    %s330 = sphi 0, %s328
    %s331 = sphi 0, %s330
    %s345 = sphi 0, %s331
    %s351 = sphi 0, %s353
    %s354 = sphi 0, %s351
    %s355 = sphi 0, %s354
    %s371 = sphi 0, %s355
  $region4: #{efficientnet_b4_forward.1} parent=0 // loop_header_branch
    %24 = sbr.rel (%p22) target = $region8
  $region5: #{efficientnet_b4_forward.1} parent=0 // loop_body
    %s26 = ssub.s32 %s21, 1
    %s27 = ssub.s32 %s21, 2
    %s28 = sadd.s32 %s21, 1
    %s29 = ssub.s32 %s21, %s28
    %p30 = scmp.eq.s32.totalorder %s29, 0
    %s32 = sadd.s32 %s31, 1
    %s33 = scalar_select %p30, %s31, %s32
    %p36 = pneg %p30
    %p37 = scmp.eq.s32.totalorder %s21, 1
    %p38 = por %p36, %p37
    %p39 = scmp.ne.s32.totalorder %s31, %s34
    %p40 = scmp.eq.s32.totalorder %s21, 0
    %p41 = por %p39, %p40
    %p42 = scmp.ne.s32.totalorder %s31, %s34
    %p43 = scmp.eq.s32.totalorder %s26, 1
    %p44 = por %p42, %p43
    %p45 = scmp.ne.s32.totalorder %s34, %s35
    %p46 = scmp.eq.s32.totalorder %s26, 0
    %p47 = por %p45, %p46
    %p48 = scmp.ne.s32.totalorder %s34, %s35
    %p49 = scmp.eq.s32.totalorder %s27, 1
    %p50 = por %p48, %p49
    %p52 = scmp.ne.s32.totalorder %s35, %s51
    %p53 = scmp.eq.s32.totalorder %s27, 0
    %p54 = por %p52, %p53
    %s56 = sadd.s32 %s55, 1
    %p59 = scmp.eq.s32.totalorder %s21, 1
    %p60 = scmp.ne.s32.totalorder %s55, %s57
    %p61 = scmp.eq.s32.totalorder %s21, 0
    %p62 = por %p60, %p61
    %p63 = scmp.ne.s32.totalorder %s55, %s57
    %p64 = scmp.eq.s32.totalorder %s26, 1
    %p65 = por %p63, %p64
    %p66 = scmp.ne.s32.totalorder %s57, %s58
    %p67 = scmp.eq.s32.totalorder %s26, 0
    %p68 = por %p66, %p67
    %p69 = scmp.ne.s32.totalorder %s57, %s58
    %p70 = scmp.eq.s32.totalorder %s27, 1
    %p71 = por %p69, %p70
    %p73 = scmp.ne.s32.totalorder %s58, %s72
    %p74 = scmp.eq.s32.totalorder %s27, 0
    %p75 = por %p73, %p74
    %s77 = sadd.s32 %s76, 1
    %p80 = scmp.eq.s32.totalorder %s21, 1
    %p81 = scmp.ne.s32.totalorder %s76, %s78
    %p82 = scmp.eq.s32.totalorder %s21, 0
    %p83 = por %p81, %p82
    %p84 = scmp.ne.s32.totalorder %s76, %s78
    %p85 = scmp.eq.s32.totalorder %s26, 1
    %p86 = por %p84, %p85
    %p87 = scmp.ne.s32.totalorder %s78, %s79
    %p88 = scmp.eq.s32.totalorder %s26, 0
    %p89 = por %p87, %p88
    %p90 = scmp.ne.s32.totalorder %s78, %s79
    %p91 = scmp.eq.s32.totalorder %s27, 1
    %p92 = por %p90, %p91
    %p94 = scmp.ne.s32.totalorder %s79, %s93
    %p95 = scmp.eq.s32.totalorder %s27, 0
    %p96 = por %p94, %p95
    %s98 = sadd.s32 %s97, 1
    %p101 = scmp.eq.s32.totalorder %s21, 1
    %p102 = scmp.ne.s32.totalorder %s97, %s99
    %p103 = scmp.eq.s32.totalorder %s21, 0
    %p104 = por %p102, %p103
    %p105 = scmp.ne.s32.totalorder %s97, %s99
    %p106 = scmp.eq.s32.totalorder %s26, 1
    %p107 = por %p105, %p106
    %p108 = scmp.ne.s32.totalorder %s99, %s100
    %p109 = scmp.eq.s32.totalorder %s26, 0
    %p110 = por %p108, %p109
    %p111 = scmp.ne.s32.totalorder %s99, %s100
    %p112 = scmp.eq.s32.totalorder %s27, 1
    %p113 = por %p111, %p112
    %p115 = scmp.ne.s32.totalorder %s100, %s114
    %p116 = scmp.eq.s32.totalorder %s27, 0
    %p117 = por %p115, %p116
    %s119 = sadd.s32 %s118, 1
    %p122 = scmp.eq.s32.totalorder %s21, 1
    %p123 = scmp.ne.s32.totalorder %s118, %s120
    %p124 = scmp.eq.s32.totalorder %s21, 0
    %p125 = por %p123, %p124
    %p126 = scmp.ne.s32.totalorder %s118, %s120
    %p127 = scmp.eq.s32.totalorder %s26, 1
    %p128 = por %p126, %p127
    %p129 = scmp.ne.s32.totalorder %s120, %s121
    %p130 = scmp.eq.s32.totalorder %s26, 0
    %p131 = por %p129, %p130
    %p132 = scmp.ne.s32.totalorder %s120, %s121
    %p133 = scmp.eq.s32.totalorder %s27, 1
    %p134 = por %p132, %p133
    %p136 = scmp.ne.s32.totalorder %s121, %s135
    %p137 = scmp.eq.s32.totalorder %s27, 0
    %p138 = por %p136, %p137
    %s140 = sadd.s32 %s139, 1
    %p143 = scmp.eq.s32.totalorder %s21, 1
    %p144 = scmp.ne.s32.totalorder %s139, %s141
    %p145 = scmp.eq.s32.totalorder %s21, 0
    %p146 = por %p144, %p145
    %p147 = scmp.ne.s32.totalorder %s139, %s141
    %p148 = scmp.eq.s32.totalorder %s26, 1
    %p149 = por %p147, %p148
    %p150 = scmp.ne.s32.totalorder %s141, %s142
    %p151 = scmp.eq.s32.totalorder %s26, 0
    %p152 = por %p150, %p151
    %p153 = scmp.ne.s32.totalorder %s141, %s142
    %p154 = scmp.eq.s32.totalorder %s27, 1
    %p155 = por %p153, %p154
    %p157 = scmp.ne.s32.totalorder %s142, %s156
    %p158 = scmp.eq.s32.totalorder %s27, 0
    %p159 = por %p157, %p158
    %s161 = sadd.s32 %s160, 1
    %p164 = scmp.eq.s32.totalorder %s21, 1
    %p165 = scmp.ne.s32.totalorder %s160, %s162
    %p166 = scmp.eq.s32.totalorder %s21, 0
    %p167 = por %p165, %p166
    %p168 = scmp.ne.s32.totalorder %s160, %s162
    %p169 = scmp.eq.s32.totalorder %s26, 1
    %p170 = por %p168, %p169
    %p171 = scmp.ne.s32.totalorder %s162, %s163
    %p172 = scmp.eq.s32.totalorder %s26, 0
    %p173 = por %p171, %p172
    %p174 = scmp.ne.s32.totalorder %s162, %s163
    %p175 = scmp.eq.s32.totalorder %s27, 1
    %p176 = por %p174, %p175
    %p178 = scmp.ne.s32.totalorder %s163, %s177
    %p179 = scmp.eq.s32.totalorder %s27, 0
    %p180 = por %p178, %p179
    %s182 = sadd.s32 %s181, 1
    %p185 = scmp.eq.s32.totalorder %s21, 1
    %p186 = scmp.ne.s32.totalorder %s181, %s183
    %p187 = scmp.eq.s32.totalorder %s21, 0
    %p188 = por %p186, %p187
    %p189 = scmp.ne.s32.totalorder %s181, %s183
    %p190 = scmp.eq.s32.totalorder %s26, 1
    %p191 = por %p189, %p190
    %p192 = scmp.ne.s32.totalorder %s183, %s184
    %p193 = scmp.eq.s32.totalorder %s26, 0
    %p194 = por %p192, %p193
    %p195 = scmp.ne.s32.totalorder %s183, %s184
    %p196 = scmp.eq.s32.totalorder %s27, 1
    %p197 = por %p195, %p196
    %p199 = scmp.ne.s32.totalorder %s184, %s198
    %p200 = scmp.eq.s32.totalorder %s27, 0
    %p201 = por %p199, %p200
    %s203 = sadd.s32 %s202, 1
    %p206 = scmp.eq.s32.totalorder %s21, 1
    %p207 = scmp.ne.s32.totalorder %s202, %s204
    %p208 = scmp.eq.s32.totalorder %s21, 0
    %p209 = por %p207, %p208
    %p210 = scmp.ne.s32.totalorder %s202, %s204
    %p211 = scmp.eq.s32.totalorder %s26, 1
    %p212 = por %p210, %p211
    %p213 = scmp.ne.s32.totalorder %s204, %s205
    %p214 = scmp.eq.s32.totalorder %s26, 0
    %p215 = por %p213, %p214
    %p216 = scmp.ne.s32.totalorder %s204, %s205
    %p217 = scmp.eq.s32.totalorder %s27, 1
    %p218 = por %p216, %p217
    %p220 = scmp.ne.s32.totalorder %s205, %s219
    %p221 = scmp.eq.s32.totalorder %s27, 0
    %p222 = por %p220, %p221
    %s224 = sadd.s32 %s223, 1
    %p227 = scmp.eq.s32.totalorder %s21, 1
    %p228 = scmp.ne.s32.totalorder %s223, %s225
    %p229 = scmp.eq.s32.totalorder %s21, 0
    %p230 = por %p228, %p229
    %p231 = scmp.ne.s32.totalorder %s223, %s225
    %p232 = scmp.eq.s32.totalorder %s26, 1
    %p233 = por %p231, %p232
    %p234 = scmp.ne.s32.totalorder %s225, %s226
    %p235 = scmp.eq.s32.totalorder %s26, 0
    %p236 = por %p234, %p235
    %p237 = scmp.ne.s32.totalorder %s225, %s226
    %p238 = scmp.eq.s32.totalorder %s27, 1
    %p239 = por %p237, %p238
    %p241 = scmp.ne.s32.totalorder %s226, %s240
    %p242 = scmp.eq.s32.totalorder %s27, 0
    %p243 = por %p241, %p242
    %s245 = sadd.s32 %s244, 1
    %p248 = scmp.eq.s32.totalorder %s21, 1
    %p249 = scmp.ne.s32.totalorder %s244, %s246
    %p250 = scmp.eq.s32.totalorder %s21, 0
    %p251 = por %p249, %p250
    %p252 = scmp.ne.s32.totalorder %s244, %s246
    %p253 = scmp.eq.s32.totalorder %s26, 1
    %p254 = por %p252, %p253
    %p255 = scmp.ne.s32.totalorder %s246, %s247
    %p256 = scmp.eq.s32.totalorder %s26, 0
    %p257 = por %p255, %p256
    %p258 = scmp.ne.s32.totalorder %s246, %s247
    %p259 = scmp.eq.s32.totalorder %s27, 1
    %p260 = por %p258, %p259
    %p262 = scmp.ne.s32.totalorder %s247, %s261
    %p263 = scmp.eq.s32.totalorder %s27, 0
    %p264 = por %p262, %p263
    %s266 = sadd.s32 %s265, 1
    %p269 = scmp.eq.s32.totalorder %s21, 1
    %p270 = scmp.ne.s32.totalorder %s265, %s267
    %p271 = scmp.eq.s32.totalorder %s21, 0
    %p272 = por %p270, %p271
    %p273 = scmp.ne.s32.totalorder %s265, %s267
    %p274 = scmp.eq.s32.totalorder %s26, 1
    %p275 = por %p273, %p274
    %p276 = scmp.ne.s32.totalorder %s267, %s268
    %p277 = scmp.eq.s32.totalorder %s26, 0
    %p278 = por %p276, %p277
    %p279 = scmp.ne.s32.totalorder %s267, %s268
    %p280 = scmp.eq.s32.totalorder %s27, 1
    %p281 = por %p279, %p280
    %p283 = scmp.ne.s32.totalorder %s268, %s282
    %p284 = scmp.eq.s32.totalorder %s27, 0
    %p285 = por %p283, %p284
    %s287 = sadd.s32 %s286, 1
    %p290 = scmp.eq.s32.totalorder %s21, 1
    %p291 = scmp.ne.s32.totalorder %s286, %s288
    %p292 = scmp.eq.s32.totalorder %s21, 0
    %p293 = por %p291, %p292
    %p294 = scmp.ne.s32.totalorder %s286, %s288
    %p295 = scmp.eq.s32.totalorder %s26, 1
    %p296 = por %p294, %p295
    %p297 = scmp.ne.s32.totalorder %s288, %s289
    %p298 = scmp.eq.s32.totalorder %s26, 0
    %p299 = por %p297, %p298
    %p300 = scmp.ne.s32.totalorder %s288, %s289
    %p301 = scmp.eq.s32.totalorder %s27, 1
    %p302 = por %p300, %p301
    %p304 = scmp.ne.s32.totalorder %s289, %s303
    %p305 = scmp.eq.s32.totalorder %s27, 0
    %p306 = por %p304, %p305
    %s308 = sadd.s32 %s307, 1
    %p311 = scmp.eq.s32.totalorder %s21, 1
    %p312 = scmp.ne.s32.totalorder %s307, %s309
    %p313 = scmp.eq.s32.totalorder %s21, 0
    %p314 = por %p312, %p313
    %p315 = scmp.ne.s32.totalorder %s307, %s309
    %p316 = scmp.eq.s32.totalorder %s26, 1
    %p317 = por %p315, %p316
    %p318 = scmp.ne.s32.totalorder %s309, %s310
    %p319 = scmp.eq.s32.totalorder %s26, 0
    %p320 = por %p318, %p319
    %p321 = scmp.ne.s32.totalorder %s309, %s310
    %p322 = scmp.eq.s32.totalorder %s27, 1
    %p323 = por %p321, %p322
    %p325 = scmp.ne.s32.totalorder %s310, %s324
    %p326 = scmp.eq.s32.totalorder %s27, 0
    %p327 = por %p325, %p326
    %s329 = sadd.s32 %s328, 1
    %p332 = scmp.eq.s32.totalorder %s21, 1
    %p333 = scmp.ne.s32.totalorder %s328, %s330
    %p334 = scmp.eq.s32.totalorder %s21, 0
    %p335 = por %p333, %p334
    %p336 = scmp.ne.s32.totalorder %s328, %s330
    %p337 = scmp.eq.s32.totalorder %s26, 1
    %p338 = por %p336, %p337
    %p339 = scmp.ne.s32.totalorder %s330, %s331
    %p340 = scmp.eq.s32.totalorder %s26, 0
    %p341 = por %p339, %p340
    %p342 = scmp.ne.s32.totalorder %s330, %s331
    %p343 = scmp.eq.s32.totalorder %s27, 1
    %p344 = por %p342, %p343
    %p346 = scmp.ne.s32.totalorder %s331, %s345
    %p347 = scmp.eq.s32.totalorder %s27, 0
    %p348 = por %p346, %p347
    %s349 = ssub.s32 %s21, %s28
    %p350 = scmp.eq.s32.totalorder %s349, 0
    %s352 = sadd.s32 %s351, 1
    %s353 = scalar_select %p350, %s351, %s352
    %p356 = pneg %p350
    %p357 = scmp.eq.s32.totalorder %s21, 1
    %p358 = por %p356, %p357
    %p359 = scmp.ne.s32.totalorder %s351, %s354
    %p360 = scmp.eq.s32.totalorder %s21, 0
    %p361 = por %p359, %p360
    %p362 = scmp.ne.s32.totalorder %s351, %s354
    %p363 = scmp.eq.s32.totalorder %s26, 1
    %p364 = por %p362, %p363
    %p365 = scmp.ne.s32.totalorder %s354, %s355
    %p366 = scmp.eq.s32.totalorder %s26, 0
    %p367 = por %p365, %p366
    %p368 = scmp.ne.s32.totalorder %s354, %s355
    %p369 = scmp.eq.s32.totalorder %s27, 1
    %p370 = por %p368, %p369
    %p372 = scmp.ne.s32.totalorder %s355, %s371
    %p373 = scmp.eq.s32.totalorder %s27, 0
    %p374 = por %p372, %p373
    %p375 = scmp.le.s32.totalorder 1, %s21
    %p376 = scmp.lt.s32.totalorder %s21, 3
    %p377 = pnand %p375, %p376
    %p378 = pneg %p377
    // Predicated region
    $region9: #{efficientnet_b4_forward.1} parent=5 // pred_check
      _
    $region10: #{efficientnet_b4_forward.1} parent=5 // pred_check_branch
      %380 = sbr.rel (%p377) target = $region12
    $region11: #{efficientnet_b4_forward.1} parent=5 // pred_region
      %s381 = ssub.s32 %s21, 1
      // Predicated region
      $region13: #{efficientnet_b4_forward.1} parent=11 // pred_check
        %p382 = pneg %p68
      $region14: #{efficientnet_b4_forward.1} parent=11 // pred_check_branch
        %384 = sbr.rel (%p382) target = $region16
      $region15: #{efficientnet_b4_forward.1} parent=11 // pred_region
        _
      $region16: #{efficientnet_b4_forward.1} parent=11 // pred_fallthru
        _
      // Predicated region
      $region17: #{efficientnet_b4_forward.1} parent=11 // pred_check
        %p385 = pneg %p89
      $region18: #{efficientnet_b4_forward.1} parent=11 // pred_check_branch
        %387 = sbr.rel (%p385) target = $region20
      $region19: #{efficientnet_b4_forward.1} parent=11 // pred_region
        _
      $region20: #{efficientnet_b4_forward.1} parent=11 // pred_fallthru
        _
      // Predicated region
      $region21: #{efficientnet_b4_forward.1} parent=11 // pred_check
        %p388 = pneg %p110
      $region22: #{efficientnet_b4_forward.1} parent=11 // pred_check_branch
        %390 = sbr.rel (%p388) target = $region24
      $region23: #{efficientnet_b4_forward.1} parent=11 // pred_region
        _
      $region24: #{efficientnet_b4_forward.1} parent=11 // pred_fallthru
        _
      // Predicated region
      $region25: #{efficientnet_b4_forward.1} parent=11 // pred_check
        %p391 = pneg %p131
      $region26: #{efficientnet_b4_forward.1} parent=11 // pred_check_branch
        %393 = sbr.rel (%p391) target = $region28
      $region27: #{efficientnet_b4_forward.1} parent=11 // pred_region
        _
      $region28: #{efficientnet_b4_forward.1} parent=11 // pred_fallthru
        _
      // Predicated region
      $region29: #{efficientnet_b4_forward.1} parent=11 // pred_check
        %p394 = pneg %p152
      $region30: #{efficientnet_b4_forward.1} parent=11 // pred_check_branch
        %396 = sbr.rel (%p394) target = $region32
      $region31: #{efficientnet_b4_forward.1} parent=11 // pred_region
        _
      $region32: #{efficientnet_b4_forward.1} parent=11 // pred_fallthru
        _
      // Predicated region
      $region33: #{efficientnet_b4_forward.1} parent=11 // pred_check
        %p397 = pneg %p173
      $region34: #{efficientnet_b4_forward.1} parent=11 // pred_check_branch
        %399 = sbr.rel (%p397) target = $region36
      $region35: #{efficientnet_b4_forward.1} parent=11 // pred_region
        _
      $region36: #{efficientnet_b4_forward.1} parent=11 // pred_fallthru
        _
      // Predicated region
      $region37: #{efficientnet_b4_forward.1} parent=11 // pred_check
        %p400 = pneg %p194
      $region38: #{efficientnet_b4_forward.1} parent=11 // pred_check_branch
        %402 = sbr.rel (%p400) target = $region40
      $region39: #{efficientnet_b4_forward.1} parent=11 // pred_region
        _
      $region40: #{efficientnet_b4_forward.1} parent=11 // pred_fallthru
        _
      // Predicated region
      $region41: #{efficientnet_b4_forward.1} parent=11 // pred_check
        %p403 = pneg %p215
      $region42: #{efficientnet_b4_forward.1} parent=11 // pred_check_branch
        %405 = sbr.rel (%p403) target = $region44
      $region43: #{efficientnet_b4_forward.1} parent=11 // pred_region
        _
      $region44: #{efficientnet_b4_forward.1} parent=11 // pred_fallthru
        _
      // Predicated region
      $region45: #{efficientnet_b4_forward.1} parent=11 // pred_check
        %p406 = pneg %p236
      $region46: #{efficientnet_b4_forward.1} parent=11 // pred_check_branch
        %408 = sbr.rel (%p406) target = $region48
      $region47: #{efficientnet_b4_forward.1} parent=11 // pred_region
        _
      $region48: #{efficientnet_b4_forward.1} parent=11 // pred_fallthru
        _
      // Predicated region
      $region49: #{efficientnet_b4_forward.1} parent=11 // pred_check
        %p409 = pneg %p257
      $region50: #{efficientnet_b4_forward.1} parent=11 // pred_check_branch
        %411 = sbr.rel (%p409) target = $region52
      $region51: #{efficientnet_b4_forward.1} parent=11 // pred_region
        _
      $region52: #{efficientnet_b4_forward.1} parent=11 // pred_fallthru
        _
      // Predicated region
      $region53: #{efficientnet_b4_forward.1} parent=11 // pred_check
        %p412 = pneg %p278
      $region54: #{efficientnet_b4_forward.1} parent=11 // pred_check_branch
        %414 = sbr.rel (%p412) target = $region56
      $region55: #{efficientnet_b4_forward.1} parent=11 // pred_region
        _
      $region56: #{efficientnet_b4_forward.1} parent=11 // pred_fallthru
        _
      // Predicated region
      $region57: #{efficientnet_b4_forward.1} parent=11 // pred_check
        %p415 = pneg %p299
      $region58: #{efficientnet_b4_forward.1} parent=11 // pred_check_branch
        %417 = sbr.rel (%p415) target = $region60
      $region59: #{efficientnet_b4_forward.1} parent=11 // pred_region
        _
      $region60: #{efficientnet_b4_forward.1} parent=11 // pred_fallthru
        _
      // Predicated region
      $region61: #{efficientnet_b4_forward.1} parent=11 // pred_check
        %p418 = pneg %p320
      $region62: #{efficientnet_b4_forward.1} parent=11 // pred_check_branch
        %420 = sbr.rel (%p418) target = $region64
      $region63: #{efficientnet_b4_forward.1} parent=11 // pred_region
        _
      $region64: #{efficientnet_b4_forward.1} parent=11 // pred_fallthru
        _
      // Predicated region
      $region65: #{efficientnet_b4_forward.1} parent=11 // pred_check
        %p421 = pneg %p341
      $region66: #{efficientnet_b4_forward.1} parent=11 // pred_check_branch
        %423 = sbr.rel (%p421) target = $region68
      $region67: #{efficientnet_b4_forward.1} parent=11 // pred_region
        _
      $region68: #{efficientnet_b4_forward.1} parent=11 // pred_fallthru
        _
    $region12: #{efficientnet_b4_forward.1} parent=5 // pred_fallthru
      _
    %p424 = scmp.lt.s32.totalorder %s21, 2
    // Predicated region
    $region69: #{efficientnet_b4_forward.1} parent=5 // pred_check
      %p425 = pneg %p424
    $region70: #{efficientnet_b4_forward.1} parent=5 // pred_check_branch
      %427 = sbr.rel (%p425) target = $region72
    $region71: #{efficientnet_b4_forward.1} parent=5 // pred_region
      // Predicated region
      $region73: #{efficientnet_b4_forward.1} parent=71 // pred_check
        %p428 = pneg %p41
      $region74: #{efficientnet_b4_forward.1} parent=71 // pred_check_branch
        %430 = sbr.rel (%p428) target = $region76
      $region75: #{efficientnet_b4_forward.1} parent=71 // pred_region
        %p431 = scmp.lt.s32.totalorder %s21, 1
        %s432 = scalar_select %p431, %s21, 1
        %s433 = smul.addr %s432, 54
        %s434 = smul.addr %s433, 8
        %s435 = scalar_lea.vmem %s0, %s434
      $region76: #{efficientnet_b4_forward.1} parent=71 // pred_fallthru
        _
    $region72: #{efficientnet_b4_forward.1} parent=5 // pred_fallthru
      _
    %p436 = scmp.le.s32.totalorder 1, %s21
    %p437 = scmp.lt.s32.totalorder %s21, 3
    %p438 = pnand %p436, %p437
    %p439 = pneg %p438
    // Predicated region
    $region77: #{efficientnet_b4_forward.1} parent=5 // pred_check
      _
    $region78: #{efficientnet_b4_forward.1} parent=5 // pred_check_branch
      %441 = sbr.rel (%p438) target = $region80
    $region79: #{efficientnet_b4_forward.1} parent=5 // pred_region
      %s442 = ssub.s32 %s21, 1
      %p443 = scmp.lt.s32.totalorder %s26, 1
      %s444 = scalar_select %p443, %s26, 1
      %s445 = smul.addr %s444, 54
      %s446 = smul.addr %s445, 8
      %s447 = scalar_lea.vmem %s0, %s446
      %p448 = pneg %p47
      %p449 = pneg %p44
      %p450 = pneg %p68
      %p451 = pneg %p65
      %p452 = pneg %p89
      %p453 = pneg %p86
      %p454 = pneg %p110
      %p455 = pneg %p107
      %p456 = pneg %p131
      %p457 = pneg %p128
      %p458 = pneg %p152
      %p459 = pneg %p149
      %p460 = pneg %p173
      %p461 = pneg %p170
      %p462 = pneg %p194
      %p463 = pneg %p191
      %p464 = pneg %p215
      %p465 = pneg %p212
      %p466 = pneg %p236
      %p467 = pneg %p233
      %p468 = pneg %p257
      %p469 = pneg %p254
      %p470 = pneg %p278
      %p471 = pneg %p275
      %p472 = pneg %p299
      %p473 = pneg %p296
      %p474 = pneg %p320
      %p475 = pneg %p317
      %p476 = pneg %p341
      %p477 = pneg %p338
      %p478 = pneg %p367
      %p479 = pneg %p364
      %p480 = scmp.lt.s32.totalorder %s26, 1
      %s481 = scalar_select %p480, %s26, 1
      %s482 = smul.addr %s481, 8
      %s483 = scalar_lea.vmem %s15, %s482
      %p484 = scmp.lt.s32.totalorder %s26, 1
      %s485 = scalar_select %p484, %s26, 1
      %s486 = smul.addr %s485, 54
      %s487 = smul.addr %s486, 8
      %s488 = scalar_lea.vmem %s0, %s487
      %p489 = scmp.lt.s32.totalorder %s26, 1
      %s490 = scalar_select %p489, %s26, 1
      %s491 = smul.addr %s490, 8
      %s492 = scalar_lea.vmem %s15, %s491
      %v494 = vld [vmem:[%s488] sm:$0xff]
      %v495 = vld [vmem:[%s488 + $0x8] sm:$0xff]
      %v496 = vld [vmem:[%s488 + $0x10] sm:$0x3]
      %v497 = vld [vmem:[%s488 + $0x18] sm:$0xff]
      %v498 = vld [vmem:[%s488 + $0x20] sm:$0xff]
      %v499 = vld [vmem:[%s488 + $0x28] sm:$0x3]
      %v500 = vld [vmem:[%s488 + $0x30] sm:$0xff]
      %v501 = vld [vmem:[%s488 + $0x38] sm:$0xff]
      %v502 = vld [vmem:[%s488 + $0x40] sm:$0x3]
      %v503 = vld [vmem:[%s488 + $0x48] sm:$0xff]
      %v504 = vld [vmem:[%s488 + $0x50] sm:$0xff]
      %v505 = vld [vmem:[%s488 + $0x58] sm:$0x3]
      %v506 = vld [vmem:[%s488 + $0x60] sm:$0xff]
      %v507 = vld [vmem:[%s488 + $0x68] sm:$0xff]
      %v508 = vld [vmem:[%s488 + $0x70] sm:$0x3]
      %v509 = vld [vmem:[%s488 + $0x78] sm:$0xff]
      %v510 = vld [vmem:[%s488 + $0x80] sm:$0xff]
      %v511 = vld [vmem:[%s488 + $0x88] sm:$0x3]
      %v512 = vld [vmem:[%s488 + $0x90] sm:$0xff]
      %v513 = vld [vmem:[%s488 + $0x98] sm:$0xff]
      %v514 = vld [vmem:[%s488 + $0xa0] sm:$0x3]
      %v515 = vld [vmem:[%s488 + $0xa8] sm:$0xff]
      %v516 = vld [vmem:[%s488 + $0xb0] sm:$0xff]
      %v517 = vld [vmem:[%s488 + $0xb8] sm:$0x3]
      %v518 = vld [vmem:[%s488 + $0xc0] sm:$0xff]
      %v519 = vld [vmem:[%s488 + $0xc8] sm:$0xff]
      %v520 = vld [vmem:[%s488 + $0xd0] sm:$0x3]
      %v521 = vld [vmem:[%s488 + $0xd8] sm:$0xff]
      %v522 = vld [vmem:[%s488 + $0xe0] sm:$0xff]
      %v523 = vld [vmem:[%s488 + $0xe8] sm:$0x3]
      %v524 = vld [vmem:[%s488 + $0xf0] sm:$0xff]
      %v525 = vld [vmem:[%s488 + $0xf8] sm:$0xff]
      %v526 = vld [vmem:[%s488 + $0x100] sm:$0x3]
      %v527 = vld [vmem:[%s488 + $0x108] sm:$0xff]
      %v528 = vld [vmem:[%s488 + $0x110] sm:$0xff]
      %v529 = vld [vmem:[%s488 + $0x118] sm:$0x3]
      %v530 = vld [vmem:[%s488 + $0x120] sm:$0xff]
      %v531 = vld [vmem:[%s488 + $0x128] sm:$0xff]
      %v532 = vld [vmem:[%s488 + $0x130] sm:$0x3]
      %v533 = vld [vmem:[%s488 + $0x138] sm:$0xff]
      %v534 = vld [vmem:[%s488 + $0x140] sm:$0xff]
      %v535 = vld [vmem:[%s488 + $0x148] sm:$0x3]
      %v536 = vld [vmem:[%s488 + $0x150] sm:$0xff]
      %v537 = vld [vmem:[%s488 + $0x158] sm:$0xff]
      %v538 = vld [vmem:[%s488 + $0x160] sm:$0x3]
      %v539 = vld [vmem:[%s488 + $0x168] sm:$0xff]
      %v540 = vld [vmem:[%s488 + $0x170] sm:$0xff]
      %v541 = vld [vmem:[%s488 + $0x178] sm:$0x3]
      %v542 = vld [vmem:[%s488 + $0x180] sm:$0xff]
      %v543 = vld [vmem:[%s488 + $0x188] sm:$0xff]
      %v544 = vld [vmem:[%s488 + $0x190] sm:$0x3]
      %v545 = vld [vmem:[%s488 + $0x198] sm:$0xff]
      %v546 = vld [vmem:[%s488 + $0x1a0] sm:$0xff]
      %v547 = vld [vmem:[%s488 + $0x1a8] sm:$0x3]
      %vm596 = vcmask 1046528
      %v597 = vrot.slane %v494, 1
      %v598 = vrot.slane %v495, 1
      %v599 = vsel %vm596, %v597, %v598
      %v600 = vrot.slane %v496, 1
      %v601 = vsel %vm596, %v598, %v600
      %v602 = vrot.slane %v497, 1
      %v603 = vrot.slane %v498, 1
      %v604 = vsel %vm596, %v602, %v603
      %v605 = vrot.slane %v499, 1
      %v606 = vsel %vm596, %v603, %v605
      %v607 = vrot.slane %v500, 1
      %v608 = vrot.slane %v501, 1
      %v609 = vsel %vm596, %v607, %v608
      %v610 = vrot.slane %v502, 1
      %v611 = vsel %vm596, %v608, %v610
      %v612 = vrot.slane %v503, 1
      %v613 = vrot.slane %v504, 1
      %v614 = vsel %vm596, %v612, %v613
      %v615 = vrot.slane %v505, 1
      %v616 = vsel %vm596, %v613, %v615
      %v617 = vrot.slane %v506, 1
      %v618 = vrot.slane %v507, 1
      %v619 = vsel %vm596, %v617, %v618
      %v620 = vrot.slane %v508, 1
      %v621 = vsel %vm596, %v618, %v620
      %v622 = vrot.slane %v509, 1
      %v623 = vrot.slane %v510, 1
      %v624 = vsel %vm596, %v622, %v623
      %v625 = vrot.slane %v511, 1
      %v626 = vsel %vm596, %v623, %v625
      %v627 = vrot.slane %v512, 1
      %v628 = vrot.slane %v513, 1
      %v629 = vsel %vm596, %v627, %v628
      %v630 = vrot.slane %v514, 1
      %v631 = vsel %vm596, %v628, %v630
      %v632 = vrot.slane %v515, 1
      %v633 = vrot.slane %v516, 1
      %v634 = vsel %vm596, %v632, %v633
      %v635 = vrot.slane %v517, 1
      %v636 = vsel %vm596, %v633, %v635
      %v637 = vrot.slane %v518, 1
      %v638 = vrot.slane %v519, 1
      %v639 = vsel %vm596, %v637, %v638
      %v640 = vrot.slane %v520, 1
      %v641 = vsel %vm596, %v638, %v640
      %v642 = vrot.slane %v521, 1
      %v643 = vrot.slane %v522, 1
      %v644 = vsel %vm596, %v642, %v643
      %v645 = vrot.slane %v523, 1
      %v646 = vsel %vm596, %v643, %v645
      %v647 = vrot.slane %v524, 1
      %v648 = vrot.slane %v525, 1
      %v649 = vsel %vm596, %v647, %v648
      %v650 = vrot.slane %v526, 1
      %v651 = vsel %vm596, %v648, %v650
      %v652 = vrot.slane %v527, 1
      %v653 = vrot.slane %v528, 1
      %v654 = vsel %vm596, %v652, %v653
      %v655 = vrot.slane %v529, 1
      %v656 = vsel %vm596, %v653, %v655
      %v657 = vrot.slane %v530, 1
      %v658 = vrot.slane %v531, 1
      %v659 = vsel %vm596, %v657, %v658
      %v660 = vrot.slane %v532, 1
      %v661 = vsel %vm596, %v658, %v660
      %v662 = vrot.slane %v533, 1
      %v663 = vrot.slane %v534, 1
      %v664 = vsel %vm596, %v662, %v663
      %v665 = vrot.slane %v535, 1
      %v666 = vsel %vm596, %v663, %v665
      %v667 = vrot.slane %v536, 1
      %v668 = vrot.slane %v537, 1
      %v669 = vsel %vm596, %v667, %v668
      %v670 = vrot.slane %v538, 1
      %v671 = vsel %vm596, %v668, %v670
      %v672 = vrot.slane %v539, 1
      %v673 = vrot.slane %v540, 1
      %v674 = vsel %vm596, %v672, %v673
      %v675 = vrot.slane %v541, 1
      %v676 = vsel %vm596, %v673, %v675
      %vm677 = vcmask 1045504
      %v678 = vrot.slane %v494, 2
      %v679 = vrot.slane %v495, 2
      %v680 = vsel %vm677, %v678, %v679
      %v681 = vrot.slane %v496, 2
      %v682 = vsel %vm677, %v679, %v681
      %v683 = vrot.slane %v497, 2
      %v684 = vrot.slane %v498, 2
      %v685 = vsel %vm677, %v683, %v684
      %v686 = vrot.slane %v499, 2
      %v687 = vsel %vm677, %v684, %v686
      %v688 = vrot.slane %v500, 2
      %v689 = vrot.slane %v501, 2
      %v690 = vsel %vm677, %v688, %v689
      %v691 = vrot.slane %v502, 2
      %v692 = vsel %vm677, %v689, %v691
      %v693 = vrot.slane %v503, 2
      %v694 = vrot.slane %v504, 2
      %v695 = vsel %vm677, %v693, %v694
      %v696 = vrot.slane %v505, 2
      %v697 = vsel %vm677, %v694, %v696
      %v698 = vrot.slane %v506, 2
      %v699 = vrot.slane %v507, 2
      %v700 = vsel %vm677, %v698, %v699
      %v701 = vrot.slane %v508, 2
      %v702 = vsel %vm677, %v699, %v701
      %v703 = vrot.slane %v509, 2
      %v704 = vrot.slane %v510, 2
      %v705 = vsel %vm677, %v703, %v704
      %v706 = vrot.slane %v511, 2
      %v707 = vsel %vm677, %v704, %v706
      %v708 = vrot.slane %v512, 2
      %v709 = vrot.slane %v513, 2
      %v710 = vsel %vm677, %v708, %v709
      %v711 = vrot.slane %v514, 2
      %v712 = vsel %vm677, %v709, %v711
      %v713 = vrot.slane %v515, 2
      %v714 = vrot.slane %v516, 2
      %v715 = vsel %vm677, %v713, %v714
      %v716 = vrot.slane %v517, 2
      %v717 = vsel %vm677, %v714, %v716
      %v718 = vrot.slane %v518, 2
      %v719 = vrot.slane %v519, 2
      %v720 = vsel %vm677, %v718, %v719
      %v721 = vrot.slane %v520, 2
      %v722 = vsel %vm677, %v719, %v721
      %v723 = vrot.slane %v521, 2
      %v724 = vrot.slane %v522, 2
      %v725 = vsel %vm677, %v723, %v724
      %v726 = vrot.slane %v523, 2
      %v727 = vsel %vm677, %v724, %v726
      %v728 = vrot.slane %v524, 2
      %v729 = vrot.slane %v525, 2
      %v730 = vsel %vm677, %v728, %v729
      %v731 = vrot.slane %v526, 2
      %v732 = vsel %vm677, %v729, %v731
      %v733 = vrot.slane %v527, 2
      %v734 = vrot.slane %v528, 2
      %v735 = vsel %vm677, %v733, %v734
      %v736 = vrot.slane %v529, 2
      %v737 = vsel %vm677, %v734, %v736
      %v738 = vrot.slane %v530, 2
      %v739 = vrot.slane %v531, 2
      %v740 = vsel %vm677, %v738, %v739
      %v741 = vrot.slane %v532, 2
      %v742 = vsel %vm677, %v739, %v741
      %v743 = vrot.slane %v533, 2
      %v744 = vrot.slane %v534, 2
      %v745 = vsel %vm677, %v743, %v744
      %v746 = vrot.slane %v535, 2
      %v747 = vsel %vm677, %v744, %v746
      %v748 = vrot.slane %v536, 2
      %v749 = vrot.slane %v537, 2
      %v750 = vsel %vm677, %v748, %v749
      %v751 = vrot.slane %v538, 2
      %v752 = vsel %vm677, %v749, %v751
      %v753 = vrot.slane %v539, 2
      %v754 = vrot.slane %v540, 2
      %v755 = vsel %vm677, %v753, %v754
      %v756 = vrot.slane %v541, 2
      %v757 = vsel %vm677, %v754, %v756
      %v761 = vrot.slane %v542, 1
      %v762 = vrot.slane %v543, 1
      %v763 = vsel %vm596, %v761, %v762
      %v764 = vrot.slane %v544, 1
      %v765 = vsel %vm596, %v762, %v764
      %v766 = vrot.slane %v542, 2
      %v767 = vrot.slane %v543, 2
      %v768 = vsel %vm677, %v766, %v767
      %v769 = vrot.slane %v544, 2
      %v770 = vsel %vm677, %v767, %v769
      %v774 = vrot.slane %v545, 1
      %v775 = vrot.slane %v546, 1
      %v776 = vsel %vm596, %v774, %v775
      %v777 = vrot.slane %v547, 1
      %v778 = vsel %vm596, %v775, %v777
      %v779 = vrot.slane %v545, 2
      %v780 = vrot.slane %v546, 2
      %v781 = vsel %vm677, %v779, %v780
      %v782 = vrot.slane %v547, 2
      %v783 = vsel %vm677, %v780, %v782
      %784 = vrot.lane.b32.xlu0 %v599, 8
      %v785 = vpop.permute.xlu0 %784
      %786 = vrot.lane.b32.xlu0 %v601, 8
      %v787 = vpop.permute.xlu0 %786
      %788 = vrot.lane.b32.xlu0 %v604, 8
      %v789 = vpop.permute.xlu0 %788
      %790 = vrot.lane.b32.xlu0 %v606, 8
      %v791 = vpop.permute.xlu0 %790
      %792 = vrot.lane.b32.xlu0 %v609, 8
      %v793 = vpop.permute.xlu0 %792
      %794 = vrot.lane.b32.xlu0 %v611, 8
      %v795 = vpop.permute.xlu0 %794
      %796 = vrot.lane.b32.xlu0 %v614, 8
      %v797 = vpop.permute.xlu0 %796
      %798 = vrot.lane.b32.xlu0 %v616, 8
      %v799 = vpop.permute.xlu0 %798
      %800 = vrot.lane.b32.xlu0 %v619, 8
      %v801 = vpop.permute.xlu0 %800
      %802 = vrot.lane.b32.xlu0 %v621, 8
      %v803 = vpop.permute.xlu0 %802
      %804 = vrot.lane.b32.xlu0 %v624, 8
      %v805 = vpop.permute.xlu0 %804
      %806 = vrot.lane.b32.xlu0 %v626, 8
      %v807 = vpop.permute.xlu0 %806
      %808 = vrot.lane.b32.xlu0 %v629, 8
      %v809 = vpop.permute.xlu0 %808
      %810 = vrot.lane.b32.xlu0 %v631, 8
      %v811 = vpop.permute.xlu0 %810
      %812 = vrot.lane.b32.xlu0 %v634, 8
      %v813 = vpop.permute.xlu0 %812
      %814 = vrot.lane.b32.xlu0 %v636, 8
      %v815 = vpop.permute.xlu0 %814
      %816 = vrot.lane.b32.xlu0 %v639, 8
      %v817 = vpop.permute.xlu0 %816
      %818 = vrot.lane.b32.xlu0 %v641, 8
      %v819 = vpop.permute.xlu0 %818
      %820 = vrot.lane.b32.xlu0 %v644, 8
      %v821 = vpop.permute.xlu0 %820
      %822 = vrot.lane.b32.xlu0 %v646, 8
      %v823 = vpop.permute.xlu0 %822
      %824 = vrot.lane.b32.xlu0 %v649, 8
      %v825 = vpop.permute.xlu0 %824
      %826 = vrot.lane.b32.xlu0 %v651, 8
      %v827 = vpop.permute.xlu0 %826
      %828 = vrot.lane.b32.xlu0 %v654, 8
      %v829 = vpop.permute.xlu0 %828
      %830 = vrot.lane.b32.xlu0 %v656, 8
      %v831 = vpop.permute.xlu0 %830
      %832 = vrot.lane.b32.xlu0 %v659, 8
      %v833 = vpop.permute.xlu0 %832
      %834 = vrot.lane.b32.xlu0 %v661, 8
      %v835 = vpop.permute.xlu0 %834
      %836 = vrot.lane.b32.xlu0 %v664, 8
      %v837 = vpop.permute.xlu0 %836
      %838 = vrot.lane.b32.xlu0 %v666, 8
      %v839 = vpop.permute.xlu0 %838
      %840 = vrot.lane.b32.xlu0 %v669, 8
      %v841 = vpop.permute.xlu0 %840
      %842 = vrot.lane.b32.xlu0 %v671, 8
      %v843 = vpop.permute.xlu0 %842
      %844 = vrot.lane.b32.xlu0 %v674, 8
      %v845 = vpop.permute.xlu0 %844
      %846 = vrot.lane.b32.xlu0 %v676, 8
      %v847 = vpop.permute.xlu0 %846
      %880 = vrot.lane.b32.xlu0 %v680, 16
      %v881 = vpop.permute.xlu0 %880
      %882 = vrot.lane.b32.xlu0 %v682, 16
      %v883 = vpop.permute.xlu0 %882
      %884 = vrot.lane.b32.xlu0 %v685, 16
      %v885 = vpop.permute.xlu0 %884
      %886 = vrot.lane.b32.xlu0 %v687, 16
      %v887 = vpop.permute.xlu0 %886
      %888 = vrot.lane.b32.xlu0 %v690, 16
      %v889 = vpop.permute.xlu0 %888
      %890 = vrot.lane.b32.xlu0 %v692, 16
      %v891 = vpop.permute.xlu0 %890
      %892 = vrot.lane.b32.xlu0 %v695, 16
      %v893 = vpop.permute.xlu0 %892
      %894 = vrot.lane.b32.xlu0 %v697, 16
      %v895 = vpop.permute.xlu0 %894
      %896 = vrot.lane.b32.xlu0 %v700, 16
      %v897 = vpop.permute.xlu0 %896
      %898 = vrot.lane.b32.xlu0 %v702, 16
      %v899 = vpop.permute.xlu0 %898
      %900 = vrot.lane.b32.xlu0 %v705, 16
      %v901 = vpop.permute.xlu0 %900
      %902 = vrot.lane.b32.xlu0 %v707, 16
      %v903 = vpop.permute.xlu0 %902
      %904 = vrot.lane.b32.xlu0 %v710, 16
      %v905 = vpop.permute.xlu0 %904
      %906 = vrot.lane.b32.xlu0 %v712, 16
      %v907 = vpop.permute.xlu0 %906
      %908 = vrot.lane.b32.xlu0 %v715, 16
      %v909 = vpop.permute.xlu0 %908
      %910 = vrot.lane.b32.xlu0 %v717, 16
      %v911 = vpop.permute.xlu0 %910
      %912 = vrot.lane.b32.xlu0 %v720, 16
      %v913 = vpop.permute.xlu0 %912
      %914 = vrot.lane.b32.xlu0 %v722, 16
      %v915 = vpop.permute.xlu0 %914
      %916 = vrot.lane.b32.xlu0 %v725, 16
      %v917 = vpop.permute.xlu0 %916
      %918 = vrot.lane.b32.xlu0 %v727, 16
      %v919 = vpop.permute.xlu0 %918
      %920 = vrot.lane.b32.xlu0 %v730, 16
      %v921 = vpop.permute.xlu0 %920
      %922 = vrot.lane.b32.xlu0 %v732, 16
      %v923 = vpop.permute.xlu0 %922
      %924 = vrot.lane.b32.xlu0 %v735, 16
      %v925 = vpop.permute.xlu0 %924
      %926 = vrot.lane.b32.xlu0 %v737, 16
      %v927 = vpop.permute.xlu0 %926
      %928 = vrot.lane.b32.xlu0 %v740, 16
      %v929 = vpop.permute.xlu0 %928
      %930 = vrot.lane.b32.xlu0 %v742, 16
      %v931 = vpop.permute.xlu0 %930
      %932 = vrot.lane.b32.xlu0 %v745, 16
      %v933 = vpop.permute.xlu0 %932
      %934 = vrot.lane.b32.xlu0 %v747, 16
      %v935 = vpop.permute.xlu0 %934
      %936 = vrot.lane.b32.xlu0 %v750, 16
      %v937 = vpop.permute.xlu0 %936
      %938 = vrot.lane.b32.xlu0 %v752, 16
      %v939 = vpop.permute.xlu0 %938
      %940 = vrot.lane.b32.xlu0 %v755, 16
      %v941 = vpop.permute.xlu0 %940
      %942 = vrot.lane.b32.xlu0 %v757, 16
      %v943 = vpop.permute.xlu0 %942
      %976 = vrot.lane.b32.xlu0 %v497, 24
      %v977 = vpop.permute.xlu0 %976
      %978 = vrot.lane.b32.xlu0 %v498, 24
      %v979 = vpop.permute.xlu0 %978
      %980 = vrot.lane.b32.xlu0 %v500, 24
      %v981 = vpop.permute.xlu0 %980
      %982 = vrot.lane.b32.xlu0 %v501, 24
      %v983 = vpop.permute.xlu0 %982
      %984 = vrot.lane.b32.xlu0 %v503, 24
      %v985 = vpop.permute.xlu0 %984
      %986 = vrot.lane.b32.xlu0 %v504, 24
      %v987 = vpop.permute.xlu0 %986
      %988 = vrot.lane.b32.xlu0 %v506, 24
      %v989 = vpop.permute.xlu0 %988
      %990 = vrot.lane.b32.xlu0 %v507, 24
      %v991 = vpop.permute.xlu0 %990
      %992 = vrot.lane.b32.xlu0 %v509, 24
      %v993 = vpop.permute.xlu0 %992
      %994 = vrot.lane.b32.xlu0 %v510, 24
      %v995 = vpop.permute.xlu0 %994
      %996 = vrot.lane.b32.xlu0 %v512, 24
      %v997 = vpop.permute.xlu0 %996
      %998 = vrot.lane.b32.xlu0 %v513, 24
      %v999 = vpop.permute.xlu0 %998
      %1000 = vrot.lane.b32.xlu0 %v515, 24
      %v1001 = vpop.permute.xlu0 %1000
      %1002 = vrot.lane.b32.xlu0 %v516, 24
      %v1003 = vpop.permute.xlu0 %1002
      %1004 = vrot.lane.b32.xlu0 %v518, 24
      %v1005 = vpop.permute.xlu0 %1004
      %1006 = vrot.lane.b32.xlu0 %v519, 24
      %v1007 = vpop.permute.xlu0 %1006
      %1008 = vrot.lane.b32.xlu0 %v521, 24
      %v1009 = vpop.permute.xlu0 %1008
      %1010 = vrot.lane.b32.xlu0 %v522, 24
      %v1011 = vpop.permute.xlu0 %1010
      %1012 = vrot.lane.b32.xlu0 %v524, 24
      %v1013 = vpop.permute.xlu0 %1012
      %1014 = vrot.lane.b32.xlu0 %v525, 24
      %v1015 = vpop.permute.xlu0 %1014
      %1016 = vrot.lane.b32.xlu0 %v527, 24
      %v1017 = vpop.permute.xlu0 %1016
      %1018 = vrot.lane.b32.xlu0 %v528, 24
      %v1019 = vpop.permute.xlu0 %1018
      %1020 = vrot.lane.b32.xlu0 %v530, 24
      %v1021 = vpop.permute.xlu0 %1020
      %1022 = vrot.lane.b32.xlu0 %v531, 24
      %v1023 = vpop.permute.xlu0 %1022
      %1024 = vrot.lane.b32.xlu0 %v533, 24
      %v1025 = vpop.permute.xlu0 %1024
      %1026 = vrot.lane.b32.xlu0 %v534, 24
      %v1027 = vpop.permute.xlu0 %1026
      %1028 = vrot.lane.b32.xlu0 %v536, 24
      %v1029 = vpop.permute.xlu0 %1028
      %1030 = vrot.lane.b32.xlu0 %v537, 24
      %v1031 = vpop.permute.xlu0 %1030
      %1032 = vrot.lane.b32.xlu0 %v539, 24
      %v1033 = vpop.permute.xlu0 %1032
      %1034 = vrot.lane.b32.xlu0 %v540, 24
      %v1035 = vpop.permute.xlu0 %1034
      %1036 = vrot.lane.b32.xlu0 %v542, 24
      %v1037 = vpop.permute.xlu0 %1036
      %1038 = vrot.lane.b32.xlu0 %v543, 24
      %v1039 = vpop.permute.xlu0 %1038
      %1072 = vrot.lane.b32.xlu0 %v604, 32
      %v1073 = vpop.permute.xlu0 %1072
      %1074 = vrot.lane.b32.xlu0 %v606, 32
      %v1075 = vpop.permute.xlu0 %1074
      %1076 = vrot.lane.b32.xlu0 %v609, 32
      %v1077 = vpop.permute.xlu0 %1076
      %1078 = vrot.lane.b32.xlu0 %v611, 32
      %v1079 = vpop.permute.xlu0 %1078
      %1080 = vrot.lane.b32.xlu0 %v614, 32
      %v1081 = vpop.permute.xlu0 %1080
      %1082 = vrot.lane.b32.xlu0 %v616, 32
      %v1083 = vpop.permute.xlu0 %1082
      %1084 = vrot.lane.b32.xlu0 %v619, 32
      %v1085 = vpop.permute.xlu0 %1084
      %1086 = vrot.lane.b32.xlu0 %v621, 32
      %v1087 = vpop.permute.xlu0 %1086
      %1088 = vrot.lane.b32.xlu0 %v624, 32
      %v1089 = vpop.permute.xlu0 %1088
      %1090 = vrot.lane.b32.xlu0 %v626, 32
      %v1091 = vpop.permute.xlu0 %1090
      %1092 = vrot.lane.b32.xlu0 %v629, 32
      %v1093 = vpop.permute.xlu0 %1092
      %1094 = vrot.lane.b32.xlu0 %v631, 32
      %v1095 = vpop.permute.xlu0 %1094
      %1096 = vrot.lane.b32.xlu0 %v634, 32
      %v1097 = vpop.permute.xlu0 %1096
      %1098 = vrot.lane.b32.xlu0 %v636, 32
      %v1099 = vpop.permute.xlu0 %1098
      %1100 = vrot.lane.b32.xlu0 %v639, 32
      %v1101 = vpop.permute.xlu0 %1100
      %1102 = vrot.lane.b32.xlu0 %v641, 32
      %v1103 = vpop.permute.xlu0 %1102
      %1104 = vrot.lane.b32.xlu0 %v644, 32
      %v1105 = vpop.permute.xlu0 %1104
      %1106 = vrot.lane.b32.xlu0 %v646, 32
      %v1107 = vpop.permute.xlu0 %1106
      %1108 = vrot.lane.b32.xlu0 %v649, 32
      %v1109 = vpop.permute.xlu0 %1108
      %1110 = vrot.lane.b32.xlu0 %v651, 32
      %v1111 = vpop.permute.xlu0 %1110
      %1112 = vrot.lane.b32.xlu0 %v654, 32
      %v1113 = vpop.permute.xlu0 %1112
      %1114 = vrot.lane.b32.xlu0 %v656, 32
      %v1115 = vpop.permute.xlu0 %1114
      %1116 = vrot.lane.b32.xlu0 %v659, 32
      %v1117 = vpop.permute.xlu0 %1116
      %1118 = vrot.lane.b32.xlu0 %v661, 32
      %v1119 = vpop.permute.xlu0 %1118
      %1120 = vrot.lane.b32.xlu0 %v664, 32
      %v1121 = vpop.permute.xlu0 %1120
      %1122 = vrot.lane.b32.xlu0 %v666, 32
      %v1123 = vpop.permute.xlu0 %1122
      %1124 = vrot.lane.b32.xlu0 %v669, 32
      %v1125 = vpop.permute.xlu0 %1124
      %1126 = vrot.lane.b32.xlu0 %v671, 32
      %v1127 = vpop.permute.xlu0 %1126
      %1128 = vrot.lane.b32.xlu0 %v674, 32
      %v1129 = vpop.permute.xlu0 %1128
      %1130 = vrot.lane.b32.xlu0 %v676, 32
      %v1131 = vpop.permute.xlu0 %1130
      %1132 = vrot.lane.b32.xlu0 %v763, 32
      %v1133 = vpop.permute.xlu0 %1132
      %1134 = vrot.lane.b32.xlu0 %v765, 32
      %v1135 = vpop.permute.xlu0 %1134
      %1168 = vrot.lane.b32.xlu0 %v685, 40
      %v1169 = vpop.permute.xlu0 %1168
      %1170 = vrot.lane.b32.xlu0 %v687, 40
      %v1171 = vpop.permute.xlu0 %1170
      %1172 = vrot.lane.b32.xlu0 %v690, 40
      %v1173 = vpop.permute.xlu0 %1172
      %1174 = vrot.lane.b32.xlu0 %v692, 40
      %v1175 = vpop.permute.xlu0 %1174
      %1176 = vrot.lane.b32.xlu0 %v695, 40
      %v1177 = vpop.permute.xlu0 %1176
      %1178 = vrot.lane.b32.xlu0 %v697, 40
      %v1179 = vpop.permute.xlu0 %1178
      %1180 = vrot.lane.b32.xlu0 %v700, 40
      %v1181 = vpop.permute.xlu0 %1180
      %1182 = vrot.lane.b32.xlu0 %v702, 40
      %v1183 = vpop.permute.xlu0 %1182
      %1184 = vrot.lane.b32.xlu0 %v705, 40
      %v1185 = vpop.permute.xlu0 %1184
      %1186 = vrot.lane.b32.xlu0 %v707, 40
      %v1187 = vpop.permute.xlu0 %1186
      %1188 = vrot.lane.b32.xlu0 %v710, 40
      %v1189 = vpop.permute.xlu0 %1188
      %1190 = vrot.lane.b32.xlu0 %v712, 40
      %v1191 = vpop.permute.xlu0 %1190
      %1192 = vrot.lane.b32.xlu0 %v715, 40
      %v1193 = vpop.permute.xlu0 %1192
      %1194 = vrot.lane.b32.xlu0 %v717, 40
      %v1195 = vpop.permute.xlu0 %1194
      %1196 = vrot.lane.b32.xlu0 %v720, 40
      %v1197 = vpop.permute.xlu0 %1196
      %1198 = vrot.lane.b32.xlu0 %v722, 40
      %v1199 = vpop.permute.xlu0 %1198
      %1200 = vrot.lane.b32.xlu0 %v725, 40
      %v1201 = vpop.permute.xlu0 %1200
      %1202 = vrot.lane.b32.xlu0 %v727, 40
      %v1203 = vpop.permute.xlu0 %1202
      %1204 = vrot.lane.b32.xlu0 %v730, 40
      %v1205 = vpop.permute.xlu0 %1204
      %1206 = vrot.lane.b32.xlu0 %v732, 40
      %v1207 = vpop.permute.xlu0 %1206
      %1208 = vrot.lane.b32.xlu0 %v735, 40
      %v1209 = vpop.permute.xlu0 %1208
      %1210 = vrot.lane.b32.xlu0 %v737, 40
      %v1211 = vpop.permute.xlu0 %1210
      %1212 = vrot.lane.b32.xlu0 %v740, 40
      %v1213 = vpop.permute.xlu0 %1212
      %1214 = vrot.lane.b32.xlu0 %v742, 40
      %v1215 = vpop.permute.xlu0 %1214
      %1216 = vrot.lane.b32.xlu0 %v745, 40
      %v1217 = vpop.permute.xlu0 %1216
      %1218 = vrot.lane.b32.xlu0 %v747, 40
      %v1219 = vpop.permute.xlu0 %1218
      %1220 = vrot.lane.b32.xlu0 %v750, 40
      %v1221 = vpop.permute.xlu0 %1220
      %1222 = vrot.lane.b32.xlu0 %v752, 40
      %v1223 = vpop.permute.xlu0 %1222
      %1224 = vrot.lane.b32.xlu0 %v755, 40
      %v1225 = vpop.permute.xlu0 %1224
      %1226 = vrot.lane.b32.xlu0 %v757, 40
      %v1227 = vpop.permute.xlu0 %1226
      %1228 = vrot.lane.b32.xlu0 %v768, 40
      %v1229 = vpop.permute.xlu0 %1228
      %1230 = vrot.lane.b32.xlu0 %v770, 40
      %v1231 = vpop.permute.xlu0 %1230
      %1264 = vrot.lane.b32.xlu0 %v500, 48
      %v1265 = vpop.permute.xlu0 %1264
      %1266 = vrot.lane.b32.xlu0 %v501, 48
      %v1267 = vpop.permute.xlu0 %1266
      %1268 = vrot.lane.b32.xlu0 %v503, 48
      %v1269 = vpop.permute.xlu0 %1268
      %1270 = vrot.lane.b32.xlu0 %v504, 48
      %v1271 = vpop.permute.xlu0 %1270
      %1272 = vrot.lane.b32.xlu0 %v506, 48
      %v1273 = vpop.permute.xlu0 %1272
      %1274 = vrot.lane.b32.xlu0 %v507, 48
      %v1275 = vpop.permute.xlu0 %1274
      %1276 = vrot.lane.b32.xlu0 %v509, 48
      %v1277 = vpop.permute.xlu0 %1276
      %1278 = vrot.lane.b32.xlu0 %v510, 48
      %v1279 = vpop.permute.xlu0 %1278
      %1280 = vrot.lane.b32.xlu0 %v512, 48
      %v1281 = vpop.permute.xlu0 %1280
      %1282 = vrot.lane.b32.xlu0 %v513, 48
      %v1283 = vpop.permute.xlu0 %1282
      %1284 = vrot.lane.b32.xlu0 %v515, 48
      %v1285 = vpop.permute.xlu0 %1284
      %1286 = vrot.lane.b32.xlu0 %v516, 48
      %v1287 = vpop.permute.xlu0 %1286
      %1288 = vrot.lane.b32.xlu0 %v518, 48
      %v1289 = vpop.permute.xlu0 %1288
      %1290 = vrot.lane.b32.xlu0 %v519, 48
      %v1291 = vpop.permute.xlu0 %1290
      %1292 = vrot.lane.b32.xlu0 %v521, 48
      %v1293 = vpop.permute.xlu0 %1292
      %1294 = vrot.lane.b32.xlu0 %v522, 48
      %v1295 = vpop.permute.xlu0 %1294
      %1296 = vrot.lane.b32.xlu0 %v524, 48
      %v1297 = vpop.permute.xlu0 %1296
      %1298 = vrot.lane.b32.xlu0 %v525, 48
      %v1299 = vpop.permute.xlu0 %1298
      %1300 = vrot.lane.b32.xlu0 %v527, 48
      %v1301 = vpop.permute.xlu0 %1300
      %1302 = vrot.lane.b32.xlu0 %v528, 48
      %v1303 = vpop.permute.xlu0 %1302
      %1304 = vrot.lane.b32.xlu0 %v530, 48
      %v1305 = vpop.permute.xlu0 %1304
      %1306 = vrot.lane.b32.xlu0 %v531, 48
      %v1307 = vpop.permute.xlu0 %1306
      %1308 = vrot.lane.b32.xlu0 %v533, 48
      %v1309 = vpop.permute.xlu0 %1308
      %1310 = vrot.lane.b32.xlu0 %v534, 48
      %v1311 = vpop.permute.xlu0 %1310
      %1312 = vrot.lane.b32.xlu0 %v536, 48
      %v1313 = vpop.permute.xlu0 %1312
      %1314 = vrot.lane.b32.xlu0 %v537, 48
      %v1315 = vpop.permute.xlu0 %1314
      %1316 = vrot.lane.b32.xlu0 %v539, 48
      %v1317 = vpop.permute.xlu0 %1316
      %1318 = vrot.lane.b32.xlu0 %v540, 48
      %v1319 = vpop.permute.xlu0 %1318
      %1320 = vrot.lane.b32.xlu0 %v542, 48
      %v1321 = vpop.permute.xlu0 %1320
      %1322 = vrot.lane.b32.xlu0 %v543, 48
      %v1323 = vpop.permute.xlu0 %1322
      %1324 = vrot.lane.b32.xlu0 %v545, 48
      %v1325 = vpop.permute.xlu0 %1324
      %1326 = vrot.lane.b32.xlu0 %v546, 48
      %v1327 = vpop.permute.xlu0 %1326
      %1360 = vrot.lane.b32.xlu0 %v609, 56
      %v1361 = vpop.permute.xlu0 %1360
      %1362 = vrot.lane.b32.xlu0 %v611, 56
      %v1363 = vpop.permute.xlu0 %1362
      %1364 = vrot.lane.b32.xlu0 %v614, 56
      %v1365 = vpop.permute.xlu0 %1364
      %1366 = vrot.lane.b32.xlu0 %v616, 56
      %v1367 = vpop.permute.xlu0 %1366
      %1368 = vrot.lane.b32.xlu0 %v619, 56
      %v1369 = vpop.permute.xlu0 %1368
      %1370 = vrot.lane.b32.xlu0 %v621, 56
      %v1371 = vpop.permute.xlu0 %1370
      %1372 = vrot.lane.b32.xlu0 %v624, 56
      %v1373 = vpop.permute.xlu0 %1372
      %1374 = vrot.lane.b32.xlu0 %v626, 56
      %v1375 = vpop.permute.xlu0 %1374
      %1376 = vrot.lane.b32.xlu0 %v629, 56
      %v1377 = vpop.permute.xlu0 %1376
      %1378 = vrot.lane.b32.xlu0 %v631, 56
      %v1379 = vpop.permute.xlu0 %1378
      %1380 = vrot.lane.b32.xlu0 %v634, 56
      %v1381 = vpop.permute.xlu0 %1380
      %1382 = vrot.lane.b32.xlu0 %v636, 56
      %v1383 = vpop.permute.xlu0 %1382
      %1384 = vrot.lane.b32.xlu0 %v639, 56
      %v1385 = vpop.permute.xlu0 %1384
      %1386 = vrot.lane.b32.xlu0 %v641, 56
      %v1387 = vpop.permute.xlu0 %1386
      %1388 = vrot.lane.b32.xlu0 %v644, 56
      %v1389 = vpop.permute.xlu0 %1388
      %1390 = vrot.lane.b32.xlu0 %v646, 56
      %v1391 = vpop.permute.xlu0 %1390
      %1392 = vrot.lane.b32.xlu0 %v649, 56
      %v1393 = vpop.permute.xlu0 %1392
      %1394 = vrot.lane.b32.xlu0 %v651, 56
      %v1395 = vpop.permute.xlu0 %1394
      %1396 = vrot.lane.b32.xlu0 %v654, 56
      %v1397 = vpop.permute.xlu0 %1396
      %1398 = vrot.lane.b32.xlu0 %v656, 56
      %v1399 = vpop.permute.xlu0 %1398
      %1400 = vrot.lane.b32.xlu0 %v659, 56
      %v1401 = vpop.permute.xlu0 %1400
      %1402 = vrot.lane.b32.xlu0 %v661, 56
      %v1403 = vpop.permute.xlu0 %1402
      %1404 = vrot.lane.b32.xlu0 %v664, 56
      %v1405 = vpop.permute.xlu0 %1404
      %1406 = vrot.lane.b32.xlu0 %v666, 56
      %v1407 = vpop.permute.xlu0 %1406
      %1408 = vrot.lane.b32.xlu0 %v669, 56
      %v1409 = vpop.permute.xlu0 %1408
      %1410 = vrot.lane.b32.xlu0 %v671, 56
      %v1411 = vpop.permute.xlu0 %1410
      %1412 = vrot.lane.b32.xlu0 %v674, 56
      %v1413 = vpop.permute.xlu0 %1412
      %1414 = vrot.lane.b32.xlu0 %v676, 56
      %v1415 = vpop.permute.xlu0 %1414
      %1416 = vrot.lane.b32.xlu0 %v763, 56
      %v1417 = vpop.permute.xlu0 %1416
      %1418 = vrot.lane.b32.xlu0 %v765, 56
      %v1419 = vpop.permute.xlu0 %1418
      %1420 = vrot.lane.b32.xlu0 %v776, 56
      %v1421 = vpop.permute.xlu0 %1420
      %1422 = vrot.lane.b32.xlu0 %v778, 56
      %v1423 = vpop.permute.xlu0 %1422
      %1456 = vrot.lane.b32.xlu0 %v690, 64
      %v1457 = vpop.permute.xlu0 %1456
      %1458 = vrot.lane.b32.xlu0 %v692, 64
      %v1459 = vpop.permute.xlu0 %1458
      %1460 = vrot.lane.b32.xlu0 %v695, 64
      %v1461 = vpop.permute.xlu0 %1460
      %1462 = vrot.lane.b32.xlu0 %v697, 64
      %v1463 = vpop.permute.xlu0 %1462
      %1464 = vrot.lane.b32.xlu0 %v700, 64
      %v1465 = vpop.permute.xlu0 %1464
      %1466 = vrot.lane.b32.xlu0 %v702, 64
      %v1467 = vpop.permute.xlu0 %1466
      %1468 = vrot.lane.b32.xlu0 %v705, 64
      %v1469 = vpop.permute.xlu0 %1468
      %1470 = vrot.lane.b32.xlu0 %v707, 64
      %v1471 = vpop.permute.xlu0 %1470
      %1472 = vrot.lane.b32.xlu0 %v710, 64
      %v1473 = vpop.permute.xlu0 %1472
      %1474 = vrot.lane.b32.xlu0 %v712, 64
      %v1475 = vpop.permute.xlu0 %1474
      %1476 = vrot.lane.b32.xlu0 %v715, 64
      %v1477 = vpop.permute.xlu0 %1476
      %1478 = vrot.lane.b32.xlu0 %v717, 64
      %v1479 = vpop.permute.xlu0 %1478
      %1480 = vrot.lane.b32.xlu0 %v720, 64
      %v1481 = vpop.permute.xlu0 %1480
      %1482 = vrot.lane.b32.xlu0 %v722, 64
      %v1483 = vpop.permute.xlu0 %1482
      %1484 = vrot.lane.b32.xlu0 %v725, 64
      %v1485 = vpop.permute.xlu0 %1484
      %1486 = vrot.lane.b32.xlu0 %v727, 64
      %v1487 = vpop.permute.xlu0 %1486
      %1488 = vrot.lane.b32.xlu0 %v730, 64
      %v1489 = vpop.permute.xlu0 %1488
      %1490 = vrot.lane.b32.xlu0 %v732, 64
      %v1491 = vpop.permute.xlu0 %1490
      %1492 = vrot.lane.b32.xlu0 %v735, 64
      %v1493 = vpop.permute.xlu0 %1492
      %1494 = vrot.lane.b32.xlu0 %v737, 64
      %v1495 = vpop.permute.xlu0 %1494
      %1496 = vrot.lane.b32.xlu0 %v740, 64
      %v1497 = vpop.permute.xlu0 %1496
      %1498 = vrot.lane.b32.xlu0 %v742, 64
      %v1499 = vpop.permute.xlu0 %1498
      %1500 = vrot.lane.b32.xlu0 %v745, 64
      %v1501 = vpop.permute.xlu0 %1500
      %1502 = vrot.lane.b32.xlu0 %v747, 64
      %v1503 = vpop.permute.xlu0 %1502
      %1504 = vrot.lane.b32.xlu0 %v750, 64
      %v1505 = vpop.permute.xlu0 %1504
      %1506 = vrot.lane.b32.xlu0 %v752, 64
      %v1507 = vpop.permute.xlu0 %1506
      %1508 = vrot.lane.b32.xlu0 %v755, 64
      %v1509 = vpop.permute.xlu0 %1508
      %1510 = vrot.lane.b32.xlu0 %v757, 64
      %v1511 = vpop.permute.xlu0 %1510
      %1512 = vrot.lane.b32.xlu0 %v768, 64
      %v1513 = vpop.permute.xlu0 %1512
      %1514 = vrot.lane.b32.xlu0 %v770, 64
      %v1515 = vpop.permute.xlu0 %1514
      %1516 = vrot.lane.b32.xlu0 %v781, 64
      %v1517 = vpop.permute.xlu0 %1516
      %1518 = vrot.lane.b32.xlu0 %v783, 64
      %v1519 = vpop.permute.xlu0 %1518
      %vm1552 = vcmask 64512
      %v1553 = vsel %vm1552, %v494, %v785
      %v1554 = vsel %vm1552, %v495, %v787
      %v1555 = vsel %vm1552, %v497, %v789
      %v1556 = vsel %vm1552, %v498, %v791
      %v1557 = vsel %vm1552, %v500, %v793
      %v1558 = vsel %vm1552, %v501, %v795
      %v1559 = vsel %vm1552, %v503, %v797
      %v1560 = vsel %vm1552, %v504, %v799
      %v1561 = vsel %vm1552, %v506, %v801
      %v1562 = vsel %vm1552, %v507, %v803
      %v1563 = vsel %vm1552, %v509, %v805
      %v1564 = vsel %vm1552, %v510, %v807
      %v1565 = vsel %vm1552, %v512, %v809
      %v1566 = vsel %vm1552, %v513, %v811
      %v1567 = vsel %vm1552, %v515, %v813
      %v1568 = vsel %vm1552, %v516, %v815
      %v1569 = vsel %vm1552, %v518, %v817
      %v1570 = vsel %vm1552, %v519, %v819
      %v1571 = vsel %vm1552, %v521, %v821
      %v1572 = vsel %vm1552, %v522, %v823
      %v1573 = vsel %vm1552, %v524, %v825
      %v1574 = vsel %vm1552, %v525, %v827
      %v1575 = vsel %vm1552, %v527, %v829
      %v1576 = vsel %vm1552, %v528, %v831
      %v1577 = vsel %vm1552, %v530, %v833
      %v1578 = vsel %vm1552, %v531, %v835
      %v1579 = vsel %vm1552, %v533, %v837
      %v1580 = vsel %vm1552, %v534, %v839
      %v1581 = vsel %vm1552, %v536, %v841
      %v1582 = vsel %vm1552, %v537, %v843
      %v1583 = vsel %vm1552, %v539, %v845
      %v1584 = vsel %vm1552, %v540, %v847
      %vm1585 = vcmask 130048
      %v1586 = vsel %vm1585, %v1553, %v881
      %v1587 = vsel %vm1585, %v1554, %v883
      %v1588 = vsel %vm1585, %v1555, %v885
      %v1589 = vsel %vm1585, %v1556, %v887
      %v1590 = vsel %vm1585, %v1557, %v889
      %v1591 = vsel %vm1585, %v1558, %v891
      %v1592 = vsel %vm1585, %v1559, %v893
      %v1593 = vsel %vm1585, %v1560, %v895
      %v1594 = vsel %vm1585, %v1561, %v897
      %v1595 = vsel %vm1585, %v1562, %v899
      %v1596 = vsel %vm1585, %v1563, %v901
      %v1597 = vsel %vm1585, %v1564, %v903
      %v1598 = vsel %vm1585, %v1565, %v905
      %v1599 = vsel %vm1585, %v1566, %v907
      %v1600 = vsel %vm1585, %v1567, %v909
      %v1601 = vsel %vm1585, %v1568, %v911
      %v1602 = vsel %vm1585, %v1569, %v913
      %v1603 = vsel %vm1585, %v1570, %v915
      %v1604 = vsel %vm1585, %v1571, %v917
      %v1605 = vsel %vm1585, %v1572, %v919
      %v1606 = vsel %vm1585, %v1573, %v921
      %v1607 = vsel %vm1585, %v1574, %v923
      %v1608 = vsel %vm1585, %v1575, %v925
      %v1609 = vsel %vm1585, %v1576, %v927
      %v1610 = vsel %vm1585, %v1577, %v929
      %v1611 = vsel %vm1585, %v1578, %v931
      %v1612 = vsel %vm1585, %v1579, %v933
      %v1613 = vsel %vm1585, %v1580, %v935
      %v1614 = vsel %vm1585, %v1581, %v937
      %v1615 = vsel %vm1585, %v1582, %v939
      %v1616 = vsel %vm1585, %v1583, %v941
      %v1617 = vsel %vm1585, %v1584, %v943
      %vm1618 = vcmask 195584
      %v1619 = vsel %vm1618, %v1586, %v977
      %v1620 = vsel %vm1618, %v1587, %v979
      %v1621 = vsel %vm1618, %v1588, %v981
      %v1622 = vsel %vm1618, %v1589, %v983
      %v1623 = vsel %vm1618, %v1590, %v985
      %v1624 = vsel %vm1618, %v1591, %v987
      %v1625 = vsel %vm1618, %v1592, %v989
      %v1626 = vsel %vm1618, %v1593, %v991
      %v1627 = vsel %vm1618, %v1594, %v993
      %v1628 = vsel %vm1618, %v1595, %v995
      %v1629 = vsel %vm1618, %v1596, %v997
      %v1630 = vsel %vm1618, %v1597, %v999
      %v1631 = vsel %vm1618, %v1598, %v1001
      %v1632 = vsel %vm1618, %v1599, %v1003
      %v1633 = vsel %vm1618, %v1600, %v1005
      %v1634 = vsel %vm1618, %v1601, %v1007
      %v1635 = vsel %vm1618, %v1602, %v1009
      %v1636 = vsel %vm1618, %v1603, %v1011
      %v1637 = vsel %vm1618, %v1604, %v1013
      %v1638 = vsel %vm1618, %v1605, %v1015
      %v1639 = vsel %vm1618, %v1606, %v1017
      %v1640 = vsel %vm1618, %v1607, %v1019
      %v1641 = vsel %vm1618, %v1608, %v1021
      %v1642 = vsel %vm1618, %v1609, %v1023
      %v1643 = vsel %vm1618, %v1610, %v1025
      %v1644 = vsel %vm1618, %v1611, %v1027
      %v1645 = vsel %vm1618, %v1612, %v1029
      %v1646 = vsel %vm1618, %v1613, %v1031
      %v1647 = vsel %vm1618, %v1614, %v1033
      %v1648 = vsel %vm1618, %v1615, %v1035
      %v1649 = vsel %vm1618, %v1616, %v1037
      %v1650 = vsel %vm1618, %v1617, %v1039
      %vm1651 = vcmask 261120
      %v1652 = vsel %vm1651, %v1619, %v1073
      %v1653 = vsel %vm1651, %v1620, %v1075
      %v1654 = vsel %vm1651, %v1621, %v1077
      %v1655 = vsel %vm1651, %v1622, %v1079
      %v1656 = vsel %vm1651, %v1623, %v1081
      %v1657 = vsel %vm1651, %v1624, %v1083
      %v1658 = vsel %vm1651, %v1625, %v1085
      %v1659 = vsel %vm1651, %v1626, %v1087
      %v1660 = vsel %vm1651, %v1627, %v1089
      %v1661 = vsel %vm1651, %v1628, %v1091
      %v1662 = vsel %vm1651, %v1629, %v1093
      %v1663 = vsel %vm1651, %v1630, %v1095
      %v1664 = vsel %vm1651, %v1631, %v1097
      %v1665 = vsel %vm1651, %v1632, %v1099
      %v1666 = vsel %vm1651, %v1633, %v1101
      %v1667 = vsel %vm1651, %v1634, %v1103
      %v1668 = vsel %vm1651, %v1635, %v1105
      %v1669 = vsel %vm1651, %v1636, %v1107
      %v1670 = vsel %vm1651, %v1637, %v1109
      %v1671 = vsel %vm1651, %v1638, %v1111
      %v1672 = vsel %vm1651, %v1639, %v1113
      %v1673 = vsel %vm1651, %v1640, %v1115
      %v1674 = vsel %vm1651, %v1641, %v1117
      %v1675 = vsel %vm1651, %v1642, %v1119
      %v1676 = vsel %vm1651, %v1643, %v1121
      %v1677 = vsel %vm1651, %v1644, %v1123
      %v1678 = vsel %vm1651, %v1645, %v1125
      %v1679 = vsel %vm1651, %v1646, %v1127
      %v1680 = vsel %vm1651, %v1647, %v1129
      %v1681 = vsel %vm1651, %v1648, %v1131
      %v1682 = vsel %vm1651, %v1649, %v1133
      %v1683 = vsel %vm1651, %v1650, %v1135
      %vm1684 = vcmask 326656
      %v1685 = vsel %vm1684, %v1652, %v1169
      %v1686 = vsel %vm1684, %v1653, %v1171
      %v1687 = vsel %vm1684, %v1654, %v1173
      %v1688 = vsel %vm1684, %v1655, %v1175
      %v1689 = vsel %vm1684, %v1656, %v1177
      %v1690 = vsel %vm1684, %v1657, %v1179
      %v1691 = vsel %vm1684, %v1658, %v1181
      %v1692 = vsel %vm1684, %v1659, %v1183
      %v1693 = vsel %vm1684, %v1660, %v1185
      %v1694 = vsel %vm1684, %v1661, %v1187
      %v1695 = vsel %vm1684, %v1662, %v1189
      %v1696 = vsel %vm1684, %v1663, %v1191
      %v1697 = vsel %vm1684, %v1664, %v1193
      %v1698 = vsel %vm1684, %v1665, %v1195
      %v1699 = vsel %vm1684, %v1666, %v1197
      %v1700 = vsel %vm1684, %v1667, %v1199
      %v1701 = vsel %vm1684, %v1668, %v1201
      %v1702 = vsel %vm1684, %v1669, %v1203
      %v1703 = vsel %vm1684, %v1670, %v1205
      %v1704 = vsel %vm1684, %v1671, %v1207
      %v1705 = vsel %vm1684, %v1672, %v1209
      %v1706 = vsel %vm1684, %v1673, %v1211
      %v1707 = vsel %vm1684, %v1674, %v1213
      %v1708 = vsel %vm1684, %v1675, %v1215
      %v1709 = vsel %vm1684, %v1676, %v1217
      %v1710 = vsel %vm1684, %v1677, %v1219
      %v1711 = vsel %vm1684, %v1678, %v1221
      %v1712 = vsel %vm1684, %v1679, %v1223
      %v1713 = vsel %vm1684, %v1680, %v1225
      %v1714 = vsel %vm1684, %v1681, %v1227
      %v1715 = vsel %vm1684, %v1682, %v1229
      %v1716 = vsel %vm1684, %v1683, %v1231
      %vm1717 = vcmask 392192
      %v1718 = vsel %vm1717, %v1685, %v1265
      %v1719 = vsel %vm1717, %v1686, %v1267
      %v1720 = vsel %vm1717, %v1687, %v1269
      %v1721 = vsel %vm1717, %v1688, %v1271
      %v1722 = vsel %vm1717, %v1689, %v1273
      %v1723 = vsel %vm1717, %v1690, %v1275
      %v1724 = vsel %vm1717, %v1691, %v1277
      %v1725 = vsel %vm1717, %v1692, %v1279
      %v1726 = vsel %vm1717, %v1693, %v1281
      %v1727 = vsel %vm1717, %v1694, %v1283
      %v1728 = vsel %vm1717, %v1695, %v1285
      %v1729 = vsel %vm1717, %v1696, %v1287
      %v1730 = vsel %vm1717, %v1697, %v1289
      %v1731 = vsel %vm1717, %v1698, %v1291
      %v1732 = vsel %vm1717, %v1699, %v1293
      %v1733 = vsel %vm1717, %v1700, %v1295
      %v1734 = vsel %vm1717, %v1701, %v1297
      %v1735 = vsel %vm1717, %v1702, %v1299
      %v1736 = vsel %vm1717, %v1703, %v1301
      %v1737 = vsel %vm1717, %v1704, %v1303
      %v1738 = vsel %vm1717, %v1705, %v1305
      %v1739 = vsel %vm1717, %v1706, %v1307
      %v1740 = vsel %vm1717, %v1707, %v1309
      %v1741 = vsel %vm1717, %v1708, %v1311
      %v1742 = vsel %vm1717, %v1709, %v1313
      %v1743 = vsel %vm1717, %v1710, %v1315
      %v1744 = vsel %vm1717, %v1711, %v1317
      %v1745 = vsel %vm1717, %v1712, %v1319
      %v1746 = vsel %vm1717, %v1713, %v1321
      %v1747 = vsel %vm1717, %v1714, %v1323
      %v1748 = vsel %vm1717, %v1715, %v1325
      %v1749 = vsel %vm1717, %v1716, %v1327
      %vm1750 = vcmask 457728
      %v1751 = vsel %vm1750, %v1718, %v1361
      %v1752 = vsel %vm1750, %v1719, %v1363
      %v1753 = vsel %vm1750, %v1720, %v1365
      %v1754 = vsel %vm1750, %v1721, %v1367
      %v1755 = vsel %vm1750, %v1722, %v1369
      %v1756 = vsel %vm1750, %v1723, %v1371
      %v1757 = vsel %vm1750, %v1724, %v1373
      %v1758 = vsel %vm1750, %v1725, %v1375
      %v1759 = vsel %vm1750, %v1726, %v1377
      %v1760 = vsel %vm1750, %v1727, %v1379
      %v1761 = vsel %vm1750, %v1728, %v1381
      %v1762 = vsel %vm1750, %v1729, %v1383
      %v1763 = vsel %vm1750, %v1730, %v1385
      %v1764 = vsel %vm1750, %v1731, %v1387
      %v1765 = vsel %vm1750, %v1732, %v1389
      %v1766 = vsel %vm1750, %v1733, %v1391
      %v1767 = vsel %vm1750, %v1734, %v1393
      %v1768 = vsel %vm1750, %v1735, %v1395
      %v1769 = vsel %vm1750, %v1736, %v1397
      %v1770 = vsel %vm1750, %v1737, %v1399
      %v1771 = vsel %vm1750, %v1738, %v1401
      %v1772 = vsel %vm1750, %v1739, %v1403
      %v1773 = vsel %vm1750, %v1740, %v1405
      %v1774 = vsel %vm1750, %v1741, %v1407
      %v1775 = vsel %vm1750, %v1742, %v1409
      %v1776 = vsel %vm1750, %v1743, %v1411
      %v1777 = vsel %vm1750, %v1744, %v1413
      %v1778 = vsel %vm1750, %v1745, %v1415
      %v1779 = vsel %vm1750, %v1746, %v1417
      %v1780 = vsel %vm1750, %v1747, %v1419
      %v1781 = vsel %vm1750, %v1748, %v1421
      %v1782 = vsel %vm1750, %v1749, %v1423
      %vm1783 = vcmask 523264
      %v1784 = vsel %vm1783, %v1751, %v1457
      %v1785 = vsel %vm1783, %v1752, %v1459
      %v1786 = vsel %vm1783, %v1753, %v1461
      %v1787 = vsel %vm1783, %v1754, %v1463
      %v1788 = vsel %vm1783, %v1755, %v1465
      %v1789 = vsel %vm1783, %v1756, %v1467
      %v1790 = vsel %vm1783, %v1757, %v1469
      %v1791 = vsel %vm1783, %v1758, %v1471
      %v1792 = vsel %vm1783, %v1759, %v1473
      %v1793 = vsel %vm1783, %v1760, %v1475
      %v1794 = vsel %vm1783, %v1761, %v1477
      %v1795 = vsel %vm1783, %v1762, %v1479
      %v1796 = vsel %vm1783, %v1763, %v1481
      %v1797 = vsel %vm1783, %v1764, %v1483
      %v1798 = vsel %vm1783, %v1765, %v1485
      %v1799 = vsel %vm1783, %v1766, %v1487
      %v1800 = vsel %vm1783, %v1767, %v1489
      %v1801 = vsel %vm1783, %v1768, %v1491
      %v1802 = vsel %vm1783, %v1769, %v1493
      %v1803 = vsel %vm1783, %v1770, %v1495
      %v1804 = vsel %vm1783, %v1771, %v1497
      %v1805 = vsel %vm1783, %v1772, %v1499
      %v1806 = vsel %vm1783, %v1773, %v1501
      %v1807 = vsel %vm1783, %v1774, %v1503
      %v1808 = vsel %vm1783, %v1775, %v1505
      %v1809 = vsel %vm1783, %v1776, %v1507
      %v1810 = vsel %vm1783, %v1777, %v1509
      %v1811 = vsel %vm1783, %v1778, %v1511
      %v1812 = vsel %vm1783, %v1779, %v1513
      %v1813 = vsel %vm1783, %v1780, %v1515
      %v1814 = vsel %vm1783, %v1781, %v1517
      %v1815 = vsel %vm1783, %v1782, %v1519
      %v1816 = vpack.c.bf16 %v1785, %v1784
      %v1817 = vpack.c.bf16 %v1787, %v1786
      %v1818 = vpack.c.bf16 %v1789, %v1788
      %v1819 = vpack.c.bf16 %v1791, %v1790
      %v1820 = vpack.c.bf16 %v1793, %v1792
      %v1821 = vpack.c.bf16 %v1795, %v1794
      %v1822 = vpack.c.bf16 %v1797, %v1796
      %v1823 = vpack.c.bf16 %v1799, %v1798
      %v1824 = vpack.c.bf16 %v1801, %v1800
      %v1825 = vpack.c.bf16 %v1803, %v1802
      %v1826 = vpack.c.bf16 %v1805, %v1804
      %v1827 = vpack.c.bf16 %v1807, %v1806
      %v1828 = vpack.c.bf16 %v1809, %v1808
      %v1829 = vpack.c.bf16 %v1811, %v1810
      %v1830 = vpack.c.bf16 %v1813, %v1812
      %v1831 = vpack.c.bf16 %v1815, %v1814
      %v1832 = vld [vmem:[%s1] sm:$0xf]
      %v1833 = vld [vmem:[%s1 + $0x4] sm:$0xf]
      %v1834 = vld [vmem:[%s1 + $0x8] sm:$0xf]
      %v1835 = vld [vmem:[%s1 + $0xc] sm:$0xf]
      %v1836 = vld [vmem:[%s1 + $0x10] sm:$0xf]
      %v1837 = vld [vmem:[%s1 + $0x14] sm:$0xf]
      %v1838 = vld [vmem:[%s1 + $0x18] sm:$0xf]
      %v1839 = vld [vmem:[%s1 + $0x1c] sm:$0xf]
      %v1840 = vld [vmem:[%s1 + $0x20] sm:$0xf]
      %v1850 = vunpack.c.l.b16 %v1832
      %v1851 = vunpack.c.l.b16 %v1833
      %v1852 = vunpack.c.l.b16 %v1834
      %v1853 = vunpack.c.l.b16 %v1835
      %v1854 = vunpack.c.l.b16 %v1836
      %v1855 = vunpack.c.l.b16 %v1837
      %v1856 = vunpack.c.l.b16 %v1838
      %v1857 = vunpack.c.l.b16 %v1839
      %v1858 = vunpack.c.l.b16 %v1840
      %v1859 = vpack.c.b16 %v1851, %v1850
      %v1860 = vpack.c.b16 %v1853, %v1852
      %v1861 = vpack.c.b16 %v1855, %v1854
      %v1862 = vpack.c.b16 %v1857, %v1856
      %v1863 = vpack.c.b16 %v1858, %v1858
      %vm1868 = vcmask 588800
      %v1870 = vsel %vm1868, %v1816, 0
      %v1873 = vsel %vm1868, %v1817, 0
      %v1876 = vsel %vm1868, %v1818, 0
      %v1879 = vsel %vm1868, %v1819, 0
      %v1882 = vsel %vm1868, %v1820, 0
      %v1885 = vsel %vm1868, %v1821, 0
      %v1888 = vsel %vm1868, %v1822, 0
      %v1891 = vsel %vm1868, %v1823, 0
      %v1894 = vsel %vm1868, %v1824, 0
      %v1897 = vsel %vm1868, %v1825, 0
      %v1900 = vsel %vm1868, %v1826, 0
      %v1903 = vsel %vm1868, %v1827, 0
      %v1906 = vsel %vm1868, %v1828, 0
      %v1909 = vsel %vm1868, %v1829, 0
      %v1912 = vsel %vm1868, %v1830, 0
      %v1915 = vsel %vm1868, %v1831, 0
      %vm1917 = vcmask 1043456
      %v1919 = vsel %vm1917, %v1863, 0
      %1921 = vmatprep.subr.bf16.mxu0 0
      %1922 = vmatpush1.bf16.msra.mxu0 %v1859
      %1923 = vmatprep.subr.bf16.mxu0 0
      %1924 = vmatpush1.bf16.msra.mxu0 %v1860
      %1925 = vmatprep.subr.bf16.mxu0 0
      %1926 = vmatpush1.bf16.msra.mxu0 %v1861
      %1927 = vmatprep.subr.bf16.mxu0 0
      %1928 = vmatpush1.bf16.msra.mxu0 %v1862
      %1929 = vmatprep.subr.bf16.mxu0 0
      %1930 = vmatpush1.bf16.msra.mxu0 %v1919
      %1931 = vmatprep.subr.bf16.mxu0 0
      %1932 = vmatpush1.bf16.msra.mxu0 0
      %1933 = vmatprep.subr.bf16.mxu0 0
      %1934 = vmatpush1.bf16.msra.mxu0 0
      %1935 = vmatprep.subr.bf16.mxu0 0
      %1936 = vmatpush1.bf16.msra.mxu0 0
      %1937 = vmatprep.subr.bf16.mxu0 0
      %1938 = vmatpush1.bf16.msra.mxu0 0
      %1939 = vmatprep.subr.bf16.mxu0 0
      %1940 = vmatpush1.bf16.msra.mxu0 0
      %1941 = vmatprep.subr.bf16.mxu0 0
      %1942 = vmatpush1.bf16.msra.mxu0 0
      %1943 = vmatprep.subr.bf16.mxu0 0
      %1944 = vmatpush1.bf16.msra.mxu0 0
      %1945 = vmatprep.subr.bf16.mxu0 0
      %1946 = vmatpush1.bf16.msra.mxu0 0
      %1947 = vmatprep.subr.bf16.mxu0 0
      %1948 = vmatpush1.bf16.msra.mxu0 0
      %1949 = vmatprep.subr.bf16.mxu0 0
      %1950 = vmatpush1.bf16.msra.mxu0 0
      %1951 = vmatprep.subr.bf16.mxu0 0
      %1952 = vmatpush1.bf16.msra.mxu0 0
      %1953 = vmatprep.mubr.bf16.mxu0 0
      %1954 = vmatmul.mubr.bf16.gmra.mrb[0].mxu0 %v1870
      %v1955 = vpop.f32.mrb[0].mxu0
      %v1956 = vadd.f32 0.0, %v1955
      %v1957 = vpop.f32.mrb[0].mxu0
      %v1958 = vpop.f32.mrb[0].mxu0
      %v1959 = vadd.f32 0.0, %v1958
      %v1960 = vpop.f32.mrb[0].mxu0
      %1961 = vmatprep.mubr.bf16.mxu0 0
      %1962 = vmatmul.mubr.bf16.gmra.mrb[0].mxu0 %v1873
      %v1963 = vpop.f32.mrb[0].mxu0
      %v1964 = vadd.f32 0.0, %v1963
      %v1965 = vpop.f32.mrb[0].mxu0
      %v1966 = vpop.f32.mrb[0].mxu0
      %v1967 = vadd.f32 0.0, %v1966
      %v1968 = vpop.f32.mrb[0].mxu0
      %1969 = vmatprep.mubr.bf16.mxu0 0
      %1970 = vmatmul.mubr.bf16.gmra.mrb[0].mxu0 %v1876
      %v1971 = vpop.f32.mrb[0].mxu0
      %v1972 = vadd.f32 0.0, %v1971
      %v1973 = vpop.f32.mrb[0].mxu0
      %v1974 = vpop.f32.mrb[0].mxu0
      %v1975 = vadd.f32 0.0, %v1974
      %v1976 = vpop.f32.mrb[0].mxu0
      %1977 = vmatprep.mubr.bf16.mxu0 0
      %1978 = vmatmul.mubr.bf16.gmra.mrb[0].mxu0 %v1879
      %v1979 = vpop.f32.mrb[0].mxu0
      %v1980 = vadd.f32 0.0, %v1979
      %v1981 = vpop.f32.mrb[0].mxu0
      %v1982 = vpop.f32.mrb[0].mxu0
      %v1983 = vadd.f32 0.0, %v1982
      %v1984 = vpop.f32.mrb[0].mxu0
      %1985 = vmatprep.mubr.bf16.mxu0 0
      %1986 = vmatmul.mubr.bf16.gmra.mrb[0].mxu0 %v1882
      %v1987 = vpop.f32.mrb[0].mxu0
      %v1988 = vadd.f32 0.0, %v1987
      %v1989 = vpop.f32.mrb[0].mxu0
      %v1990 = vpop.f32.mrb[0].mxu0
      %v1991 = vadd.f32 0.0, %v1990
      %v1992 = vpop.f32.mrb[0].mxu0
      %1993 = vmatprep.mubr.bf16.mxu0 0
      %1994 = vmatmul.mubr.bf16.gmra.mrb[0].mxu0 %v1885
      %v1995 = vpop.f32.mrb[0].mxu0
      %v1996 = vadd.f32 0.0, %v1995
      %v1997 = vpop.f32.mrb[0].mxu0
      %v1998 = vpop.f32.mrb[0].mxu0
      %v1999 = vadd.f32 0.0, %v1998
      %v2000 = vpop.f32.mrb[0].mxu0
      %2001 = vmatprep.mubr.bf16.mxu0 0
      %2002 = vmatmul.mubr.bf16.gmra.mrb[0].mxu0 %v1888
      %v2003 = vpop.f32.mrb[0].mxu0
      %v2004 = vadd.f32 0.0, %v2003
      %v2005 = vpop.f32.mrb[0].mxu0
      %v2006 = vpop.f32.mrb[0].mxu0
      %v2007 = vadd.f32 0.0, %v2006
      %v2008 = vpop.f32.mrb[0].mxu0
      %2009 = vmatprep.mubr.bf16.mxu0 0
      %2010 = vmatmul.mubr.bf16.gmra.mrb[0].mxu0 %v1891
      %v2011 = vpop.f32.mrb[0].mxu0
      %v2012 = vadd.f32 0.0, %v2011
      %v2013 = vpop.f32.mrb[0].mxu0
      %v2014 = vpop.f32.mrb[0].mxu0
      %v2015 = vadd.f32 0.0, %v2014
      %v2016 = vpop.f32.mrb[0].mxu0
      %2017 = vmatprep.mubr.bf16.mxu0 0
      %2018 = vmatmul.mubr.bf16.gmra.mrb[0].mxu0 %v1894
      %v2019 = vpop.f32.mrb[0].mxu0
      %v2020 = vadd.f32 0.0, %v2019
      %v2021 = vpop.f32.mrb[0].mxu0
      %v2022 = vpop.f32.mrb[0].mxu0
      %v2023 = vadd.f32 0.0, %v2022
      %v2024 = vpop.f32.mrb[0].mxu0
      %2025 = vmatprep.mubr.bf16.mxu0 0
      %2026 = vmatmul.mubr.bf16.gmra.mrb[0].mxu0 %v1897
      %v2027 = vpop.f32.mrb[0].mxu0
      %v2028 = vadd.f32 0.0, %v2027
      %v2029 = vpop.f32.mrb[0].mxu0
      %v2030 = vpop.f32.mrb[0].mxu0
      %v2031 = vadd.f32 0.0, %v2030
      %v2032 = vpop.f32.mrb[0].mxu0
      %2033 = vmatprep.mubr.bf16.mxu0 0
      %2034 = vmatmul.mubr.bf16.gmra.mrb[0].mxu0 %v1900
      %v2035 = vpop.f32.mrb[0].mxu0
      %v2036 = vadd.f32 0.0, %v2035
      %v2037 = vpop.f32.mrb[0].mxu0
      %v2038 = vpop.f32.mrb[0].mxu0
      %v2039 = vadd.f32 0.0, %v2038
      %v2040 = vpop.f32.mrb[0].mxu0
      %2041 = vmatprep.mubr.bf16.mxu0 0
      %2042 = vmatmul.mubr.bf16.gmra.mrb[0].mxu0 %v1903
      %v2043 = vpop.f32.mrb[0].mxu0
      %v2044 = vadd.f32 0.0, %v2043
      %v2045 = vpop.f32.mrb[0].mxu0
      %v2046 = vpop.f32.mrb[0].mxu0
      %v2047 = vadd.f32 0.0, %v2046
      %v2048 = vpop.f32.mrb[0].mxu0
      %2049 = vmatprep.mubr.bf16.mxu0 0
      %2050 = vmatmul.mubr.bf16.gmra.mrb[0].mxu0 %v1906
      %v2051 = vpop.f32.mrb[0].mxu0
      %v2052 = vadd.f32 0.0, %v2051
      %v2053 = vpop.f32.mrb[0].mxu0
      %v2054 = vpop.f32.mrb[0].mxu0
      %v2055 = vadd.f32 0.0, %v2054
      %v2056 = vpop.f32.mrb[0].mxu0
      %2057 = vmatprep.mubr.bf16.mxu0 0
      %2058 = vmatmul.mubr.bf16.gmra.mrb[0].mxu0 %v1909
      %v2059 = vpop.f32.mrb[0].mxu0
      %v2060 = vadd.f32 0.0, %v2059
      %v2061 = vpop.f32.mrb[0].mxu0
      %v2062 = vpop.f32.mrb[0].mxu0
      %v2063 = vadd.f32 0.0, %v2062
      %v2064 = vpop.f32.mrb[0].mxu0
      %2065 = vmatprep.mubr.bf16.mxu0 0
      %2066 = vmatmul.mubr.bf16.gmra.mrb[0].mxu0 %v1912
      %v2067 = vpop.f32.mrb[0].mxu0
      %v2068 = vadd.f32 0.0, %v2067
      %v2069 = vpop.f32.mrb[0].mxu0
      %v2070 = vpop.f32.mrb[0].mxu0
      %v2071 = vadd.f32 0.0, %v2070
      %v2072 = vpop.f32.mrb[0].mxu0
      %2073 = vmatprep.mubr.bf16.mxu0 0
      %2074 = vmatmul.mubr.bf16.gmra.mrb[0].mxu0 %v1915
      %v2075 = vpop.f32.mrb[0].mxu0
      %v2076 = vadd.f32 0.0, %v2075
      %v2077 = vpop.f32.mrb[0].mxu0
      %v2078 = vpop.f32.mrb[0].mxu0
      %v2079 = vadd.f32 0.0, %v2078
      %v2080 = vpop.f32.mrb[0].mxu0
      %2081 = vdwg.mxu0
      %v2082 = vld [vmem:[%s2] sm:$0x1]
      %v2084 = vlaneseq
      %v2085 = vshrl.u32 %v2084, 7
      %v2086 = vsub.s32 0, %v2085
      %v2087 = vrot.slane %v2082, %v2086
      %v2089 = vmul.f32 %v1956, %v2087
      %v2090 = vmul.f32 %v1959, %v2087
      %v2091 = vmul.f32 %v1964, %v2087
      %v2092 = vmul.f32 %v1967, %v2087
      %v2093 = vmul.f32 %v1972, %v2087
      %v2094 = vmul.f32 %v1975, %v2087
      %v2095 = vmul.f32 %v1980, %v2087
      %v2096 = vmul.f32 %v1983, %v2087
      %v2097 = vmul.f32 %v1988, %v2087
      %v2098 = vmul.f32 %v1991, %v2087
      %v2099 = vmul.f32 %v1996, %v2087
      %v2100 = vmul.f32 %v1999, %v2087
      %v2101 = vmul.f32 %v2004, %v2087
      %v2102 = vmul.f32 %v2007, %v2087
      %v2103 = vmul.f32 %v2012, %v2087
      %v2104 = vmul.f32 %v2015, %v2087
      %v2105 = vmul.f32 %v2020, %v2087
      %v2106 = vmul.f32 %v2023, %v2087
      %v2107 = vmul.f32 %v2028, %v2087
      %v2108 = vmul.f32 %v2031, %v2087
      %v2109 = vmul.f32 %v2036, %v2087
      %v2110 = vmul.f32 %v2039, %v2087
      %v2111 = vmul.f32 %v2044, %v2087
      %v2112 = vmul.f32 %v2047, %v2087
      %v2113 = vmul.f32 %v2052, %v2087
      %v2114 = vmul.f32 %v2055, %v2087
      %v2115 = vmul.f32 %v2060, %v2087
      %v2116 = vmul.f32 %v2063, %v2087
      %v2117 = vmul.f32 %v2068, %v2087
      %v2118 = vmul.f32 %v2071, %v2087
      %v2119 = vmul.f32 %v2076, %v2087
      %v2120 = vmul.f32 %v2079, %v2087
      %v2121 = vld [vmem:[%s3] sm:$0x1]
      %v2123 = vlaneseq
      %v2124 = vshrl.u32 %v2123, 7
      %v2125 = vsub.s32 0, %v2124
      %v2126 = vrot.slane %v2121, %v2125
      %v2128 = vadd.f32 %v2089, %v2126
      %v2129 = vadd.f32 %v2090, %v2126
      %v2130 = vadd.f32 %v2091, %v2126
      %v2131 = vadd.f32 %v2092, %v2126
      %v2132 = vadd.f32 %v2093, %v2126
      %v2133 = vadd.f32 %v2094, %v2126
      %v2134 = vadd.f32 %v2095, %v2126
      %v2135 = vadd.f32 %v2096, %v2126
      %v2136 = vadd.f32 %v2097, %v2126
      %v2137 = vadd.f32 %v2098, %v2126
      %v2138 = vadd.f32 %v2099, %v2126
      %v2139 = vadd.f32 %v2100, %v2126
      %v2140 = vadd.f32 %v2101, %v2126
      %v2141 = vadd.f32 %v2102, %v2126
      %v2142 = vadd.f32 %v2103, %v2126
      %v2143 = vadd.f32 %v2104, %v2126
      %v2144 = vadd.f32 %v2105, %v2126
      %v2145 = vadd.f32 %v2106, %v2126
      %v2146 = vadd.f32 %v2107, %v2126
      %v2147 = vadd.f32 %v2108, %v2126
      %v2148 = vadd.f32 %v2109, %v2126
      %v2149 = vadd.f32 %v2110, %v2126
      %v2150 = vadd.f32 %v2111, %v2126
      %v2151 = vadd.f32 %v2112, %v2126
      %v2152 = vadd.f32 %v2113, %v2126
      %v2153 = vadd.f32 %v2114, %v2126
      %v2154 = vadd.f32 %v2115, %v2126
      %v2155 = vadd.f32 %v2116, %v2126
      %v2156 = vadd.f32 %v2117, %v2126
      %v2157 = vadd.f32 %v2118, %v2126
      %v2158 = vadd.f32 %v2119, %v2126
      %v2159 = vadd.f32 %v2120, %v2126
      %v2160 = vmax.f32 %v2128, 0.0
      %v2161 = vmax.f32 %v2129, 0.0
      %v2162 = vmax.f32 %v2130, 0.0
      %v2163 = vmax.f32 %v2131, 0.0
      %v2164 = vmax.f32 %v2132, 0.0
      %v2165 = vmax.f32 %v2133, 0.0
      %v2166 = vmax.f32 %v2134, 0.0
      %v2167 = vmax.f32 %v2135, 0.0
      %v2168 = vmax.f32 %v2136, 0.0
      %v2169 = vmax.f32 %v2137, 0.0
      %v2170 = vmax.f32 %v2138, 0.0
      %v2171 = vmax.f32 %v2139, 0.0
      %v2172 = vmax.f32 %v2140, 0.0
      %v2173 = vmax.f32 %v2141, 0.0
      %v2174 = vmax.f32 %v2142, 0.0
      %v2175 = vmax.f32 %v2143, 0.0
      %v2176 = vmax.f32 %v2144, 0.0
      %v2177 = vmax.f32 %v2145, 0.0
      %v2178 = vmax.f32 %v2146, 0.0
      %v2179 = vmax.f32 %v2147, 0.0
      %v2180 = vmax.f32 %v2148, 0.0
      %v2181 = vmax.f32 %v2149, 0.0
      %v2182 = vmax.f32 %v2150, 0.0
      %v2183 = vmax.f32 %v2151, 0.0
      %v2184 = vmax.f32 %v2152, 0.0
      %v2185 = vmax.f32 %v2153, 0.0
      %v2186 = vmax.f32 %v2154, 0.0
      %v2187 = vmax.f32 %v2155, 0.0
      %v2188 = vmax.f32 %v2156, 0.0
      %v2189 = vmax.f32 %v2157, 0.0
      %v2190 = vmax.f32 %v2158, 0.0
      %v2191 = vmax.f32 %v2159, 0.0
      %v2224 = vcombine.high %v2160, %v2160
      %v2226 = vunpack.c.l.s4 1983009808
      %v2227 = vunpack.c.0.s8 %v2226
      %v2228 = vlaneseq
      %v2229 = vshrl.u32 %v2228, 7
      %v2230 = vsub.s32 %v2227, %v2229
      %v2231 = vrot.slane %v2160, %v2230
      %v2233 = vunpack.c.l.s4 1983009808
      %v2234 = vunpack.c.0.s8 %v2233
      %v2235 = vlaneseq
      %v2236 = vshrl.u32 %v2235, 7
      %v2237 = vsub.s32 %v2234, %v2236
      %v2238 = vrot.slane %v2224, %v2237
      %v2239 = vcombine.high %v2231, %v2231
      %v2240 = vcombine.high %v2238, %v2238
      %v2241 = vcombine.high %v2161, %v2161
      %v2243 = vunpack.c.l.s4 1983009808
      %v2244 = vunpack.c.0.s8 %v2243
      %v2245 = vlaneseq
      %v2246 = vshrl.u32 %v2245, 7
      %v2247 = vsub.s32 %v2244, %v2246
      %v2248 = vrot.slane %v2161, %v2247
      %v2250 = vunpack.c.l.s4 1983009808
      %v2251 = vunpack.c.0.s8 %v2250
      %v2252 = vlaneseq
      %v2253 = vshrl.u32 %v2252, 7
      %v2254 = vsub.s32 %v2251, %v2253
      %v2255 = vrot.slane %v2241, %v2254
      %v2256 = vcombine.high %v2248, %v2248
      %v2257 = vcombine.high %v2255, %v2255
      %v2258 = vcombine.high %v2162, %v2162
      %v2260 = vunpack.c.l.s4 1983009808
      %v2261 = vunpack.c.0.s8 %v2260
      %v2262 = vlaneseq
      %v2263 = vshrl.u32 %v2262, 7
      %v2264 = vsub.s32 %v2261, %v2263
      %v2265 = vrot.slane %v2162, %v2264
      %v2267 = vunpack.c.l.s4 1983009808
      %v2268 = vunpack.c.0.s8 %v2267
      %v2269 = vlaneseq
      %v2270 = vshrl.u32 %v2269, 7
      %v2271 = vsub.s32 %v2268, %v2270
      %v2272 = vrot.slane %v2258, %v2271
      %v2273 = vcombine.high %v2265, %v2265
      %v2274 = vcombine.high %v2272, %v2272
      %v2275 = vcombine.high %v2163, %v2163
      %v2277 = vunpack.c.l.s4 1983009808
      %v2278 = vunpack.c.0.s8 %v2277
      %v2279 = vlaneseq
      %v2280 = vshrl.u32 %v2279, 7
      %v2281 = vsub.s32 %v2278, %v2280
      %v2282 = vrot.slane %v2163, %v2281
      %v2284 = vunpack.c.l.s4 1983009808
      %v2285 = vunpack.c.0.s8 %v2284
      %v2286 = vlaneseq
      %v2287 = vshrl.u32 %v2286, 7
      %v2288 = vsub.s32 %v2285, %v2287
      %v2289 = vrot.slane %v2275, %v2288
      %v2290 = vcombine.high %v2282, %v2282
      %v2291 = vcombine.high %v2289, %v2289
      %v2292 = vcombine.high %v2164, %v2164
      %v2294 = vunpack.c.l.s4 1983009808
      %v2295 = vunpack.c.0.s8 %v2294
      %v2296 = vlaneseq
      %v2297 = vshrl.u32 %v2296, 7
      %v2298 = vsub.s32 %v2295, %v2297
      %v2299 = vrot.slane %v2164, %v2298
      %v2301 = vunpack.c.l.s4 1983009808
      %v2302 = vunpack.c.0.s8 %v2301
      %v2303 = vlaneseq
      %v2304 = vshrl.u32 %v2303, 7
      %v2305 = vsub.s32 %v2302, %v2304
      %v2306 = vrot.slane %v2292, %v2305
      %v2307 = vcombine.high %v2299, %v2299
      %v2308 = vcombine.high %v2306, %v2306
      %v2309 = vcombine.high %v2165, %v2165
      %v2311 = vunpack.c.l.s4 1983009808
      %v2312 = vunpack.c.0.s8 %v2311
      %v2313 = vlaneseq
      %v2314 = vshrl.u32 %v2313, 7
      %v2315 = vsub.s32 %v2312, %v2314
      %v2316 = vrot.slane %v2165, %v2315
      %v2318 = vunpack.c.l.s4 1983009808
      %v2319 = vunpack.c.0.s8 %v2318
      %v2320 = vlaneseq
      %v2321 = vshrl.u32 %v2320, 7
      %v2322 = vsub.s32 %v2319, %v2321
      %v2323 = vrot.slane %v2309, %v2322
      %v2324 = vcombine.high %v2316, %v2316
      %v2325 = vcombine.high %v2323, %v2323
      %v2326 = vcombine.high %v2166, %v2166
      %v2328 = vunpack.c.l.s4 1983009808
      %v2329 = vunpack.c.0.s8 %v2328
      %v2330 = vlaneseq
      %v2331 = vshrl.u32 %v2330, 7
      %v2332 = vsub.s32 %v2329, %v2331
      %v2333 = vrot.slane %v2166, %v2332
      %v2335 = vunpack.c.l.s4 1983009808
      %v2336 = vunpack.c.0.s8 %v2335
      %v2337 = vlaneseq
      %v2338 = vshrl.u32 %v2337, 7
      %v2339 = vsub.s32 %v2336, %v2338
      %v2340 = vrot.slane %v2326, %v2339
      %v2341 = vcombine.high %v2333, %v2333
      %v2342 = vcombine.high %v2340, %v2340
      %v2343 = vcombine.high %v2167, %v2167
      %v2345 = vunpack.c.l.s4 1983009808
      %v2346 = vunpack.c.0.s8 %v2345
      %v2347 = vlaneseq
      %v2348 = vshrl.u32 %v2347, 7
      %v2349 = vsub.s32 %v2346, %v2348
      %v2350 = vrot.slane %v2167, %v2349
      %v2352 = vunpack.c.l.s4 1983009808
      %v2353 = vunpack.c.0.s8 %v2352
      %v2354 = vlaneseq
      %v2355 = vshrl.u32 %v2354, 7
      %v2356 = vsub.s32 %v2353, %v2355
      %v2357 = vrot.slane %v2343, %v2356
      %v2358 = vcombine.high %v2350, %v2350
      %v2359 = vcombine.high %v2357, %v2357
      %v2360 = vcombine.high %v2168, %v2168
      %v2362 = vunpack.c.l.s4 1983009808
      %v2363 = vunpack.c.0.s8 %v2362
      %v2364 = vlaneseq
      %v2365 = vshrl.u32 %v2364, 7
      %v2366 = vsub.s32 %v2363, %v2365
      %v2367 = vrot.slane %v2168, %v2366
      %v2369 = vunpack.c.l.s4 1983009808
      %v2370 = vunpack.c.0.s8 %v2369
      %v2371 = vlaneseq
      %v2372 = vshrl.u32 %v2371, 7
      %v2373 = vsub.s32 %v2370, %v2372
      %v2374 = vrot.slane %v2360, %v2373
      %v2375 = vcombine.high %v2367, %v2367
      %v2376 = vcombine.high %v2374, %v2374
      %v2377 = vcombine.high %v2169, %v2169
      %v2379 = vunpack.c.l.s4 1983009808
      %v2380 = vunpack.c.0.s8 %v2379
      %v2381 = vlaneseq
      %v2382 = vshrl.u32 %v2381, 7
      %v2383 = vsub.s32 %v2380, %v2382
      %v2384 = vrot.slane %v2169, %v2383
      %v2386 = vunpack.c.l.s4 1983009808
      %v2387 = vunpack.c.0.s8 %v2386
      %v2388 = vlaneseq
      %v2389 = vshrl.u32 %v2388, 7
      %v2390 = vsub.s32 %v2387, %v2389
      %v2391 = vrot.slane %v2377, %v2390
      %v2392 = vcombine.high %v2384, %v2384
      %v2393 = vcombine.high %v2391, %v2391
      %v2394 = vcombine.high %v2170, %v2170
      %v2396 = vunpack.c.l.s4 1983009808
      %v2397 = vunpack.c.0.s8 %v2396
      %v2398 = vlaneseq
      %v2399 = vshrl.u32 %v2398, 7
      %v2400 = vsub.s32 %v2397, %v2399
      %v2401 = vrot.slane %v2170, %v2400
      %v2403 = vunpack.c.l.s4 1983009808
      %v2404 = vunpack.c.0.s8 %v2403
      %v2405 = vlaneseq
      %v2406 = vshrl.u32 %v2405, 7
      %v2407 = vsub.s32 %v2404, %v2406
      %v2408 = vrot.slane %v2394, %v2407
      %v2409 = vcombine.high %v2401, %v2401
      %v2410 = vcombine.high %v2408, %v2408
      %v2411 = vcombine.high %v2171, %v2171
      %v2413 = vunpack.c.l.s4 1983009808
      %v2414 = vunpack.c.0.s8 %v2413
      %v2415 = vlaneseq
      %v2416 = vshrl.u32 %v2415, 7
      %v2417 = vsub.s32 %v2414, %v2416
      %v2418 = vrot.slane %v2171, %v2417
      %v2420 = vunpack.c.l.s4 1983009808
      %v2421 = vunpack.c.0.s8 %v2420
      %v2422 = vlaneseq
      %v2423 = vshrl.u32 %v2422, 7
      %v2424 = vsub.s32 %v2421, %v2423
      %v2425 = vrot.slane %v2411, %v2424
      %v2426 = vcombine.high %v2418, %v2418
      %v2427 = vcombine.high %v2425, %v2425
      %v2428 = vcombine.high %v2172, %v2172
      %v2430 = vunpack.c.l.s4 1983009808
      %v2431 = vunpack.c.0.s8 %v2430
      %v2432 = vlaneseq
      %v2433 = vshrl.u32 %v2432, 7
      %v2434 = vsub.s32 %v2431, %v2433
      %v2435 = vrot.slane %v2172, %v2434
      %v2437 = vunpack.c.l.s4 1983009808
      %v2438 = vunpack.c.0.s8 %v2437
      %v2439 = vlaneseq
      %v2440 = vshrl.u32 %v2439, 7
      %v2441 = vsub.s32 %v2438, %v2440
      %v2442 = vrot.slane %v2428, %v2441
      %v2443 = vcombine.high %v2435, %v2435
      %v2444 = vcombine.high %v2442, %v2442
      %v2445 = vcombine.high %v2173, %v2173
      %v2447 = vunpack.c.l.s4 1983009808
      %v2448 = vunpack.c.0.s8 %v2447
      %v2449 = vlaneseq
      %v2450 = vshrl.u32 %v2449, 7
      %v2451 = vsub.s32 %v2448, %v2450
      %v2452 = vrot.slane %v2173, %v2451
      %v2454 = vunpack.c.l.s4 1983009808
      %v2455 = vunpack.c.0.s8 %v2454
      %v2456 = vlaneseq
      %v2457 = vshrl.u32 %v2456, 7
      %v2458 = vsub.s32 %v2455, %v2457
      %v2459 = vrot.slane %v2445, %v2458
      %v2460 = vcombine.high %v2452, %v2452
      %v2461 = vcombine.high %v2459, %v2459
      %v2462 = vcombine.high %v2174, %v2174
      %v2464 = vunpack.c.l.s4 1983009808
      %v2465 = vunpack.c.0.s8 %v2464
      %v2466 = vlaneseq
      %v2467 = vshrl.u32 %v2466, 7
      %v2468 = vsub.s32 %v2465, %v2467
      %v2469 = vrot.slane %v2174, %v2468
      %v2471 = vunpack.c.l.s4 1983009808
      %v2472 = vunpack.c.0.s8 %v2471
      %v2473 = vlaneseq
      %v2474 = vshrl.u32 %v2473, 7
      %v2475 = vsub.s32 %v2472, %v2474
      %v2476 = vrot.slane %v2462, %v2475
      %v2477 = vcombine.high %v2469, %v2469
      %v2478 = vcombine.high %v2476, %v2476
      %v2479 = vcombine.high %v2175, %v2175
      %v2481 = vunpack.c.l.s4 1983009808
      %v2482 = vunpack.c.0.s8 %v2481
      %v2483 = vlaneseq
      %v2484 = vshrl.u32 %v2483, 7
      %v2485 = vsub.s32 %v2482, %v2484
      %v2486 = vrot.slane %v2175, %v2485
      %v2488 = vunpack.c.l.s4 1983009808
      %v2489 = vunpack.c.0.s8 %v2488
      %v2490 = vlaneseq
      %v2491 = vshrl.u32 %v2490, 7
      %v2492 = vsub.s32 %v2489, %v2491
      %v2493 = vrot.slane %v2479, %v2492
      %v2494 = vcombine.high %v2486, %v2486
      %v2495 = vcombine.high %v2493, %v2493
      %v2496 = vcombine.high %v2176, %v2176
      %v2498 = vunpack.c.l.s4 1983009808
      %v2499 = vunpack.c.0.s8 %v2498
      %v2500 = vlaneseq
      %v2501 = vshrl.u32 %v2500, 7
      %v2502 = vsub.s32 %v2499, %v2501
      %v2503 = vrot.slane %v2176, %v2502
      %v2505 = vunpack.c.l.s4 1983009808
      %v2506 = vunpack.c.0.s8 %v2505
      %v2507 = vlaneseq
      %v2508 = vshrl.u32 %v2507, 7
      %v2509 = vsub.s32 %v2506, %v2508
      %v2510 = vrot.slane %v2496, %v2509
      %v2511 = vcombine.high %v2503, %v2503
      %v2512 = vcombine.high %v2510, %v2510
      %v2513 = vcombine.high %v2177, %v2177
      %v2515 = vunpack.c.l.s4 1983009808
      %v2516 = vunpack.c.0.s8 %v2515
      %v2517 = vlaneseq
      %v2518 = vshrl.u32 %v2517, 7
      %v2519 = vsub.s32 %v2516, %v2518
      %v2520 = vrot.slane %v2177, %v2519
      %v2522 = vunpack.c.l.s4 1983009808
      %v2523 = vunpack.c.0.s8 %v2522
      %v2524 = vlaneseq
      %v2525 = vshrl.u32 %v2524, 7
      %v2526 = vsub.s32 %v2523, %v2525
      %v2527 = vrot.slane %v2513, %v2526
      %v2528 = vcombine.high %v2520, %v2520
      %v2529 = vcombine.high %v2527, %v2527
      %v2530 = vcombine.high %v2178, %v2178
      %v2532 = vunpack.c.l.s4 1983009808
      %v2533 = vunpack.c.0.s8 %v2532
      %v2534 = vlaneseq
      %v2535 = vshrl.u32 %v2534, 7
      %v2536 = vsub.s32 %v2533, %v2535
      %v2537 = vrot.slane %v2178, %v2536
      %v2539 = vunpack.c.l.s4 1983009808
      %v2540 = vunpack.c.0.s8 %v2539
      %v2541 = vlaneseq
      %v2542 = vshrl.u32 %v2541, 7
      %v2543 = vsub.s32 %v2540, %v2542
      %v2544 = vrot.slane %v2530, %v2543
      %v2545 = vcombine.high %v2537, %v2537
      %v2546 = vcombine.high %v2544, %v2544
      %v2547 = vcombine.high %v2179, %v2179
      %v2549 = vunpack.c.l.s4 1983009808
      %v2550 = vunpack.c.0.s8 %v2549
      %v2551 = vlaneseq
      %v2552 = vshrl.u32 %v2551, 7
      %v2553 = vsub.s32 %v2550, %v2552
      %v2554 = vrot.slane %v2179, %v2553
      %v2556 = vunpack.c.l.s4 1983009808
      %v2557 = vunpack.c.0.s8 %v2556
      %v2558 = vlaneseq
      %v2559 = vshrl.u32 %v2558, 7
      %v2560 = vsub.s32 %v2557, %v2559
      %v2561 = vrot.slane %v2547, %v2560
      %v2562 = vcombine.high %v2554, %v2554
      %v2563 = vcombine.high %v2561, %v2561
      %v2564 = vcombine.high %v2180, %v2180
      %v2566 = vunpack.c.l.s4 1983009808
      %v2567 = vunpack.c.0.s8 %v2566
      %v2568 = vlaneseq
      %v2569 = vshrl.u32 %v2568, 7
      %v2570 = vsub.s32 %v2567, %v2569
      %v2571 = vrot.slane %v2180, %v2570
      %v2573 = vunpack.c.l.s4 1983009808
      %v2574 = vunpack.c.0.s8 %v2573
      %v2575 = vlaneseq
      %v2576 = vshrl.u32 %v2575, 7
      %v2577 = vsub.s32 %v2574, %v2576
      %v2578 = vrot.slane %v2564, %v2577
      %v2579 = vcombine.high %v2571, %v2571
      %v2580 = vcombine.high %v2578, %v2578
      %v2581 = vcombine.high %v2181, %v2181
      %v2583 = vunpack.c.l.s4 1983009808
      %v2584 = vunpack.c.0.s8 %v2583
      %v2585 = vlaneseq
      %v2586 = vshrl.u32 %v2585, 7
      %v2587 = vsub.s32 %v2584, %v2586
      %v2588 = vrot.slane %v2181, %v2587
      %v2590 = vunpack.c.l.s4 1983009808
      %v2591 = vunpack.c.0.s8 %v2590
      %v2592 = vlaneseq
      %v2593 = vshrl.u32 %v2592, 7
      %v2594 = vsub.s32 %v2591, %v2593
      %v2595 = vrot.slane %v2581, %v2594
      %v2596 = vcombine.high %v2588, %v2588
      %v2597 = vcombine.high %v2595, %v2595
      %v2598 = vcombine.high %v2182, %v2182
      %v2600 = vunpack.c.l.s4 1983009808
      %v2601 = vunpack.c.0.s8 %v2600
      %v2602 = vlaneseq
      %v2603 = vshrl.u32 %v2602, 7
      %v2604 = vsub.s32 %v2601, %v2603
      %v2605 = vrot.slane %v2182, %v2604
      %v2607 = vunpack.c.l.s4 1983009808
      %v2608 = vunpack.c.0.s8 %v2607
      %v2609 = vlaneseq
      %v2610 = vshrl.u32 %v2609, 7
      %v2611 = vsub.s32 %v2608, %v2610
      %v2612 = vrot.slane %v2598, %v2611
      %v2613 = vcombine.high %v2605, %v2605
      %v2614 = vcombine.high %v2612, %v2612
      %v2615 = vcombine.high %v2183, %v2183
      %v2617 = vunpack.c.l.s4 1983009808
      %v2618 = vunpack.c.0.s8 %v2617
      %v2619 = vlaneseq
      %v2620 = vshrl.u32 %v2619, 7
      %v2621 = vsub.s32 %v2618, %v2620
      %v2622 = vrot.slane %v2183, %v2621
      %v2624 = vunpack.c.l.s4 1983009808
      %v2625 = vunpack.c.0.s8 %v2624
      %v2626 = vlaneseq
      %v2627 = vshrl.u32 %v2626, 7
      %v2628 = vsub.s32 %v2625, %v2627
      %v2629 = vrot.slane %v2615, %v2628
      %v2630 = vcombine.high %v2622, %v2622
      %v2631 = vcombine.high %v2629, %v2629
      %v2632 = vcombine.high %v2184, %v2184
      %v2634 = vunpack.c.l.s4 1983009808
      %v2635 = vunpack.c.0.s8 %v2634
      %v2636 = vlaneseq
      %v2637 = vshrl.u32 %v2636, 7
      %v2638 = vsub.s32 %v2635, %v2637
      %v2639 = vrot.slane %v2184, %v2638
      %v2641 = vunpack.c.l.s4 1983009808
      %v2642 = vunpack.c.0.s8 %v2641
      %v2643 = vlaneseq
      %v2644 = vshrl.u32 %v2643, 7
      %v2645 = vsub.s32 %v2642, %v2644
      %v2646 = vrot.slane %v2632, %v2645
      %v2647 = vcombine.high %v2639, %v2639
      %v2648 = vcombine.high %v2646, %v2646
      %v2649 = vcombine.high %v2185, %v2185
      %v2651 = vunpack.c.l.s4 1983009808
      %v2652 = vunpack.c.0.s8 %v2651
      %v2653 = vlaneseq
      %v2654 = vshrl.u32 %v2653, 7
      %v2655 = vsub.s32 %v2652, %v2654
      %v2656 = vrot.slane %v2185, %v2655
      %v2658 = vunpack.c.l.s4 1983009808
      %v2659 = vunpack.c.0.s8 %v2658
      %v2660 = vlaneseq
      %v2661 = vshrl.u32 %v2660, 7
      %v2662 = vsub.s32 %v2659, %v2661
      %v2663 = vrot.slane %v2649, %v2662
      %v2664 = vcombine.high %v2656, %v2656
      %v2665 = vcombine.high %v2663, %v2663
      %v2666 = vcombine.high %v2186, %v2186
      %v2668 = vunpack.c.l.s4 1983009808
      %v2669 = vunpack.c.0.s8 %v2668
      %v2670 = vlaneseq
      %v2671 = vshrl.u32 %v2670, 7
      %v2672 = vsub.s32 %v2669, %v2671
      %v2673 = vrot.slane %v2186, %v2672
      %v2675 = vunpack.c.l.s4 1983009808
      %v2676 = vunpack.c.0.s8 %v2675
      %v2677 = vlaneseq
      %v2678 = vshrl.u32 %v2677, 7
      %v2679 = vsub.s32 %v2676, %v2678
      %v2680 = vrot.slane %v2666, %v2679
      %v2681 = vcombine.high %v2673, %v2673
      %v2682 = vcombine.high %v2680, %v2680
      %v2683 = vcombine.high %v2187, %v2187
      %v2685 = vunpack.c.l.s4 1983009808
      %v2686 = vunpack.c.0.s8 %v2685
      %v2687 = vlaneseq
      %v2688 = vshrl.u32 %v2687, 7
      %v2689 = vsub.s32 %v2686, %v2688
      %v2690 = vrot.slane %v2187, %v2689
      %v2692 = vunpack.c.l.s4 1983009808
      %v2693 = vunpack.c.0.s8 %v2692
      %v2694 = vlaneseq
      %v2695 = vshrl.u32 %v2694, 7
      %v2696 = vsub.s32 %v2693, %v2695
      %v2697 = vrot.slane %v2683, %v2696
      %v2698 = vcombine.high %v2690, %v2690
      %v2699 = vcombine.high %v2697, %v2697
      %v2700 = vcombine.high %v2188, %v2188
      %v2702 = vunpack.c.l.s4 1983009808
      %v2703 = vunpack.c.0.s8 %v2702
      %v2704 = vlaneseq
      %v2705 = vshrl.u32 %v2704, 7
      %v2706 = vsub.s32 %v2703, %v2705
      %v2707 = vrot.slane %v2188, %v2706
      %v2709 = vunpack.c.l.s4 1983009808
      %v2710 = vunpack.c.0.s8 %v2709
      %v2711 = vlaneseq
      %v2712 = vshrl.u32 %v2711, 7
      %v2713 = vsub.s32 %v2710, %v2712
      %v2714 = vrot.slane %v2700, %v2713
      %v2715 = vcombine.high %v2707, %v2707
      %v2716 = vcombine.high %v2714, %v2714
      %v2717 = vcombine.high %v2189, %v2189
      %v2719 = vunpack.c.l.s4 1983009808
      %v2720 = vunpack.c.0.s8 %v2719
      %v2721 = vlaneseq
      %v2722 = vshrl.u32 %v2721, 7
      %v2723 = vsub.s32 %v2720, %v2722
      %v2724 = vrot.slane %v2189, %v2723
      %v2726 = vunpack.c.l.s4 1983009808
      %v2727 = vunpack.c.0.s8 %v2726
      %v2728 = vlaneseq
      %v2729 = vshrl.u32 %v2728, 7
      %v2730 = vsub.s32 %v2727, %v2729
      %v2731 = vrot.slane %v2717, %v2730
      %v2732 = vcombine.high %v2724, %v2724
      %v2733 = vcombine.high %v2731, %v2731
      %v2734 = vcombine.high %v2190, %v2190
      %v2736 = vunpack.c.l.s4 1983009808
      %v2737 = vunpack.c.0.s8 %v2736
      %v2738 = vlaneseq
      %v2739 = vshrl.u32 %v2738, 7
      %v2740 = vsub.s32 %v2737, %v2739
      %v2741 = vrot.slane %v2190, %v2740
      %v2743 = vunpack.c.l.s4 1983009808
      %v2744 = vunpack.c.0.s8 %v2743
      %v2745 = vlaneseq
      %v2746 = vshrl.u32 %v2745, 7
      %v2747 = vsub.s32 %v2744, %v2746
      %v2748 = vrot.slane %v2734, %v2747
      %v2749 = vcombine.high %v2741, %v2741
      %v2750 = vcombine.high %v2748, %v2748
      %v2751 = vcombine.high %v2191, %v2191
      %v2753 = vunpack.c.l.s4 1983009808
      %v2754 = vunpack.c.0.s8 %v2753
      %v2755 = vlaneseq
      %v2756 = vshrl.u32 %v2755, 7
      %v2757 = vsub.s32 %v2754, %v2756
      %v2758 = vrot.slane %v2191, %v2757
      %v2760 = vunpack.c.l.s4 1983009808
      %v2761 = vunpack.c.0.s8 %v2760
      %v2762 = vlaneseq
      %v2763 = vshrl.u32 %v2762, 7
      %v2764 = vsub.s32 %v2761, %v2763
      %v2765 = vrot.slane %v2751, %v2764
      %v2766 = vcombine.high %v2758, %v2758
      %v2767 = vcombine.high %v2765, %v2765
      %v2896 = vrot.slane %v2231, 7
      %v2897 = vrot.slane %v2896, 2
      %v2898 = vrot.slane %v2239, 7
      %v2899 = vrot.slane %v2898, 2
      %v2900 = vrot.slane %v2238, 7
      %v2901 = vrot.slane %v2900, 2
      %v2902 = vrot.slane %v2240, 7
      %v2903 = vrot.slane %v2902, 2
      %v2904 = vrot.slane %v2248, 7
      %v2905 = vrot.slane %v2904, 2
      %v2906 = vrot.slane %v2256, 7
      %v2907 = vrot.slane %v2906, 2
      %v2908 = vrot.slane %v2255, 7
      %v2909 = vrot.slane %v2908, 2
      %v2910 = vrot.slane %v2257, 7
      %v2911 = vrot.slane %v2910, 2
      %v2912 = vrot.slane %v2265, 7
      %v2913 = vrot.slane %v2912, 2
      %v2914 = vrot.slane %v2273, 7
      %v2915 = vrot.slane %v2914, 2
      %v2916 = vrot.slane %v2272, 7
      %v2917 = vrot.slane %v2916, 2
      %v2918 = vrot.slane %v2274, 7
      %v2919 = vrot.slane %v2918, 2
      %v2920 = vrot.slane %v2282, 7
      %v2921 = vrot.slane %v2920, 2
      %v2922 = vrot.slane %v2290, 7
      %v2923 = vrot.slane %v2922, 2
      %v2924 = vrot.slane %v2289, 7
      %v2925 = vrot.slane %v2924, 2
      %v2926 = vrot.slane %v2291, 7
      %v2927 = vrot.slane %v2926, 2
      %v2928 = vrot.slane %v2299, 7
      %v2929 = vrot.slane %v2928, 2
      %v2930 = vrot.slane %v2307, 7
      %v2931 = vrot.slane %v2930, 2
      %v2932 = vrot.slane %v2306, 7
      %v2933 = vrot.slane %v2932, 2
      %v2934 = vrot.slane %v2308, 7
      %v2935 = vrot.slane %v2934, 2
      %v2936 = vrot.slane %v2316, 7
      %v2937 = vrot.slane %v2936, 2
      %v2938 = vrot.slane %v2324, 7
      %v2939 = vrot.slane %v2938, 2
      %v2940 = vrot.slane %v2323, 7
      %v2941 = vrot.slane %v2940, 2
      %v2942 = vrot.slane %v2325, 7
      %v2943 = vrot.slane %v2942, 2
      %v2944 = vrot.slane %v2333, 7
      %v2945 = vrot.slane %v2944, 2
      %v2946 = vrot.slane %v2341, 7
      %v2947 = vrot.slane %v2946, 2
      %v2948 = vrot.slane %v2340, 7
      %v2949 = vrot.slane %v2948, 2
      %v2950 = vrot.slane %v2342, 7
      %v2951 = vrot.slane %v2950, 2
      %v2952 = vrot.slane %v2350, 7
      %v2953 = vrot.slane %v2952, 2
      %v2954 = vrot.slane %v2358, 7
      %v2955 = vrot.slane %v2954, 2
      %v2956 = vrot.slane %v2357, 7
      %v2957 = vrot.slane %v2956, 2
      %v2958 = vrot.slane %v2359, 7
      %v2959 = vrot.slane %v2958, 2
      %v2960 = vrot.slane %v2367, 7
      %v2961 = vrot.slane %v2960, 2
      %v2962 = vrot.slane %v2375, 7
      %v2963 = vrot.slane %v2962, 2
      %v2964 = vrot.slane %v2374, 7
      %v2965 = vrot.slane %v2964, 2
      %v2966 = vrot.slane %v2376, 7
      %v2967 = vrot.slane %v2966, 2
      %v2968 = vrot.slane %v2384, 7
      %v2969 = vrot.slane %v2968, 2
      %v2970 = vrot.slane %v2392, 7
      %v2971 = vrot.slane %v2970, 2
      %v2972 = vrot.slane %v2391, 7
      %v2973 = vrot.slane %v2972, 2
      %v2974 = vrot.slane %v2393, 7
      %v2975 = vrot.slane %v2974, 2
      %v2976 = vrot.slane %v2401, 7
      %v2977 = vrot.slane %v2976, 2
      %v2978 = vrot.slane %v2409, 7
      %v2979 = vrot.slane %v2978, 2
      %v2980 = vrot.slane %v2408, 7
      %v2981 = vrot.slane %v2980, 2
      %v2982 = vrot.slane %v2410, 7
      %v2983 = vrot.slane %v2982, 2
      %v2984 = vrot.slane %v2418, 7
      %v2985 = vrot.slane %v2984, 2
      %v2986 = vrot.slane %v2426, 7
      %v2987 = vrot.slane %v2986, 2
      %v2988 = vrot.slane %v2425, 7
      %v2989 = vrot.slane %v2988, 2
      %v2990 = vrot.slane %v2427, 7
      %v2991 = vrot.slane %v2990, 2
      %v2992 = vrot.slane %v2435, 7
      %v2993 = vrot.slane %v2992, 2
      %v2994 = vrot.slane %v2443, 7
      %v2995 = vrot.slane %v2994, 2
      %v2996 = vrot.slane %v2442, 7
      %v2997 = vrot.slane %v2996, 2
      %v2998 = vrot.slane %v2444, 7
      %v2999 = vrot.slane %v2998, 2
      %v3000 = vrot.slane %v2452, 7
      %v3001 = vrot.slane %v3000, 2
      %v3002 = vrot.slane %v2460, 7
      %v3003 = vrot.slane %v3002, 2
      %v3004 = vrot.slane %v2459, 7
      %v3005 = vrot.slane %v3004, 2
      %v3006 = vrot.slane %v2461, 7
      %v3007 = vrot.slane %v3006, 2
      %v3008 = vrot.slane %v2469, 7
      %v3009 = vrot.slane %v3008, 2
      %v3010 = vrot.slane %v2477, 7
      %v3011 = vrot.slane %v3010, 2
      %v3012 = vrot.slane %v2476, 7
      %v3013 = vrot.slane %v3012, 2
      %v3014 = vrot.slane %v2478, 7
      %v3015 = vrot.slane %v3014, 2
      %v3016 = vrot.slane %v2486, 7
      %v3017 = vrot.slane %v3016, 2
      %v3018 = vrot.slane %v2494, 7
      %v3019 = vrot.slane %v3018, 2
      %v3020 = vrot.slane %v2493, 7
      %v3021 = vrot.slane %v3020, 2
      %v3022 = vrot.slane %v2495, 7
      %v3023 = vrot.slane %v3022, 2
      %v3024 = vrot.slane %v2503, 7
      %v3025 = vrot.slane %v3024, 2
      %v3026 = vrot.slane %v2511, 7
      %v3027 = vrot.slane %v3026, 2
      %v3028 = vrot.slane %v2510, 7
      %v3029 = vrot.slane %v3028, 2
      %v3030 = vrot.slane %v2512, 7
      %v3031 = vrot.slane %v3030, 2
      %v3032 = vrot.slane %v2520, 7
      %v3033 = vrot.slane %v3032, 2
      %v3034 = vrot.slane %v2528, 7
      %v3035 = vrot.slane %v3034, 2
      %v3036 = vrot.slane %v2527, 7
      %v3037 = vrot.slane %v3036, 2
      %v3038 = vrot.slane %v2529, 7
      %v3039 = vrot.slane %v3038, 2
      %v3040 = vrot.slane %v2537, 7
      %v3041 = vrot.slane %v3040, 2
      %v3042 = vrot.slane %v2545, 7
      %v3043 = vrot.slane %v3042, 2
      %v3044 = vrot.slane %v2544, 7
      %v3045 = vrot.slane %v3044, 2
      %v3046 = vrot.slane %v2546, 7
      %v3047 = vrot.slane %v3046, 2
      %v3048 = vrot.slane %v2554, 7
      %v3049 = vrot.slane %v3048, 2
      %v3050 = vrot.slane %v2562, 7
      %v3051 = vrot.slane %v3050, 2
      %v3052 = vrot.slane %v2561, 7
      %v3053 = vrot.slane %v3052, 2
      %v3054 = vrot.slane %v2563, 7
      %v3055 = vrot.slane %v3054, 2
      %v3056 = vrot.slane %v2571, 7
      %v3057 = vrot.slane %v3056, 2
      %v3058 = vrot.slane %v2579, 7
      %v3059 = vrot.slane %v3058, 2
      %v3060 = vrot.slane %v2578, 7
      %v3061 = vrot.slane %v3060, 2
      %v3062 = vrot.slane %v2580, 7
      %v3063 = vrot.slane %v3062, 2
      %v3064 = vrot.slane %v2588, 7
      %v3065 = vrot.slane %v3064, 2
      %v3066 = vrot.slane %v2596, 7
      %v3067 = vrot.slane %v3066, 2
      %v3068 = vrot.slane %v2595, 7
      %v3069 = vrot.slane %v3068, 2
      %v3070 = vrot.slane %v2597, 7
      %v3071 = vrot.slane %v3070, 2
      %v3072 = vrot.slane %v2605, 7
      %v3073 = vrot.slane %v3072, 2
      %v3074 = vrot.slane %v2613, 7
      %v3075 = vrot.slane %v3074, 2
      %v3076 = vrot.slane %v2612, 7
      %v3077 = vrot.slane %v3076, 2
      %v3078 = vrot.slane %v2614, 7
      %v3079 = vrot.slane %v3078, 2
      %v3080 = vrot.slane %v2622, 7
      %v3081 = vrot.slane %v3080, 2
      %v3082 = vrot.slane %v2630, 7
      %v3083 = vrot.slane %v3082, 2
      %v3084 = vrot.slane %v2629, 7
      %v3085 = vrot.slane %v3084, 2
      %v3086 = vrot.slane %v2631, 7
      %v3087 = vrot.slane %v3086, 2
      %v3088 = vrot.slane %v2639, 7
      %v3089 = vrot.slane %v3088, 2
      %v3090 = vrot.slane %v2647, 7
      %v3091 = vrot.slane %v3090, 2
      %v3092 = vrot.slane %v2646, 7
      %v3093 = vrot.slane %v3092, 2
      %v3094 = vrot.slane %v2648, 7
      %v3095 = vrot.slane %v3094, 2
      %v3096 = vrot.slane %v2656, 7
      %v3097 = vrot.slane %v3096, 2
      %v3098 = vrot.slane %v2664, 7
      %v3099 = vrot.slane %v3098, 2
      %v3100 = vrot.slane %v2663, 7
      %v3101 = vrot.slane %v3100, 2
      %v3102 = vrot.slane %v2665, 7
      %v3103 = vrot.slane %v3102, 2
      %v3104 = vrot.slane %v2673, 7
      %v3105 = vrot.slane %v3104, 2
      %v3106 = vrot.slane %v2681, 7
      %v3107 = vrot.slane %v3106, 2
      %v3108 = vrot.slane %v2680, 7
      %v3109 = vrot.slane %v3108, 2
      %v3110 = vrot.slane %v2682, 7
      %v3111 = vrot.slane %v3110, 2
      %v3112 = vrot.slane %v2690, 7
      %v3113 = vrot.slane %v3112, 2
      %v3114 = vrot.slane %v2698, 7
      %v3115 = vrot.slane %v3114, 2
      %v3116 = vrot.slane %v2697, 7
      %v3117 = vrot.slane %v3116, 2
      %v3118 = vrot.slane %v2699, 7
      %v3119 = vrot.slane %v3118, 2
      %v3120 = vrot.slane %v2707, 7
      %v3121 = vrot.slane %v3120, 2
      %v3122 = vrot.slane %v2715, 7
      %v3123 = vrot.slane %v3122, 2
      %v3124 = vrot.slane %v2714, 7
      %v3125 = vrot.slane %v3124, 2
      %v3126 = vrot.slane %v2716, 7
      %v3127 = vrot.slane %v3126, 2
      %v3128 = vrot.slane %v2724, 7
      %v3129 = vrot.slane %v3128, 2
      %v3130 = vrot.slane %v2732, 7
      %v3131 = vrot.slane %v3130, 2
      %v3132 = vrot.slane %v2731, 7
      %v3133 = vrot.slane %v3132, 2
      %v3134 = vrot.slane %v2733, 7
      %v3135 = vrot.slane %v3134, 2
      %v3136 = vrot.slane %v2741, 7
      %v3137 = vrot.slane %v3136, 2
      %v3138 = vrot.slane %v2749, 7
      %v3139 = vrot.slane %v3138, 2
      %v3140 = vrot.slane %v2748, 7
      %v3141 = vrot.slane %v3140, 2
      %v3142 = vrot.slane %v2750, 7
      %v3143 = vrot.slane %v3142, 2
      %v3144 = vrot.slane %v2758, 7
      %v3145 = vrot.slane %v3144, 2
      %v3146 = vrot.slane %v2766, 7
      %v3147 = vrot.slane %v3146, 2
      %v3148 = vrot.slane %v2765, 7
      %v3149 = vrot.slane %v3148, 2
      %v3150 = vrot.slane %v2767, 7
      %v3151 = vrot.slane %v3150, 2
      %v3280 = vmax.f32 %v2231, %v2897
      %v3281 = vmax.f32 %v2239, %v2899
      %v3282 = vmax.f32 %v2238, %v2901
      %v3283 = vmax.f32 %v2240, %v2903
      %v3284 = vmax.f32 %v2248, %v2905
      %v3285 = vmax.f32 %v2256, %v2907
      %v3286 = vmax.f32 %v2255, %v2909
      %v3287 = vmax.f32 %v2257, %v2911
      %v3288 = vmax.f32 %v2265, %v2913
      %v3289 = vmax.f32 %v2273, %v2915
      %v3290 = vmax.f32 %v2272, %v2917
      %v3291 = vmax.f32 %v2274, %v2919
      %v3292 = vmax.f32 %v2282, %v2921
      %v3293 = vmax.f32 %v2290, %v2923
      %v3294 = vmax.f32 %v2289, %v2925
      %v3295 = vmax.f32 %v2291, %v2927
      %v3296 = vmax.f32 %v2299, %v2929
      %v3297 = vmax.f32 %v2307, %v2931
      %v3298 = vmax.f32 %v2306, %v2933
      %v3299 = vmax.f32 %v2308, %v2935
      %v3300 = vmax.f32 %v2316, %v2937
      %v3301 = vmax.f32 %v2324, %v2939
      %v3302 = vmax.f32 %v2323, %v2941
      %v3303 = vmax.f32 %v2325, %v2943
      %v3304 = vmax.f32 %v2333, %v2945
      %v3305 = vmax.f32 %v2341, %v2947
      %v3306 = vmax.f32 %v2340, %v2949
      %v3307 = vmax.f32 %v2342, %v2951
      %v3308 = vmax.f32 %v2350, %v2953
      %v3309 = vmax.f32 %v2358, %v2955
      %v3310 = vmax.f32 %v2357, %v2957
      %v3311 = vmax.f32 %v2359, %v2959
      %v3312 = vmax.f32 %v2367, %v2961
      %v3313 = vmax.f32 %v2375, %v2963
      %v3314 = vmax.f32 %v2374, %v2965
      %v3315 = vmax.f32 %v2376, %v2967
      %v3316 = vmax.f32 %v2384, %v2969
      %v3317 = vmax.f32 %v2392, %v2971
      %v3318 = vmax.f32 %v2391, %v2973
      %v3319 = vmax.f32 %v2393, %v2975
      %v3320 = vmax.f32 %v2401, %v2977
      %v3321 = vmax.f32 %v2409, %v2979
      %v3322 = vmax.f32 %v2408, %v2981
      %v3323 = vmax.f32 %v2410, %v2983
      %v3324 = vmax.f32 %v2418, %v2985
      %v3325 = vmax.f32 %v2426, %v2987
      %v3326 = vmax.f32 %v2425, %v2989
      %v3327 = vmax.f32 %v2427, %v2991
      %v3328 = vmax.f32 %v2435, %v2993
      %v3329 = vmax.f32 %v2443, %v2995
      %v3330 = vmax.f32 %v2442, %v2997
      %v3331 = vmax.f32 %v2444, %v2999
      %v3332 = vmax.f32 %v2452, %v3001
      %v3333 = vmax.f32 %v2460, %v3003
      %v3334 = vmax.f32 %v2459, %v3005
      %v3335 = vmax.f32 %v2461, %v3007
      %v3336 = vmax.f32 %v2469, %v3009
      %v3337 = vmax.f32 %v2477, %v3011
      %v3338 = vmax.f32 %v2476, %v3013
      %v3339 = vmax.f32 %v2478, %v3015
      %v3340 = vmax.f32 %v2486, %v3017
      %v3341 = vmax.f32 %v2494, %v3019
      %v3342 = vmax.f32 %v2493, %v3021
      %v3343 = vmax.f32 %v2495, %v3023
      %v3344 = vmax.f32 %v2503, %v3025
      %v3345 = vmax.f32 %v2511, %v3027
      %v3346 = vmax.f32 %v2510, %v3029
      %v3347 = vmax.f32 %v2512, %v3031
      %v3348 = vmax.f32 %v2520, %v3033
      %v3349 = vmax.f32 %v2528, %v3035
      %v3350 = vmax.f32 %v2527, %v3037
      %v3351 = vmax.f32 %v2529, %v3039
      %v3352 = vmax.f32 %v2537, %v3041
      %v3353 = vmax.f32 %v2545, %v3043
      %v3354 = vmax.f32 %v2544, %v3045
      %v3355 = vmax.f32 %v2546, %v3047
      %v3356 = vmax.f32 %v2554, %v3049
      %v3357 = vmax.f32 %v2562, %v3051
      %v3358 = vmax.f32 %v2561, %v3053
      %v3359 = vmax.f32 %v2563, %v3055
      %v3360 = vmax.f32 %v2571, %v3057
      %v3361 = vmax.f32 %v2579, %v3059
      %v3362 = vmax.f32 %v2578, %v3061
      %v3363 = vmax.f32 %v2580, %v3063
      %v3364 = vmax.f32 %v2588, %v3065
      %v3365 = vmax.f32 %v2596, %v3067
      %v3366 = vmax.f32 %v2595, %v3069
      %v3367 = vmax.f32 %v2597, %v3071
      %v3368 = vmax.f32 %v2605, %v3073
      %v3369 = vmax.f32 %v2613, %v3075
      %v3370 = vmax.f32 %v2612, %v3077
      %v3371 = vmax.f32 %v2614, %v3079
      %v3372 = vmax.f32 %v2622, %v3081
      %v3373 = vmax.f32 %v2630, %v3083
      %v3374 = vmax.f32 %v2629, %v3085
      %v3375 = vmax.f32 %v2631, %v3087
      %v3376 = vmax.f32 %v2639, %v3089
      %v3377 = vmax.f32 %v2647, %v3091
      %v3378 = vmax.f32 %v2646, %v3093
      %v3379 = vmax.f32 %v2648, %v3095
      %v3380 = vmax.f32 %v2656, %v3097
      %v3381 = vmax.f32 %v2664, %v3099
      %v3382 = vmax.f32 %v2663, %v3101
      %v3383 = vmax.f32 %v2665, %v3103
      %v3384 = vmax.f32 %v2673, %v3105
      %v3385 = vmax.f32 %v2681, %v3107
      %v3386 = vmax.f32 %v2680, %v3109
      %v3387 = vmax.f32 %v2682, %v3111
      %v3388 = vmax.f32 %v2690, %v3113
      %v3389 = vmax.f32 %v2698, %v3115
      %v3390 = vmax.f32 %v2697, %v3117
      %v3391 = vmax.f32 %v2699, %v3119
      %v3392 = vmax.f32 %v2707, %v3121
      %v3393 = vmax.f32 %v2715, %v3123
      %v3394 = vmax.f32 %v2714, %v3125
      %v3395 = vmax.f32 %v2716, %v3127
      %v3396 = vmax.f32 %v2724, %v3129
      %v3397 = vmax.f32 %v2732, %v3131
      %v3398 = vmax.f32 %v2731, %v3133
      %v3399 = vmax.f32 %v2733, %v3135
      %v3400 = vmax.f32 %v2741, %v3137
      %v3401 = vmax.f32 %v2749, %v3139
      %v3402 = vmax.f32 %v2748, %v3141
      %v3403 = vmax.f32 %v2750, %v3143
      %v3404 = vmax.f32 %v2758, %v3145
      %v3405 = vmax.f32 %v2766, %v3147
      %v3406 = vmax.f32 %v2765, %v3149
      %v3407 = vmax.f32 %v2767, %v3151
      %v3408 = vmax.f32 %v3280, %v3288
      %v3409 = vmax.f32 %v3281, %v3289
      %v3410 = vmax.f32 %v3282, %v3290
      %v3411 = vmax.f32 %v3283, %v3291
      %v3412 = vmax.f32 %v3284, %v3292
      %v3413 = vmax.f32 %v3285, %v3293
      %v3414 = vmax.f32 %v3286, %v3294
      %v3415 = vmax.f32 %v3287, %v3295
      %v3416 = vmax.f32 %v3296, %v3304
      %v3417 = vmax.f32 %v3297, %v3305
      %v3418 = vmax.f32 %v3298, %v3306
      %v3419 = vmax.f32 %v3299, %v3307
      %v3420 = vmax.f32 %v3300, %v3308
      %v3421 = vmax.f32 %v3301, %v3309
      %v3422 = vmax.f32 %v3302, %v3310
      %v3423 = vmax.f32 %v3303, %v3311
      %v3424 = vmax.f32 %v3312, %v3320
      %v3425 = vmax.f32 %v3313, %v3321
      %v3426 = vmax.f32 %v3314, %v3322
      %v3427 = vmax.f32 %v3315, %v3323
      %v3428 = vmax.f32 %v3316, %v3324
      %v3429 = vmax.f32 %v3317, %v3325
      %v3430 = vmax.f32 %v3318, %v3326
      %v3431 = vmax.f32 %v3319, %v3327
      %v3432 = vmax.f32 %v3328, %v3336
      %v3433 = vmax.f32 %v3329, %v3337
      %v3434 = vmax.f32 %v3330, %v3338
      %v3435 = vmax.f32 %v3331, %v3339
      %v3436 = vmax.f32 %v3332, %v3340
      %v3437 = vmax.f32 %v3333, %v3341
      %v3438 = vmax.f32 %v3334, %v3342
      %v3439 = vmax.f32 %v3335, %v3343
      %v3440 = vmax.f32 %v3344, %v3352
      %v3441 = vmax.f32 %v3345, %v3353
      %v3442 = vmax.f32 %v3346, %v3354
      %v3443 = vmax.f32 %v3347, %v3355
      %v3444 = vmax.f32 %v3348, %v3356
      %v3445 = vmax.f32 %v3349, %v3357
      %v3446 = vmax.f32 %v3350, %v3358
      %v3447 = vmax.f32 %v3351, %v3359
      %v3448 = vmax.f32 %v3360, %v3368
      %v3449 = vmax.f32 %v3361, %v3369
      %v3450 = vmax.f32 %v3362, %v3370
      %v3451 = vmax.f32 %v3363, %v3371
      %v3452 = vmax.f32 %v3364, %v3372
      %v3453 = vmax.f32 %v3365, %v3373
      %v3454 = vmax.f32 %v3366, %v3374
      %v3455 = vmax.f32 %v3367, %v3375
      %v3456 = vmax.f32 %v3376, %v3384
      %v3457 = vmax.f32 %v3377, %v3385
      %v3458 = vmax.f32 %v3378, %v3386
      %v3459 = vmax.f32 %v3379, %v3387
      %v3460 = vmax.f32 %v3380, %v3388
      %v3461 = vmax.f32 %v3381, %v3389
      %v3462 = vmax.f32 %v3382, %v3390
      %v3463 = vmax.f32 %v3383, %v3391
      %v3464 = vmax.f32 %v3392, %v3400
      %v3465 = vmax.f32 %v3393, %v3401
      %v3466 = vmax.f32 %v3394, %v3402
      %v3467 = vmax.f32 %v3395, %v3403
      %v3468 = vmax.f32 %v3396, %v3404
      %v3469 = vmax.f32 %v3397, %v3405
      %v3470 = vmax.f32 %v3398, %v3406
      %v3471 = vmax.f32 %v3399, %v3407
      %v3536 = vlaneseq
      %v3537 = vshrl.u32 %v3536, 7
      %v3538 = vsub.s32 0, %v3537
      %v3539 = vrot.slane %v3408, %v3538
      %v3540 = vlaneseq
      %v3541 = vshrl.u32 %v3540, 7
      %v3542 = vsub.s32 0, %v3541
      %v3543 = vrot.slane %v3409, %v3542
      %v3544 = vlaneseq
      %v3545 = vshrl.u32 %v3544, 7
      %v3546 = vsub.s32 0, %v3545
      %v3547 = vrot.slane %v3410, %v3546
      %v3548 = vlaneseq
      %v3549 = vshrl.u32 %v3548, 7
      %v3550 = vsub.s32 0, %v3549
      %v3551 = vrot.slane %v3411, %v3550
      %v3552 = vlaneseq
      %v3553 = vshrl.u32 %v3552, 7
      %v3554 = vsub.s32 0, %v3553
      %v3555 = vrot.slane %v3412, %v3554
      %v3556 = vlaneseq
      %v3557 = vshrl.u32 %v3556, 7
      %v3558 = vsub.s32 0, %v3557
      %v3559 = vrot.slane %v3413, %v3558
      %v3560 = vlaneseq
      %v3561 = vshrl.u32 %v3560, 7
      %v3562 = vsub.s32 0, %v3561
      %v3563 = vrot.slane %v3414, %v3562
      %v3564 = vlaneseq
      %v3565 = vshrl.u32 %v3564, 7
      %v3566 = vsub.s32 0, %v3565
      %v3567 = vrot.slane %v3415, %v3566
      %v3568 = vlaneseq
      %v3569 = vshrl.u32 %v3568, 7
      %v3570 = vsub.s32 0, %v3569
      %v3571 = vrot.slane %v3416, %v3570
      %v3572 = vlaneseq
      %v3573 = vshrl.u32 %v3572, 7
      %v3574 = vsub.s32 0, %v3573
      %v3575 = vrot.slane %v3417, %v3574
      %v3576 = vlaneseq
      %v3577 = vshrl.u32 %v3576, 7
      %v3578 = vsub.s32 0, %v3577
      %v3579 = vrot.slane %v3418, %v3578
      %v3580 = vlaneseq
      %v3581 = vshrl.u32 %v3580, 7
      %v3582 = vsub.s32 0, %v3581
      %v3583 = vrot.slane %v3419, %v3582
      %v3584 = vlaneseq
      %v3585 = vshrl.u32 %v3584, 7
      %v3586 = vsub.s32 0, %v3585
      %v3587 = vrot.slane %v3420, %v3586
      %v3588 = vlaneseq
      %v3589 = vshrl.u32 %v3588, 7
      %v3590 = vsub.s32 0, %v3589
      %v3591 = vrot.slane %v3421, %v3590
      %v3592 = vlaneseq
      %v3593 = vshrl.u32 %v3592, 7
      %v3594 = vsub.s32 0, %v3593
      %v3595 = vrot.slane %v3422, %v3594
      %v3596 = vlaneseq
      %v3597 = vshrl.u32 %v3596, 7
      %v3598 = vsub.s32 0, %v3597
      %v3599 = vrot.slane %v3423, %v3598
      %v3600 = vlaneseq
      %v3601 = vshrl.u32 %v3600, 7
      %v3602 = vsub.s32 0, %v3601
      %v3603 = vrot.slane %v3424, %v3602
      %v3604 = vlaneseq
      %v3605 = vshrl.u32 %v3604, 7
      %v3606 = vsub.s32 0, %v3605
      %v3607 = vrot.slane %v3425, %v3606
      %v3608 = vlaneseq
      %v3609 = vshrl.u32 %v3608, 7
      %v3610 = vsub.s32 0, %v3609
      %v3611 = vrot.slane %v3426, %v3610
      %v3612 = vlaneseq
      %v3613 = vshrl.u32 %v3612, 7
      %v3614 = vsub.s32 0, %v3613
      %v3615 = vrot.slane %v3427, %v3614
      %v3616 = vlaneseq
      %v3617 = vshrl.u32 %v3616, 7
      %v3618 = vsub.s32 0, %v3617
      %v3619 = vrot.slane %v3428, %v3618
      %v3620 = vlaneseq
      %v3621 = vshrl.u32 %v3620, 7
      %v3622 = vsub.s32 0, %v3621
      %v3623 = vrot.slane %v3429, %v3622
      %v3624 = vlaneseq
      %v3625 = vshrl.u32 %v3624, 7
      %v3626 = vsub.s32 0, %v3625
      %v3627 = vrot.slane %v3430, %v3626
      %v3628 = vlaneseq
      %v3629 = vshrl.u32 %v3628, 7
      %v3630 = vsub.s32 0, %v3629
      %v3631 = vrot.slane %v3431, %v3630
      %v3632 = vlaneseq
      %v3633 = vshrl.u32 %v3632, 7
      %v3634 = vsub.s32 0, %v3633
      %v3635 = vrot.slane %v3432, %v3634
      %v3636 = vlaneseq
      %v3637 = vshrl.u32 %v3636, 7
      %v3638 = vsub.s32 0, %v3637
      %v3639 = vrot.slane %v3433, %v3638
      %v3640 = vlaneseq
      %v3641 = vshrl.u32 %v3640, 7
      %v3642 = vsub.s32 0, %v3641
      %v3643 = vrot.slane %v3434, %v3642
      %v3644 = vlaneseq
      %v3645 = vshrl.u32 %v3644, 7
      %v3646 = vsub.s32 0, %v3645
      %v3647 = vrot.slane %v3435, %v3646
      %v3648 = vlaneseq
      %v3649 = vshrl.u32 %v3648, 7
      %v3650 = vsub.s32 0, %v3649
      %v3651 = vrot.slane %v3436, %v3650
      %v3652 = vlaneseq
      %v3653 = vshrl.u32 %v3652, 7
      %v3654 = vsub.s32 0, %v3653
      %v3655 = vrot.slane %v3437, %v3654
      %v3656 = vlaneseq
      %v3657 = vshrl.u32 %v3656, 7
      %v3658 = vsub.s32 0, %v3657
      %v3659 = vrot.slane %v3438, %v3658
      %v3660 = vlaneseq
      %v3661 = vshrl.u32 %v3660, 7
      %v3662 = vsub.s32 0, %v3661
      %v3663 = vrot.slane %v3439, %v3662
      %v3664 = vlaneseq
      %v3665 = vshrl.u32 %v3664, 7
      %v3666 = vsub.s32 0, %v3665
      %v3667 = vrot.slane %v3440, %v3666
      %v3668 = vlaneseq
      %v3669 = vshrl.u32 %v3668, 7
      %v3670 = vsub.s32 0, %v3669
      %v3671 = vrot.slane %v3441, %v3670
      %v3672 = vlaneseq
      %v3673 = vshrl.u32 %v3672, 7
      %v3674 = vsub.s32 0, %v3673
      %v3675 = vrot.slane %v3442, %v3674
      %v3676 = vlaneseq
      %v3677 = vshrl.u32 %v3676, 7
      %v3678 = vsub.s32 0, %v3677
      %v3679 = vrot.slane %v3443, %v3678
      %v3680 = vlaneseq
      %v3681 = vshrl.u32 %v3680, 7
      %v3682 = vsub.s32 0, %v3681
      %v3683 = vrot.slane %v3444, %v3682
      %v3684 = vlaneseq
      %v3685 = vshrl.u32 %v3684, 7
      %v3686 = vsub.s32 0, %v3685
      %v3687 = vrot.slane %v3445, %v3686
      %v3688 = vlaneseq
      %v3689 = vshrl.u32 %v3688, 7
      %v3690 = vsub.s32 0, %v3689
      %v3691 = vrot.slane %v3446, %v3690
      %v3692 = vlaneseq
      %v3693 = vshrl.u32 %v3692, 7
      %v3694 = vsub.s32 0, %v3693
      %v3695 = vrot.slane %v3447, %v3694
      %v3696 = vlaneseq
      %v3697 = vshrl.u32 %v3696, 7
      %v3698 = vsub.s32 0, %v3697
      %v3699 = vrot.slane %v3448, %v3698
      %v3700 = vlaneseq
      %v3701 = vshrl.u32 %v3700, 7
      %v3702 = vsub.s32 0, %v3701
      %v3703 = vrot.slane %v3449, %v3702
      %v3704 = vlaneseq
      %v3705 = vshrl.u32 %v3704, 7
      %v3706 = vsub.s32 0, %v3705
      %v3707 = vrot.slane %v3450, %v3706
      %v3708 = vlaneseq
      %v3709 = vshrl.u32 %v3708, 7
      %v3710 = vsub.s32 0, %v3709
      %v3711 = vrot.slane %v3451, %v3710
      %v3712 = vlaneseq
      %v3713 = vshrl.u32 %v3712, 7
      %v3714 = vsub.s32 0, %v3713
      %v3715 = vrot.slane %v3452, %v3714
      %v3716 = vlaneseq
      %v3717 = vshrl.u32 %v3716, 7
      %v3718 = vsub.s32 0, %v3717
      %v3719 = vrot.slane %v3453, %v3718
      %v3720 = vlaneseq
      %v3721 = vshrl.u32 %v3720, 7
      %v3722 = vsub.s32 0, %v3721
      %v3723 = vrot.slane %v3454, %v3722
      %v3724 = vlaneseq
      %v3725 = vshrl.u32 %v3724, 7
      %v3726 = vsub.s32 0, %v3725
      %v3727 = vrot.slane %v3455, %v3726
      %v3728 = vlaneseq
      %v3729 = vshrl.u32 %v3728, 7
      %v3730 = vsub.s32 0, %v3729
      %v3731 = vrot.slane %v3456, %v3730
      %v3732 = vlaneseq
      %v3733 = vshrl.u32 %v3732, 7
      %v3734 = vsub.s32 0, %v3733
      %v3735 = vrot.slane %v3457, %v3734
      %v3736 = vlaneseq
      %v3737 = vshrl.u32 %v3736, 7
      %v3738 = vsub.s32 0, %v3737
      %v3739 = vrot.slane %v3458, %v3738
      %v3740 = vlaneseq
      %v3741 = vshrl.u32 %v3740, 7
      %v3742 = vsub.s32 0, %v3741
      %v3743 = vrot.slane %v3459, %v3742
      %v3744 = vlaneseq
      %v3745 = vshrl.u32 %v3744, 7
      %v3746 = vsub.s32 0, %v3745
      %v3747 = vrot.slane %v3460, %v3746
      %v3748 = vlaneseq
      %v3749 = vshrl.u32 %v3748, 7
      %v3750 = vsub.s32 0, %v3749
      %v3751 = vrot.slane %v3461, %v3750
      %v3752 = vlaneseq
      %v3753 = vshrl.u32 %v3752, 7
      %v3754 = vsub.s32 0, %v3753
      %v3755 = vrot.slane %v3462, %v3754
      %v3756 = vlaneseq
      %v3757 = vshrl.u32 %v3756, 7
      %v3758 = vsub.s32 0, %v3757
      %v3759 = vrot.slane %v3463, %v3758
      %v3760 = vlaneseq
      %v3761 = vshrl.u32 %v3760, 7
      %v3762 = vsub.s32 0, %v3761
      %v3763 = vrot.slane %v3464, %v3762
      %v3764 = vlaneseq
      %v3765 = vshrl.u32 %v3764, 7
      %v3766 = vsub.s32 0, %v3765
      %v3767 = vrot.slane %v3465, %v3766
      %v3768 = vlaneseq
      %v3769 = vshrl.u32 %v3768, 7
      %v3770 = vsub.s32 0, %v3769
      %v3771 = vrot.slane %v3466, %v3770
      %v3772 = vlaneseq
      %v3773 = vshrl.u32 %v3772, 7
      %v3774 = vsub.s32 0, %v3773
      %v3775 = vrot.slane %v3467, %v3774
      %v3776 = vlaneseq
      %v3777 = vshrl.u32 %v3776, 7
      %v3778 = vsub.s32 0, %v3777
      %v3779 = vrot.slane %v3468, %v3778
      %v3780 = vlaneseq
      %v3781 = vshrl.u32 %v3780, 7
      %v3782 = vsub.s32 0, %v3781
      %v3783 = vrot.slane %v3469, %v3782
      %v3784 = vlaneseq
      %v3785 = vshrl.u32 %v3784, 7
      %v3786 = vsub.s32 0, %v3785
      %v3787 = vrot.slane %v3470, %v3786
      %v3788 = vlaneseq
      %v3789 = vshrl.u32 %v3788, 7
      %v3790 = vsub.s32 0, %v3789
      %v3791 = vrot.slane %v3471, %v3790
      %vm3792 = vcmask 1041409
      %v3793 = vsel %vm3792, %v3543, %v3539
      %vm3794 = vcmask 1042434
      %v3795 = vsel %vm3794, %v3547, %v3793
      %vm3796 = vcmask 1043459
      %v3797 = vsel %vm3796, %v3551, %v3795
      %vm3798 = vcmask 1044484
      %v3799 = vsel %vm3798, %v3555, %v3797
      %vm3800 = vcmask 1045509
      %v3801 = vsel %vm3800, %v3559, %v3799
      %vm3802 = vcmask 1046534
      %v3803 = vsel %vm3802, %v3563, %v3801
      %vm3804 = vcmask 1047559
      %v3805 = vsel %vm3804, %v3567, %v3803
      %v3806 = vsel %vm3792, %v3575, %v3571
      %v3807 = vsel %vm3794, %v3579, %v3806
      %v3808 = vsel %vm3796, %v3583, %v3807
      %v3809 = vsel %vm3798, %v3587, %v3808
      %v3810 = vsel %vm3800, %v3591, %v3809
      %v3811 = vsel %vm3802, %v3595, %v3810
      %v3812 = vsel %vm3804, %v3599, %v3811
      %v3813 = vsel %vm3792, %v3607, %v3603
      %v3814 = vsel %vm3794, %v3611, %v3813
      %v3815 = vsel %vm3796, %v3615, %v3814
      %v3816 = vsel %vm3798, %v3619, %v3815
      %v3817 = vsel %vm3800, %v3623, %v3816
      %v3818 = vsel %vm3802, %v3627, %v3817
      %v3819 = vsel %vm3804, %v3631, %v3818
      %v3820 = vsel %vm3792, %v3639, %v3635
      %v3821 = vsel %vm3794, %v3643, %v3820
      %v3822 = vsel %vm3796, %v3647, %v3821
      %v3823 = vsel %vm3798, %v3651, %v3822
      %v3824 = vsel %vm3800, %v3655, %v3823
      %v3825 = vsel %vm3802, %v3659, %v3824
      %v3826 = vsel %vm3804, %v3663, %v3825
      %v3827 = vsel %vm3792, %v3671, %v3667
      %v3828 = vsel %vm3794, %v3675, %v3827
      %v3829 = vsel %vm3796, %v3679, %v3828
      %v3830 = vsel %vm3798, %v3683, %v3829
      %v3831 = vsel %vm3800, %v3687, %v3830
      %v3832 = vsel %vm3802, %v3691, %v3831
      %v3833 = vsel %vm3804, %v3695, %v3832
      %v3834 = vsel %vm3792, %v3703, %v3699
      %v3835 = vsel %vm3794, %v3707, %v3834
      %v3836 = vsel %vm3796, %v3711, %v3835
      %v3837 = vsel %vm3798, %v3715, %v3836
      %v3838 = vsel %vm3800, %v3719, %v3837
      %v3839 = vsel %vm3802, %v3723, %v3838
      %v3840 = vsel %vm3804, %v3727, %v3839
      %v3841 = vsel %vm3792, %v3735, %v3731
      %v3842 = vsel %vm3794, %v3739, %v3841
      %v3843 = vsel %vm3796, %v3743, %v3842
      %v3844 = vsel %vm3798, %v3747, %v3843
      %v3845 = vsel %vm3800, %v3751, %v3844
      %v3846 = vsel %vm3802, %v3755, %v3845
      %v3847 = vsel %vm3804, %v3759, %v3846
      %v3848 = vsel %vm3792, %v3767, %v3763
      %v3849 = vsel %vm3794, %v3771, %v3848
      %v3850 = vsel %vm3796, %v3775, %v3849
      %v3851 = vsel %vm3798, %v3779, %v3850
      %v3852 = vsel %vm3800, %v3783, %v3851
      %v3853 = vsel %vm3802, %v3787, %v3852
      %v3854 = vsel %vm3804, %v3791, %v3853
      %v3856 = vrot.slane 0.0, 7
      %v3857 = vrot.slane %v3805, 7
      %v3858 = vrot.slane %v3812, 7
      %v3859 = vrot.slane %v3819, 7
      %v3860 = vrot.slane %v3826, 7
      %v3861 = vrot.slane %v3833, 7
      %v3862 = vrot.slane %v3840, 7
      %v3863 = vrot.slane %v3847, 7
      %v3864 = vrot.slane %v3854, 7
      %vm3874 = vcmask 1040384
      %v3875 = vsel %vm3874, 0.0, %v3856
      %v3876 = vsel %vm3874, 0.0, %v3857
      %v3877 = vsel %vm3874, 0.0, %v3858
      %v3878 = vsel %vm3874, 0.0, %v3859
      %v3879 = vsel %vm3874, 0.0, %v3860
      %v3880 = vsel %vm3874, 0.0, %v3861
      %v3881 = vsel %vm3874, 0.0, %v3862
      %v3882 = vsel %vm3874, 0.0, %v3863
      %v3883 = vsel %vm3874, 0.0, %v3864
      %v3884 = vsel %vm3874, %v3856, 0.0
      %v3885 = vsel %vm3874, %v3857, 0.0
      %v3886 = vsel %vm3874, %v3858, 0.0
      %v3887 = vsel %vm3874, %v3859, 0.0
      %v3888 = vsel %vm3874, %v3860, 0.0
      %v3889 = vsel %vm3874, %v3861, 0.0
      %v3890 = vsel %vm3874, %v3862, 0.0
      %v3891 = vsel %vm3874, %v3863, 0.0
      %v3892 = vsel %vm3874, %v3864, 0.0
      %v3893 = vpack.c.bf16 %v3884, %v3875
      %v3894 = vpack.c.bf16 %v3885, %v3876
      %v3895 = vpack.c.bf16 %v3886, %v3877
      %v3896 = vpack.c.bf16 %v3887, %v3878
      %v3897 = vpack.c.bf16 %v3888, %v3879
      %v3898 = vpack.c.bf16 %v3889, %v3880
      %v3899 = vpack.c.bf16 %v3890, %v3881
      %v3900 = vpack.c.bf16 %v3891, %v3882
      %v3901 = vpack.c.bf16 %v3892, %v3883
      %v3910 = vunpack.c.l.b16 %v3893
      %v3911 = vunpack.c.h.b16 %v3893
      %v3912 = vunpack.c.l.b16 %v3894
      %v3913 = vunpack.c.h.b16 %v3894
      %v3914 = vunpack.c.l.b16 %v3895
      %v3915 = vunpack.c.h.b16 %v3895
      %v3916 = vunpack.c.l.b16 %v3896
      %v3917 = vunpack.c.h.b16 %v3896
      %v3918 = vunpack.c.l.b16 %v3897
      %v3919 = vunpack.c.h.b16 %v3897
      %v3920 = vunpack.c.l.b16 %v3898
      %v3921 = vunpack.c.h.b16 %v3898
      %v3922 = vunpack.c.l.b16 %v3899
      %v3923 = vunpack.c.h.b16 %v3899
      %v3924 = vunpack.c.l.b16 %v3900
      %v3925 = vunpack.c.h.b16 %v3900
      %v3926 = vpack.c.b16 %v3910, %v3910
      %v3927 = vpack.c.b16 %v3911, %v3911
      %v3928 = vpack.c.b16 %v3912, %v3912
      %v3929 = vpack.c.b16 %v3913, %v3913
      %v3930 = vpack.c.b16 %v3914, %v3914
      %v3931 = vpack.c.b16 %v3915, %v3915
      %v3932 = vpack.c.b16 %v3916, %v3916
      %v3933 = vpack.c.b16 %v3917, %v3917
      %v3934 = vpack.c.b16 %v3918, %v3918
      %v3935 = vpack.c.b16 %v3919, %v3919
      %v3936 = vpack.c.b16 %v3920, %v3920
      %v3937 = vpack.c.b16 %v3921, %v3921
      %v3938 = vpack.c.b16 %v3922, %v3922
      %v3939 = vpack.c.b16 %v3923, %v3923
      %v3940 = vpack.c.b16 %v3924, %v3924
      %v3941 = vpack.c.b16 %v3925, %v3925
      %vm3942 = vsmask.f32 3328
      %vm3943 = vsmask.f32 7440
      %vm3944 = vmor %vm3942, %vm3943
      %v3946 = vshrl.u32 %v3926, 16
      %v3948 = vrot.slane %v3946, 4
      %v3949 = vshll.u32 %v3926, 16
      %v3951 = vrot.slane %v3949, 5
      %v3952 = vor.u32 %v3948, %v3951
      %v3953 = vrot.slane %v3952, 4
      %v3955 = vshll.u32 %v3927, 16
      %v3957 = vrot.slane %v3955, 5
      %v3958 = vsel %vm3944, %v3953, %v3957
      %v3960 = vshrl.u32 %v3928, 16
      %v3962 = vrot.slane %v3960, 4
      %v3963 = vshll.u32 %v3928, 16
      %v3965 = vrot.slane %v3963, 5
      %v3966 = vor.u32 %v3962, %v3965
      %v3967 = vrot.slane %v3966, 4
      %v3969 = vshll.u32 %v3929, 16
      %v3971 = vrot.slane %v3969, 5
      %v3972 = vsel %vm3944, %v3967, %v3971
      %v3974 = vshrl.u32 %v3930, 16
      %v3976 = vrot.slane %v3974, 4
      %v3977 = vshll.u32 %v3930, 16
      %v3979 = vrot.slane %v3977, 5
      %v3980 = vor.u32 %v3976, %v3979
      %v3981 = vrot.slane %v3980, 4
      %v3983 = vshll.u32 %v3931, 16
      %v3985 = vrot.slane %v3983, 5
      %v3986 = vsel %vm3944, %v3981, %v3985
      %v3988 = vshrl.u32 %v3932, 16
      %v3990 = vrot.slane %v3988, 4
      %v3991 = vshll.u32 %v3932, 16
      %v3993 = vrot.slane %v3991, 5
      %v3994 = vor.u32 %v3990, %v3993
      %v3995 = vrot.slane %v3994, 4
      %v3997 = vshll.u32 %v3933, 16
      %v3999 = vrot.slane %v3997, 5
      %v4000 = vsel %vm3944, %v3995, %v3999
      %v4002 = vshrl.u32 %v3934, 16
      %v4004 = vrot.slane %v4002, 4
      %v4005 = vshll.u32 %v3934, 16
      %v4007 = vrot.slane %v4005, 5
      %v4008 = vor.u32 %v4004, %v4007
      %v4009 = vrot.slane %v4008, 4
      %v4011 = vshll.u32 %v3935, 16
      %v4013 = vrot.slane %v4011, 5
      %v4014 = vsel %vm3944, %v4009, %v4013
      %v4016 = vshrl.u32 %v3936, 16
      %v4018 = vrot.slane %v4016, 4
      %v4019 = vshll.u32 %v3936, 16
      %v4021 = vrot.slane %v4019, 5
      %v4022 = vor.u32 %v4018, %v4021
      %v4023 = vrot.slane %v4022, 4
      %v4025 = vshll.u32 %v3937, 16
      %v4027 = vrot.slane %v4025, 5
      %v4028 = vsel %vm3944, %v4023, %v4027
      %v4030 = vshrl.u32 %v3938, 16
      %v4032 = vrot.slane %v4030, 4
      %v4033 = vshll.u32 %v3938, 16
      %v4035 = vrot.slane %v4033, 5
      %v4036 = vor.u32 %v4032, %v4035
      %v4037 = vrot.slane %v4036, 4
      %v4039 = vshll.u32 %v3939, 16
      %v4041 = vrot.slane %v4039, 5
      %v4042 = vsel %vm3944, %v4037, %v4041
      %v4044 = vshrl.u32 %v3940, 16
      %v4046 = vrot.slane %v4044, 4
      %v4047 = vshll.u32 %v3940, 16
      %v4049 = vrot.slane %v4047, 5
      %v4050 = vor.u32 %v4046, %v4049
      %v4051 = vrot.slane %v4050, 4
      %v4053 = vshll.u32 %v3941, 16
      %v4055 = vrot.slane %v4053, 5
      %v4056 = vsel %vm3944, %v4051, %v4055
      %vm4057 = vcmask 1042432
      %vm4058 = vcmask 1046532
      %vm4059 = vmor %vm4057, %vm4058
      %v4060 = vrot.slane %v3926, 5
      %v4061 = vrot.slane %v4060, 4
      %v4062 = vrot.slane %v3927, 5
      %v4063 = vsel %vm4059, %v4061, %v4062
      %v4064 = vrot.slane %v3928, 5
      %v4065 = vrot.slane %v4064, 4
      %v4066 = vrot.slane %v3929, 5
      %v4067 = vsel %vm4059, %v4065, %v4066
      %v4068 = vrot.slane %v3930, 5
      %v4069 = vrot.slane %v4068, 4
      %v4070 = vrot.slane %v3931, 5
      %v4071 = vsel %vm4059, %v4069, %v4070
      %v4072 = vrot.slane %v3932, 5
      %v4073 = vrot.slane %v4072, 4
      %v4074 = vrot.slane %v3933, 5
      %v4075 = vsel %vm4059, %v4073, %v4074
      %v4076 = vrot.slane %v3934, 5
      %v4077 = vrot.slane %v4076, 4
      %v4078 = vrot.slane %v3935, 5
      %v4079 = vsel %vm4059, %v4077, %v4078
      %v4080 = vrot.slane %v3936, 5
      %v4081 = vrot.slane %v4080, 4
      %v4082 = vrot.slane %v3937, 5
      %v4083 = vsel %vm4059, %v4081, %v4082
      %v4084 = vrot.slane %v3938, 5
      %v4085 = vrot.slane %v4084, 4
      %v4086 = vrot.slane %v3939, 5
      %v4087 = vsel %vm4059, %v4085, %v4086
      %v4088 = vrot.slane %v3940, 5
      %v4089 = vrot.slane %v4088, 4
      %v4090 = vrot.slane %v3941, 5
      %v4091 = vsel %vm4059, %v4089, %v4090
      %v4093 = vunpack.c.l.b16 %v3901
      %v4094 = vunpack.c.h.b16 %v3901
      %v4095 = vpack.c.b16 %v4093, %v4093
      %v4096 = vpack.c.b16 %v4094, %v4094
      %v4098 = vshrl.u32 %v4095, 16
      %v4100 = vrot.slane %v4098, 4
      %v4101 = vshll.u32 %v4095, 16
      %v4103 = vrot.slane %v4101, 5
      %v4104 = vor.u32 %v4100, %v4103
      %v4105 = vrot.slane %v4104, 4
      %v4107 = vshll.u32 %v4096, 16
      %v4109 = vrot.slane %v4107, 5
      %v4110 = vsel %vm3944, %v4105, %v4109
      %v4111 = vrot.slane %v4095, 5
      %v4112 = vrot.slane %v4111, 4
      %v4113 = vrot.slane %v4096, 5
      %v4114 = vsel %vm4059, %v4112, %v4113
      %v4115 = vpack.c.b16 %v3912, %v3910
      %v4116 = vpack.c.b16 %v3916, %v3914
      %v4117 = vpack.c.b16 %v3920, %v3918
      %v4118 = vpack.c.b16 %v3924, %v3922
      %v4123 = vunpack.c.l.b16 %v3958
      %v4124 = vunpack.c.l.b16 %v3972
      %v4125 = vunpack.c.l.b16 %v3986
      %v4126 = vunpack.c.l.b16 %v4000
      %v4127 = vunpack.c.l.b16 %v4014
      %v4128 = vunpack.c.l.b16 %v4028
      %v4129 = vunpack.c.l.b16 %v4042
      %v4130 = vunpack.c.l.b16 %v4056
      %v4131 = vpack.c.b16 %v4124, %v4123
      %v4132 = vpack.c.b16 %v4126, %v4125
      %v4133 = vpack.c.b16 %v4128, %v4127
      %v4134 = vpack.c.b16 %v4130, %v4129
      %v4139 = vunpack.c.l.b16 %v4063
      %v4140 = vunpack.c.l.b16 %v4067
      %v4141 = vunpack.c.l.b16 %v4071
      %v4142 = vunpack.c.l.b16 %v4075
      %v4143 = vunpack.c.l.b16 %v4079
      %v4144 = vunpack.c.l.b16 %v4083
      %v4145 = vunpack.c.l.b16 %v4087
      %v4146 = vunpack.c.l.b16 %v4091
      %v4147 = vpack.c.b16 %v4140, %v4139
      %v4148 = vpack.c.b16 %v4142, %v4141
      %v4149 = vpack.c.b16 %v4144, %v4143
      %v4150 = vpack.c.b16 %v4146, %v4145
      %v4155 = vpack.c.b16 %v3914, %v3912
      %v4156 = vpack.c.b16 %v3918, %v3916
      %v4157 = vpack.c.b16 %v3922, %v3920
      %v4158 = vpack.c.b16 %v4093, %v3924
      %v4163 = vunpack.c.l.b16 %v4110
      %v4164 = vpack.c.b16 %v4125, %v4124
      %v4165 = vpack.c.b16 %v4127, %v4126
      %v4166 = vpack.c.b16 %v4129, %v4128
      %v4167 = vpack.c.b16 %v4163, %v4130
      %v4172 = vunpack.c.l.b16 %v4114
      %v4173 = vpack.c.b16 %v4141, %v4140
      %v4174 = vpack.c.b16 %v4143, %v4142
      %v4175 = vpack.c.b16 %v4145, %v4144
      %v4176 = vpack.c.b16 %v4172, %v4146
      %v4181 = vpack.c.b16 %v3910, %v4093
      %v4183 = vpack.c.b16 %v4123, %v4163
      %v4185 = vpack.c.b16 %v4139, %v4172
      %v4187 = vld [vmem:[%s4] sm:$0xf]
      %v4188 = vld [vmem:[%s4 + $0x4] sm:$0xf]
      %v4189 = vld [vmem:[%s4 + $0x8] sm:$0xf]
      %v4190 = vld [vmem:[%s4 + $0xc] sm:$0xf]
      %v4191 = vld [vmem:[%s4 + $0x10] sm:$0xf]
      %v4192 = vld [vmem:[%s4 + $0x14] sm:$0xf]
      %v4193 = vld [vmem:[%s4 + $0x18] sm:$0xf]
      %v4194 = vld [vmem:[%s4 + $0x1c] sm:$0xf]
      %v4195 = vld [vmem:[%s4 + $0x20] sm:$0xf]
      %v4196 = vld [vmem:[%s4 + $0x24] sm:$0xf]
      %v4197 = vld [vmem:[%s4 + $0x28] sm:$0xf]
      %v4198 = vld [vmem:[%s4 + $0x2c] sm:$0xf]
      %v4199 = vld [vmem:[%s4 + $0x30] sm:$0xf]
      %v4200 = vld [vmem:[%s4 + $0x34] sm:$0xf]
      %v4201 = vld [vmem:[%s4 + $0x38] sm:$0xf]
      %v4202 = vld [vmem:[%s4 + $0x3c] sm:$0xf]
      %v4203 = vld [vmem:[%s4 + $0x40] sm:$0xf]
      %v4204 = vld [vmem:[%s4 + $0x44] sm:$0xf]
      %v4205 = vld [vmem:[%s4 + $0x48] sm:$0xf]
      %v4206 = vld [vmem:[%s4 + $0x4c] sm:$0xf]
      %v4207 = vld [vmem:[%s4 + $0x50] sm:$0xf]
      %v4208 = vld [vmem:[%s4 + $0x54] sm:$0xf]
      %v4209 = vld [vmem:[%s4 + $0x58] sm:$0xf]
      %v4210 = vld [vmem:[%s4 + $0x5c] sm:$0xf]
      %v4211 = vld [vmem:[%s4 + $0x60] sm:$0xf]
      %v4212 = vld [vmem:[%s4 + $0x64] sm:$0xf]
      %v4213 = vld [vmem:[%s4 + $0x68] sm:$0xf]
      %v4214 = vld [vmem:[%s4 + $0x6c] sm:$0xf]
      %v4215 = vld [vmem:[%s4 + $0x70] sm:$0xf]
      %v4216 = vld [vmem:[%s4 + $0x74] sm:$0xf]
      %v4217 = vld [vmem:[%s4 + $0x78] sm:$0xf]
      %v4218 = vld [vmem:[%s4 + $0x7c] sm:$0xf]
      %v4219 = vld [vmem:[%s4 + $0x80] sm:$0xf]
      %v4220 = vld [vmem:[%s4 + $0x84] sm:$0xf]
      %v4221 = vld [vmem:[%s4 + $0x88] sm:$0xf]
      %v4222 = vld [vmem:[%s4 + $0x8c] sm:$0xf]
      %v4223 = vld [vmem:[%s4 + $0x90] sm:$0xf]
      %v4224 = vld [vmem:[%s4 + $0x94] sm:$0xf]
      %v4225 = vld [vmem:[%s4 + $0x98] sm:$0xf]
      %v4226 = vld [vmem:[%s4 + $0x9c] sm:$0xf]
      %v4227 = vld [vmem:[%s4 + $0xa0] sm:$0xf]
      %v4228 = vld [vmem:[%s4 + $0xa4] sm:$0xf]
      %v4229 = vld [vmem:[%s4 + $0xa8] sm:$0xf]
      %v4230 = vld [vmem:[%s4 + $0xac] sm:$0xf]
      %v4231 = vld [vmem:[%s4 + $0xb0] sm:$0xf]
      %v4232 = vld [vmem:[%s4 + $0xb4] sm:$0xf]
      %v4233 = vld [vmem:[%s4 + $0xb8] sm:$0xf]
      %v4234 = vld [vmem:[%s4 + $0xbc] sm:$0xf]
      %v4235 = vld [vmem:[%s4 + $0xc0] sm:$0xf]
      %v4236 = vld [vmem:[%s4 + $0xc4] sm:$0xf]
      %v4237 = vld [vmem:[%s4 + $0xc8] sm:$0xf]
      %v4238 = vld [vmem:[%s4 + $0xcc] sm:$0xf]
      %v4239 = vld [vmem:[%s4 + $0xd0] sm:$0xf]
      %v4240 = vld [vmem:[%s4 + $0xd4] sm:$0xf]
      %v4241 = vld [vmem:[%s4 + $0xd8] sm:$0xf]
      %v4242 = vld [vmem:[%s4 + $0xdc] sm:$0xf]
      %v4243 = vld [vmem:[%s4 + $0xe0] sm:$0xf]
      %v4244 = vld [vmem:[%s4 + $0xe4] sm:$0xf]
      %v4245 = vld [vmem:[%s4 + $0xe8] sm:$0xf]
      %v4246 = vld [vmem:[%s4 + $0xec] sm:$0xf]
      %v4247 = vld [vmem:[%s4 + $0xf0] sm:$0xf]
      %v4248 = vld [vmem:[%s4 + $0xf4] sm:$0xf]
      %v4249 = vld [vmem:[%s4 + $0xf8] sm:$0xf]
      %v4250 = vld [vmem:[%s4 + $0xfc] sm:$0xf]
      %v4251 = vld [vmem:[%s4 + $0x100] sm:$0xf]
      %v4252 = vld [vmem:[%s4 + $0x104] sm:$0xf]
      %v4253 = vld [vmem:[%s4 + $0x108] sm:$0xf]
      %v4254 = vld [vmem:[%s4 + $0x10c] sm:$0xf]
      %v4255 = vld [vmem:[%s4 + $0x110] sm:$0xf]
      %v4256 = vld [vmem:[%s4 + $0x114] sm:$0xf]
      %v4257 = vld [vmem:[%s4 + $0x118] sm:$0xf]
      %v4258 = vld [vmem:[%s4 + $0x11c] sm:$0xf]
      %v4259 = vld [vmem:[%s4 + $0x120] sm:$0xf]
      %v4260 = vld [vmem:[%s4 + $0x124] sm:$0xf]
      %v4261 = vld [vmem:[%s4 + $0x128] sm:$0xf]
      %v4262 = vld [vmem:[%s4 + $0x12c] sm:$0xf]
      %v4263 = vld [vmem:[%s4 + $0x130] sm:$0xf]
      %v4264 = vld [vmem:[%s4 + $0x134] sm:$0xf]
      %v4265 = vld [vmem:[%s4 + $0x138] sm:$0xf]
      %v4266 = vld [vmem:[%s4 + $0x13c] sm:$0xf]
      %v4267 = vld [vmem:[%s4 + $0x140] sm:$0xf]
      %v4268 = vld [vmem:[%s4 + $0x144] sm:$0xf]
      %v4269 = vld [vmem:[%s4 + $0x148] sm:$0xf]
      %v4270 = vld [vmem:[%s4 + $0x14c] sm:$0xf]
      %v4271 = vld [vmem:[%s4 + $0x150] sm:$0xf]
      %v4272 = vld [vmem:[%s4 + $0x154] sm:$0xf]
      %v4273 = vld [vmem:[%s4 + $0x158] sm:$0xf]
      %v4274 = vld [vmem:[%s4 + $0x15c] sm:$0xf]
      %v4275 = vld [vmem:[%s4 + $0x160] sm:$0xf]
      %v4276 = vld [vmem:[%s4 + $0x164] sm:$0xf]
      %v4277 = vld [vmem:[%s4 + $0x168] sm:$0xf]
      %v4278 = vld [vmem:[%s4 + $0x16c] sm:$0xf]
      %v4279 = vld [vmem:[%s4 + $0x170] sm:$0xf]
      %v4280 = vld [vmem:[%s4 + $0x174] sm:$0xf]
      %v4281 = vld [vmem:[%s4 + $0x178] sm:$0xf]
      %v4282 = vld [vmem:[%s4 + $0x17c] sm:$0xf]
      %v4283 = vld [vmem:[%s4 + $0x180] sm:$0xf]
      %v4284 = vld [vmem:[%s4 + $0x184] sm:$0xf]
      %v4285 = vld [vmem:[%s4 + $0x188] sm:$0xf]
      %v4286 = vld [vmem:[%s4 + $0x18c] sm:$0xf]
      %v4287 = vld [vmem:[%s4 + $0x190] sm:$0xf]
      %v4288 = vld [vmem:[%s4 + $0x194] sm:$0xf]
      %v4289 = vld [vmem:[%s4 + $0x198] sm:$0xf]
      %v4290 = vld [vmem:[%s4 + $0x19c] sm:$0xf]
      %v4291 = vld [vmem:[%s4 + $0x1a0] sm:$0xf]
      %v4292 = vld [vmem:[%s4 + $0x1a4] sm:$0xf]
      %v4293 = vld [vmem:[%s4 + $0x1a8] sm:$0xf]
      %v4294 = vld [vmem:[%s4 + $0x1ac] sm:$0xf]
      %v4295 = vld [vmem:[%s4 + $0x1b0] sm:$0xf]
      %v4296 = vld [vmem:[%s4 + $0x1b4] sm:$0xf]
      %v4297 = vld [vmem:[%s4 + $0x1b8] sm:$0xf]
      %v4298 = vld [vmem:[%s4 + $0x1bc] sm:$0xf]
      %v4299 = vld [vmem:[%s4 + $0x1c0] sm:$0xf]
      %v4300 = vld [vmem:[%s4 + $0x1c4] sm:$0xf]
      %v4301 = vld [vmem:[%s4 + $0x1c8] sm:$0xf]
      %v4302 = vld [vmem:[%s4 + $0x1cc] sm:$0xf]
      %v4303 = vld [vmem:[%s4 + $0x1d0] sm:$0xf]
      %v4304 = vld [vmem:[%s4 + $0x1d4] sm:$0xf]
      %v4305 = vld [vmem:[%s4 + $0x1d8] sm:$0xf]
      %v4306 = vld [vmem:[%s4 + $0x1dc] sm:$0xf]
      %v4307 = vld [vmem:[%s4 + $0x1e0] sm:$0xf]
      %v4308 = vld [vmem:[%s4 + $0x1e4] sm:$0xf]
      %v4309 = vld [vmem:[%s4 + $0x1e8] sm:$0xf]
      %v4310 = vld [vmem:[%s4 + $0x1ec] sm:$0xf]
      %v4311 = vld [vmem:[%s4 + $0x1f0] sm:$0xf]
      %v4312 = vld [vmem:[%s4 + $0x1f4] sm:$0xf]
      %v4313 = vld [vmem:[%s4 + $0x1f8] sm:$0xf]
      %v4314 = vld [vmem:[%s4 + $0x1fc] sm:$0xf]
      %v4315 = vld [vmem:[%s4 + $0x200] sm:$0xf]
      %v4316 = vld [vmem:[%s4 + $0x204] sm:$0xf]
      %v4317 = vld [vmem:[%s4 + $0x208] sm:$0xf]
      %v4318 = vld [vmem:[%s4 + $0x20c] sm:$0xf]
      %v4319 = vld [vmem:[%s4 + $0x210] sm:$0xf]
      %v4320 = vld [vmem:[%s4 + $0x214] sm:$0xf]
      %v4321 = vld [vmem:[%s4 + $0x218] sm:$0xf]
      %v4322 = vld [vmem:[%s4 + $0x21c] sm:$0xf]
      %v4323 = vld [vmem:[%s4 + $0x220] sm:$0xf]
      %v4324 = vld [vmem:[%s4 + $0x224] sm:$0xf]
      %v4325 = vld [vmem:[%s4 + $0x228] sm:$0xf]
      %v4326 = vld [vmem:[%s4 + $0x22c] sm:$0xf]
      %v4327 = vld [vmem:[%s4 + $0x230] sm:$0xf]
      %v4328 = vld [vmem:[%s4 + $0x234] sm:$0xf]
      %v4329 = vld [vmem:[%s4 + $0x238] sm:$0xf]
      %v4330 = vld [vmem:[%s4 + $0x23c] sm:$0xf]
      %v4475 = vunpack.c.l.b16 %v4187
      %v4476 = vunpack.c.l.b16 %v4188
      %v4477 = vunpack.c.l.b16 %v4189
      %v4478 = vunpack.c.l.b16 %v4190
      %v4479 = vunpack.c.l.b16 %v4191
      %v4480 = vunpack.c.l.b16 %v4192
      %v4481 = vunpack.c.l.b16 %v4193
      %v4482 = vunpack.c.l.b16 %v4194
      %v4483 = vunpack.c.l.b16 %v4195
      %v4484 = vunpack.c.l.b16 %v4196
      %v4485 = vunpack.c.l.b16 %v4197
      %v4486 = vunpack.c.l.b16 %v4198
      %v4487 = vunpack.c.l.b16 %v4199
      %v4488 = vunpack.c.l.b16 %v4200
      %v4489 = vunpack.c.l.b16 %v4201
      %v4490 = vunpack.c.l.b16 %v4202
      %v4491 = vunpack.c.l.b16 %v4203
      %v4492 = vunpack.c.l.b16 %v4204
      %v4493 = vunpack.c.l.b16 %v4205
      %v4494 = vunpack.c.l.b16 %v4206
      %v4495 = vunpack.c.l.b16 %v4207
      %v4496 = vunpack.c.l.b16 %v4208
      %v4497 = vunpack.c.l.b16 %v4209
      %v4498 = vunpack.c.l.b16 %v4210
      %v4499 = vunpack.c.l.b16 %v4211
      %v4500 = vunpack.c.l.b16 %v4212
      %v4501 = vunpack.c.l.b16 %v4213
      %v4502 = vunpack.c.l.b16 %v4214
      %v4503 = vunpack.c.l.b16 %v4215
      %v4504 = vunpack.c.l.b16 %v4216
      %v4505 = vunpack.c.l.b16 %v4217
      %v4506 = vunpack.c.l.b16 %v4218
      %v4507 = vunpack.c.l.b16 %v4219
      %v4508 = vunpack.c.l.b16 %v4220
      %v4509 = vunpack.c.l.b16 %v4221
      %v4510 = vunpack.c.l.b16 %v4222
      %v4511 = vunpack.c.l.b16 %v4223
      %v4512 = vunpack.c.l.b16 %v4224
      %v4513 = vunpack.c.l.b16 %v4225
      %v4514 = vunpack.c.l.b16 %v4226
      %v4515 = vunpack.c.l.b16 %v4227
      %v4516 = vunpack.c.l.b16 %v4228
      %v4517 = vunpack.c.l.b16 %v4229
      %v4518 = vunpack.c.l.b16 %v4230
      %v4519 = vunpack.c.l.b16 %v4231
      %v4520 = vunpack.c.l.b16 %v4232
      %v4521 = vunpack.c.l.b16 %v4233
      %v4522 = vunpack.c.l.b16 %v4234
      %v4523 = vunpack.c.l.b16 %v4235
      %v4524 = vunpack.c.l.b16 %v4236
      %v4525 = vunpack.c.l.b16 %v4237
      %v4526 = vunpack.c.l.b16 %v4238
      %v4527 = vunpack.c.l.b16 %v4239
      %v4528 = vunpack.c.l.b16 %v4240
      %v4529 = vunpack.c.l.b16 %v4241
      %v4530 = vunpack.c.l.b16 %v4242
      %v4531 = vunpack.c.l.b16 %v4243
      %v4532 = vunpack.c.l.b16 %v4244
      %v4533 = vunpack.c.l.b16 %v4245
      %v4534 = vunpack.c.l.b16 %v4246
      %v4535 = vunpack.c.l.b16 %v4247
      %v4536 = vunpack.c.l.b16 %v4248
      %v4537 = vunpack.c.l.b16 %v4249
      %v4538 = vunpack.c.l.b16 %v4250
      %v4539 = vunpack.c.l.b16 %v4251
      %v4540 = vunpack.c.l.b16 %v4252
      %v4541 = vunpack.c.l.b16 %v4253
      %v4542 = vunpack.c.l.b16 %v4254
      %v4543 = vunpack.c.l.b16 %v4255
      %v4544 = vunpack.c.l.b16 %v4256
      %v4545 = vunpack.c.l.b16 %v4257
      %v4546 = vunpack.c.l.b16 %v4258
      %v4547 = vunpack.c.l.b16 %v4259
      %v4548 = vunpack.c.l.b16 %v4260
      %v4549 = vunpack.c.l.b16 %v4261
      %v4550 = vunpack.c.l.b16 %v4262
      %v4551 = vunpack.c.l.b16 %v4263
      %v4552 = vunpack.c.l.b16 %v4264
      %v4553 = vunpack.c.l.b16 %v4265
      %v4554 = vunpack.c.l.b16 %v4266
      %v4555 = vunpack.c.l.b16 %v4267
      %v4556 = vunpack.c.l.b16 %v4268
      %v4557 = vunpack.c.l.b16 %v4269
      %v4558 = vunpack.c.l.b16 %v4270
      %v4559 = vunpack.c.l.b16 %v4271
      %v4560 = vunpack.c.l.b16 %v4272
      %v4561 = vunpack.c.l.b16 %v4273
      %v4562 = vunpack.c.l.b16 %v4274
      %v4563 = vunpack.c.l.b16 %v4275
      %v4564 = vunpack.c.l.b16 %v4276
      %v4565 = vunpack.c.l.b16 %v4277
      %v4566 = vunpack.c.l.b16 %v4278
      %v4567 = vunpack.c.l.b16 %v4279
      %v4568 = vunpack.c.l.b16 %v4280
      %v4569 = vunpack.c.l.b16 %v4281
      %v4570 = vunpack.c.l.b16 %v4282
      %v4571 = vunpack.c.l.b16 %v4283
      %v4572 = vunpack.c.l.b16 %v4284
      %v4573 = vunpack.c.l.b16 %v4285
      %v4574 = vunpack.c.l.b16 %v4286
      %v4575 = vunpack.c.l.b16 %v4287
      %v4576 = vunpack.c.l.b16 %v4288
      %v4577 = vunpack.c.l.b16 %v4289
      %v4578 = vunpack.c.l.b16 %v4290
      %v4579 = vunpack.c.l.b16 %v4291
      %v4580 = vunpack.c.l.b16 %v4292
      %v4581 = vunpack.c.l.b16 %v4293
      %v4582 = vunpack.c.l.b16 %v4294
      %v4583 = vunpack.c.l.b16 %v4295
      %v4584 = vunpack.c.l.b16 %v4296
      %v4585 = vunpack.c.l.b16 %v4297
      %v4586 = vunpack.c.l.b16 %v4298
      %v4587 = vunpack.c.l.b16 %v4299
      %v4588 = vunpack.c.l.b16 %v4300
      %v4589 = vunpack.c.l.b16 %v4301
      %v4590 = vunpack.c.l.b16 %v4302
      %v4591 = vunpack.c.l.b16 %v4303
      %v4592 = vunpack.c.l.b16 %v4304
      %v4593 = vunpack.c.l.b16 %v4305
      %v4594 = vunpack.c.l.b16 %v4306
      %v4595 = vunpack.c.l.b16 %v4307
      %v4596 = vunpack.c.l.b16 %v4308
      %v4597 = vunpack.c.l.b16 %v4309
      %v4598 = vunpack.c.l.b16 %v4310
      %v4599 = vunpack.c.l.b16 %v4311
      %v4600 = vunpack.c.l.b16 %v4312
      %v4601 = vunpack.c.l.b16 %v4313
      %v4602 = vunpack.c.l.b16 %v4314
      %v4603 = vunpack.c.l.b16 %v4315
      %v4604 = vunpack.c.l.b16 %v4316
      %v4605 = vunpack.c.l.b16 %v4317
      %v4606 = vunpack.c.l.b16 %v4318
      %v4607 = vunpack.c.l.b16 %v4319
      %v4608 = vunpack.c.l.b16 %v4320
      %v4609 = vunpack.c.l.b16 %v4321
      %v4610 = vunpack.c.l.b16 %v4322
      %v4611 = vunpack.c.l.b16 %v4323
      %v4612 = vunpack.c.l.b16 %v4324
      %v4613 = vunpack.c.l.b16 %v4325
      %v4614 = vunpack.c.l.b16 %v4326
      %v4615 = vunpack.c.l.b16 %v4327
      %v4616 = vunpack.c.l.b16 %v4328
      %v4617 = vunpack.c.l.b16 %v4329
      %v4618 = vunpack.c.l.b16 %v4330
      %v4619 = vpack.c.b16 %v4476, %v4475
      %v4620 = vpack.c.b16 %v4478, %v4477
      %v4621 = vpack.c.b16 %v4480, %v4479
      %v4622 = vpack.c.b16 %v4482, %v4481
      %v4623 = vpack.c.b16 %v4484, %v4483
      %v4624 = vpack.c.b16 %v4486, %v4485
      %v4625 = vpack.c.b16 %v4488, %v4487
      %v4626 = vpack.c.b16 %v4490, %v4489
      %v4627 = vpack.c.b16 %v4492, %v4491
      %v4628 = vpack.c.b16 %v4494, %v4493
      %v4629 = vpack.c.b16 %v4496, %v4495
      %v4630 = vpack.c.b16 %v4498, %v4497
      %v4631 = vpack.c.b16 %v4500, %v4499
      %v4632 = vpack.c.b16 %v4502, %v4501
      %v4633 = vpack.c.b16 %v4504, %v4503
      %v4634 = vpack.c.b16 %v4506, %v4505
      %v4635 = vpack.c.b16 %v4508, %v4507
      %v4636 = vpack.c.b16 %v4510, %v4509
      %v4637 = vpack.c.b16 %v4512, %v4511
      %v4638 = vpack.c.b16 %v4514, %v4513
      %v4639 = vpack.c.b16 %v4516, %v4515
      %v4640 = vpack.c.b16 %v4518, %v4517
      %v4641 = vpack.c.b16 %v4520, %v4519
      %v4642 = vpack.c.b16 %v4522, %v4521
      %v4643 = vpack.c.b16 %v4524, %v4523
      %v4644 = vpack.c.b16 %v4526, %v4525
      %v4645 = vpack.c.b16 %v4528, %v4527
      %v4646 = vpack.c.b16 %v4530, %v4529
      %v4647 = vpack.c.b16 %v4532, %v4531
      %v4648 = vpack.c.b16 %v4534, %v4533
      %v4649 = vpack.c.b16 %v4536, %v4535
      %v4650 = vpack.c.b16 %v4538, %v4537
      %v4651 = vpack.c.b16 %v4540, %v4539
      %v4652 = vpack.c.b16 %v4542, %v4541
      %v4653 = vpack.c.b16 %v4544, %v4543
      %v4654 = vpack.c.b16 %v4546, %v4545
      %v4655 = vpack.c.b16 %v4548, %v4547
      %v4656 = vpack.c.b16 %v4550, %v4549
      %v4657 = vpack.c.b16 %v4552, %v4551
      %v4658 = vpack.c.b16 %v4554, %v4553
      %v4659 = vpack.c.b16 %v4556, %v4555
      %v4660 = vpack.c.b16 %v4558, %v4557
      %v4661 = vpack.c.b16 %v4560, %v4559
      %v4662 = vpack.c.b16 %v4562, %v4561
      %v4663 = vpack.c.b16 %v4564, %v4563
      %v4664 = vpack.c.b16 %v4566, %v4565
      %v4665 = vpack.c.b16 %v4568, %v4567
      %v4666 = vpack.c.b16 %v4570, %v4569
      %v4667 = vpack.c.b16 %v4572, %v4571
      %v4668 = vpack.c.b16 %v4574, %v4573
      %v4669 = vpack.c.b16 %v4576, %v4575
      %v4670 = vpack.c.b16 %v4578, %v4577
      %v4671 = vpack.c.b16 %v4580, %v4579
      %v4672 = vpack.c.b16 %v4582, %v4581
      %v4673 = vpack.c.b16 %v4584, %v4583
      %v4674 = vpack.c.b16 %v4586, %v4585
      %v4675 = vpack.c.b16 %v4588, %v4587
      %v4676 = vpack.c.b16 %v4590, %v4589
      %v4677 = vpack.c.b16 %v4592, %v4591
      %v4678 = vpack.c.b16 %v4594, %v4593
      %v4679 = vpack.c.b16 %v4596, %v4595
      %v4680 = vpack.c.b16 %v4598, %v4597
      %v4681 = vpack.c.b16 %v4600, %v4599
      %v4682 = vpack.c.b16 %v4602, %v4601
      %v4683 = vpack.c.b16 %v4604, %v4603
      %v4684 = vpack.c.b16 %v4606, %v4605
      %v4685 = vpack.c.b16 %v4608, %v4607
      %v4686 = vpack.c.b16 %v4610, %v4609
      %v4687 = vpack.c.b16 %v4612, %v4611
      %v4688 = vpack.c.b16 %v4614, %v4613
      %v4689 = vpack.c.b16 %v4616, %v4615
      %v4690 = vpack.c.b16 %v4618, %v4617
      %4763 = vmatprep.subr.bf16.mxu0 0
      %4764 = vmatpush1.bf16.msra.mxu0 %v4619
      %4765 = vmatprep.subr.bf16.mxu0 0
      %4766 = vmatpush1.bf16.msra.mxu0 %v4620
      %4767 = vmatprep.subr.bf16.mxu0 0
      %4768 = vmatpush1.bf16.msra.mxu0 %v4621
      %4769 = vmatprep.subr.bf16.mxu0 0
      %4770 = vmatpush1.bf16.msra.mxu0 %v4622
      %4771 = vmatprep.subr.bf16.mxu0 0
      %4772 = vmatpush1.bf16.msra.mxu0 %v4623
      %4773 = vmatprep.subr.bf16.mxu0 0
      %4774 = vmatpush1.bf16.msra.mxu0 %v4624
      %4775 = vmatprep.subr.bf16.mxu0 0
      %4776 = vmatpush1.bf16.msra.mxu0 %v4625
      %4777 = vmatprep.subr.bf16.mxu0 0
      %4778 = vmatpush1.bf16.msra.mxu0 %v4626
      %4779 = vmatprep.subr.bf16.mxu0 0
      %4780 = vmatpush1.bf16.msra.mxu0 %v4627
      %4781 = vmatprep.subr.bf16.mxu0 0
      %4782 = vmatpush1.bf16.msra.mxu0 %v4628
      %4783 = vmatprep.subr.bf16.mxu0 0
      %4784 = vmatpush1.bf16.msra.mxu0 %v4629
      %4785 = vmatprep.subr.bf16.mxu0 0
      %4786 = vmatpush1.bf16.msra.mxu0 %v4630
      %4787 = vmatprep.subr.bf16.mxu0 0
      %4788 = vmatpush1.bf16.msra.mxu0 %v4631
      %4789 = vmatprep.subr.bf16.mxu0 0
      %4790 = vmatpush1.bf16.msra.mxu0 %v4632
      %4791 = vmatprep.subr.bf16.mxu0 0
      %4792 = vmatpush1.bf16.msra.mxu0 %v4633
      %4793 = vmatprep.subr.bf16.mxu0 0
      %4794 = vmatpush1.bf16.msra.mxu0 %v4634
      %4795 = vmatprep.mubr.bf16.mxu0 %v4131
      %4796 = vmatmul.mubr.bf16.gmra.mrb[0].mxu0 %v4115
      %v4797 = vpop.f32.mrb[0].mxu0
      %v4798 = vadd.f32 0.0, %v4797
      %v4799 = vpop.f32.mrb[0].mxu0
      %v4800 = vpop.f32.mrb[0].mxu0
      %v4801 = vadd.f32 0.0, %v4800
      %v4802 = vpop.f32.mrb[0].mxu0
      %4803 = vmatprep.mubr.bf16.mxu0 %v4132
      %4804 = vmatmul.mubr.bf16.gmra.mrb[0].mxu0 %v4116
      %v4805 = vpop.f32.mrb[0].mxu0
      %v4806 = vadd.f32 0.0, %v4805
      %v4807 = vpop.f32.mrb[0].mxu0
      %v4808 = vpop.f32.mrb[0].mxu0
      %v4809 = vadd.f32 0.0, %v4808
      %v4810 = vpop.f32.mrb[0].mxu0
      %4811 = vmatprep.mubr.bf16.mxu0 %v4133
      %4812 = vmatmul.mubr.bf16.gmra.mrb[0].mxu0 %v4117
      %v4813 = vpop.f32.mrb[0].mxu0
      %v4814 = vadd.f32 0.0, %v4813
      %v4815 = vpop.f32.mrb[0].mxu0
      %v4816 = vpop.f32.mrb[0].mxu0
      %v4817 = vadd.f32 0.0, %v4816
      %v4818 = vpop.f32.mrb[0].mxu0
      %4819 = vmatprep.mubr.bf16.mxu0 %v4134
      %4820 = vmatmul.mubr.bf16.gmra.mrb[0].mxu0 %v4118
      %v4821 = vpop.f32.mrb[0].mxu0
      %v4822 = vadd.f32 0.0, %v4821
      %v4823 = vpop.f32.mrb[0].mxu0
      %v4824 = vpop.f32.mrb[0].mxu0
      %v4825 = vadd.f32 0.0, %v4824
      %v4826 = vpop.f32.mrb[0].mxu0
      %4827 = vdwg.mxu0
      %4828 = vmatprep.subr.bf16.mxu0 0
      %4829 = vmatpush1.bf16.msra.mxu0 %v4635
      %4830 = vmatprep.subr.bf16.mxu0 0
      %4831 = vmatpush1.bf16.msra.mxu0 %v4636
      %4832 = vmatprep.subr.bf16.mxu0 0
      %4833 = vmatpush1.bf16.msra.mxu0 %v4637
      %4834 = vmatprep.subr.bf16.mxu0 0
      %4835 = vmatpush1.bf16.msra.mxu0 %v4638
      %4836 = vmatprep.subr.bf16.mxu0 0
      %4837 = vmatpush1.bf16.msra.mxu0 %v4639
      %4838 = vmatprep.subr.bf16.mxu0 0
      %4839 = vmatpush1.bf16.msra.mxu0 %v4640
      %4840 = vmatprep.subr.bf16.mxu0 0
      %4841 = vmatpush1.bf16.msra.mxu0 %v4641
      %4842 = vmatprep.subr.bf16.mxu0 0
      %4843 = vmatpush1.bf16.msra.mxu0 %v4642
      %4844 = vmatprep.subr.bf16.mxu0 0
      %4845 = vmatpush1.bf16.msra.mxu0 %v4643
      %4846 = vmatprep.subr.bf16.mxu0 0
      %4847 = vmatpush1.bf16.msra.mxu0 %v4644
      %4848 = vmatprep.subr.bf16.mxu0 0
      %4849 = vmatpush1.bf16.msra.mxu0 %v4645
      %4850 = vmatprep.subr.bf16.mxu0 0
      %4851 = vmatpush1.bf16.msra.mxu0 %v4646
      %4852 = vmatprep.subr.bf16.mxu0 0
      %4853 = vmatpush1.bf16.msra.mxu0 %v4647
      %4854 = vmatprep.subr.bf16.mxu0 0
      %4855 = vmatpush1.bf16.msra.mxu0 %v4648
      %4856 = vmatprep.subr.bf16.mxu0 0
      %4857 = vmatpush1.bf16.msra.mxu0 %v4649
      %4858 = vmatprep.subr.bf16.mxu0 0
      %4859 = vmatpush1.bf16.msra.mxu0 %v4650
      %4860 = vmatprep.mubr.bf16.mxu0 %v4155
      %4861 = vmatmul.mubr.bf16.gmra.mrb[0].mxu0 %v4147
      %v4862 = vpop.f32.mrb[0].mxu0
      %v4863 = vadd.f32 %v4798, %v4862
      %v4864 = vpop.f32.mrb[0].mxu0
      %v4865 = vpop.f32.mrb[0].mxu0
      %v4866 = vadd.f32 %v4801, %v4865
      %v4867 = vpop.f32.mrb[0].mxu0
      %4868 = vmatprep.mubr.bf16.mxu0 %v4156
      %4869 = vmatmul.mubr.bf16.gmra.mrb[0].mxu0 %v4148
      %v4870 = vpop.f32.mrb[0].mxu0
      %v4871 = vadd.f32 %v4806, %v4870
      %v4872 = vpop.f32.mrb[0].mxu0
      %v4873 = vpop.f32.mrb[0].mxu0
      %v4874 = vadd.f32 %v4809, %v4873
      %v4875 = vpop.f32.mrb[0].mxu0
      %4876 = vmatprep.mubr.bf16.mxu0 %v4157
      %4877 = vmatmul.mubr.bf16.gmra.mrb[0].mxu0 %v4149
      %v4878 = vpop.f32.mrb[0].mxu0
      %v4879 = vadd.f32 %v4814, %v4878
      %v4880 = vpop.f32.mrb[0].mxu0
      %v4881 = vpop.f32.mrb[0].mxu0
      %v4882 = vadd.f32 %v4817, %v4881
      %v4883 = vpop.f32.mrb[0].mxu0
      %4884 = vmatprep.mubr.bf16.mxu0 %v4158
      %4885 = vmatmul.mubr.bf16.gmra.mrb[0].mxu0 %v4150
      %v4886 = vpop.f32.mrb[0].mxu0
      %v4887 = vadd.f32 %v4822, %v4886
      %v4888 = vpop.f32.mrb[0].mxu0
      %v4889 = vpop.f32.mrb[0].mxu0
      %v4890 = vadd.f32 %v4825, %v4889
      %v4891 = vpop.f32.mrb[0].mxu0
      %4892 = vdwg.mxu0
      %4893 = vmatprep.subr.bf16.mxu0 0
      %4894 = vmatpush1.bf16.msra.mxu0 %v4651
      %4895 = vmatprep.subr.bf16.mxu0 0
      %4896 = vmatpush1.bf16.msra.mxu0 %v4652
      %4897 = vmatprep.subr.bf16.mxu0 0
      %4898 = vmatpush1.bf16.msra.mxu0 %v4653
      %4899 = vmatprep.subr.bf16.mxu0 0
      %4900 = vmatpush1.bf16.msra.mxu0 %v4654
      %4901 = vmatprep.subr.bf16.mxu0 0
      %4902 = vmatpush1.bf16.msra.mxu0 %v4655
      %4903 = vmatprep.subr.bf16.mxu0 0
      %4904 = vmatpush1.bf16.msra.mxu0 %v4656
      %4905 = vmatprep.subr.bf16.mxu0 0
      %4906 = vmatpush1.bf16.msra.mxu0 %v4657
      %4907 = vmatprep.subr.bf16.mxu0 0
      %4908 = vmatpush1.bf16.msra.mxu0 %v4658
      %4909 = vmatprep.subr.bf16.mxu0 0
      %4910 = vmatpush1.bf16.msra.mxu0 %v4659
      %4911 = vmatprep.subr.bf16.mxu0 0
      %4912 = vmatpush1.bf16.msra.mxu0 %v4660
      %4913 = vmatprep.subr.bf16.mxu0 0
      %4914 = vmatpush1.bf16.msra.mxu0 %v4661
      %4915 = vmatprep.subr.bf16.mxu0 0
      %4916 = vmatpush1.bf16.msra.mxu0 %v4662
      %4917 = vmatprep.subr.bf16.mxu0 0
      %4918 = vmatpush1.bf16.msra.mxu0 %v4663
      %4919 = vmatprep.subr.bf16.mxu0 0
      %4920 = vmatpush1.bf16.msra.mxu0 %v4664
      %4921 = vmatprep.subr.bf16.mxu0 0
      %4922 = vmatpush1.bf16.msra.mxu0 %v4665
      %4923 = vmatprep.subr.bf16.mxu0 0
      %4924 = vmatpush1.bf16.msra.mxu0 %v4666
      %4925 = vmatprep.mubr.bf16.mxu0 %v4173
      %4926 = vmatmul.mubr.bf16.gmra.mrb[0].mxu0 %v4164
      %v4927 = vpop.f32.mrb[0].mxu0
      %v4928 = vadd.f32 %v4863, %v4927
      %v4929 = vpop.f32.mrb[0].mxu0
      %v4930 = vpop.f32.mrb[0].mxu0
      %v4931 = vadd.f32 %v4866, %v4930
      %v4932 = vpop.f32.mrb[0].mxu0
      %4933 = vmatprep.mubr.bf16.mxu0 %v4174
      %4934 = vmatmul.mubr.bf16.gmra.mrb[0].mxu0 %v4165
      %v4935 = vpop.f32.mrb[0].mxu0
      %v4936 = vadd.f32 %v4871, %v4935
      %v4937 = vpop.f32.mrb[0].mxu0
      %v4938 = vpop.f32.mrb[0].mxu0
      %v4939 = vadd.f32 %v4874, %v4938
      %v4940 = vpop.f32.mrb[0].mxu0
      %4941 = vmatprep.mubr.bf16.mxu0 %v4175
      %4942 = vmatmul.mubr.bf16.gmra.mrb[0].mxu0 %v4166
      %v4943 = vpop.f32.mrb[0].mxu0
      %v4944 = vadd.f32 %v4879, %v4943
      %v4945 = vpop.f32.mrb[0].mxu0
      %v4946 = vpop.f32.mrb[0].mxu0
      %v4947 = vadd.f32 %v4882, %v4946
      %v4948 = vpop.f32.mrb[0].mxu0
      %4949 = vmatprep.mubr.bf16.mxu0 %v4176
      %4950 = vmatmul.mubr.bf16.gmra.mrb[0].mxu0 %v4167
      %v4951 = vpop.f32.mrb[0].mxu0
      %v4952 = vadd.f32 %v4887, %v4951
      %v4953 = vpop.f32.mrb[0].mxu0
      %v4954 = vpop.f32.mrb[0].mxu0
      %v4955 = vadd.f32 %v4890, %v4954
      %v4956 = vpop.f32.mrb[0].mxu0
      %4957 = vdwg.mxu0
      %4958 = vmatprep.subr.bf16.mxu0 0
      %4959 = vmatpush1.bf16.msra.mxu0 %v4667
      %4960 = vmatprep.subr.bf16.mxu0 0
      %4961 = vmatpush1.bf16.msra.mxu0 %v4668
      %4962 = vmatprep.subr.bf16.mxu0 0
      %4963 = vmatpush1.bf16.msra.mxu0 %v4669
      %4964 = vmatprep.subr.bf16.mxu0 0
      %4965 = vmatpush1.bf16.msra.mxu0 %v4670
      %4966 = vmatprep.subr.bf16.mxu0 0
      %4967 = vmatpush1.bf16.msra.mxu0 %v4671
      %4968 = vmatprep.subr.bf16.mxu0 0
      %4969 = vmatpush1.bf16.msra.mxu0 %v4672
      %4970 = vmatprep.subr.bf16.mxu0 0
      %4971 = vmatpush1.bf16.msra.mxu0 %v4673
      %4972 = vmatprep.subr.bf16.mxu0 0
      %4973 = vmatpush1.bf16.msra.mxu0 %v4674
      %4974 = vmatprep.subr.bf16.mxu0 0
      %4975 = vmatpush1.bf16.msra.mxu0 %v4675
      %4976 = vmatprep.subr.bf16.mxu0 0
      %4977 = vmatpush1.bf16.msra.mxu0 %v4676
      %4978 = vmatprep.subr.bf16.mxu0 0
      %4979 = vmatpush1.bf16.msra.mxu0 %v4677
      %4980 = vmatprep.subr.bf16.mxu0 0
      %4981 = vmatpush1.bf16.msra.mxu0 %v4678
      %4982 = vmatprep.subr.bf16.mxu0 0
      %4983 = vmatpush1.bf16.msra.mxu0 %v4679
      %4984 = vmatprep.subr.bf16.mxu0 0
      %4985 = vmatpush1.bf16.msra.mxu0 %v4680
      %4986 = vmatprep.subr.bf16.mxu0 0
      %4987 = vmatpush1.bf16.msra.mxu0 %v4681
      %4988 = vmatprep.subr.bf16.mxu0 0
      %4989 = vmatpush1.bf16.msra.mxu0 %v4682
      %4990 = vmatprep.mubr.bf16.mxu0 %v4132
      %4991 = vmatmul.mubr.bf16.gmra.mrb[0].mxu0 %v4116
      %v4992 = vpop.f32.mrb[0].mxu0
      %v4993 = vadd.f32 %v4928, %v4992
      %v4994 = vpop.f32.mrb[0].mxu0
      %v4995 = vpop.f32.mrb[0].mxu0
      %v4996 = vadd.f32 %v4931, %v4995
      %v4997 = vpop.f32.mrb[0].mxu0
      %4998 = vmatprep.mubr.bf16.mxu0 %v4133
      %4999 = vmatmul.mubr.bf16.gmra.mrb[0].mxu0 %v4117
      %v5000 = vpop.f32.mrb[0].mxu0
      %v5001 = vadd.f32 %v4936, %v5000
      %v5002 = vpop.f32.mrb[0].mxu0
      %v5003 = vpop.f32.mrb[0].mxu0
      %v5004 = vadd.f32 %v4939, %v5003
      %v5005 = vpop.f32.mrb[0].mxu0
      %5006 = vmatprep.mubr.bf16.mxu0 %v4134
      %5007 = vmatmul.mubr.bf16.gmra.mrb[0].mxu0 %v4118
      %v5008 = vpop.f32.mrb[0].mxu0
      %v5009 = vadd.f32 %v4944, %v5008
      %v5010 = vpop.f32.mrb[0].mxu0
      %v5011 = vpop.f32.mrb[0].mxu0
      %v5012 = vadd.f32 %v4947, %v5011
      %v5013 = vpop.f32.mrb[0].mxu0
      %5014 = vmatprep.mubr.bf16.mxu0 %v4183
      %5015 = vmatmul.mubr.bf16.gmra.mrb[0].mxu0 %v4181
      %v5016 = vpop.f32.mrb[0].mxu0
      %v5017 = vadd.f32 %v4952, %v5016
      %v5018 = vpop.f32.mrb[0].mxu0
      %v5019 = vpop.f32.mrb[0].mxu0
      %v5020 = vadd.f32 %v4955, %v5019
      %v5021 = vpop.f32.mrb[0].mxu0
      %5022 = vdwg.mxu0
      %5023 = vmatprep.subr.bf16.mxu0 0
      %5024 = vmatpush1.bf16.msra.mxu0 %v4683
      %5025 = vmatprep.subr.bf16.mxu0 0
      %5026 = vmatpush1.bf16.msra.mxu0 %v4684
      %5027 = vmatprep.subr.bf16.mxu0 0
      %5028 = vmatpush1.bf16.msra.mxu0 %v4685
      %5029 = vmatprep.subr.bf16.mxu0 0
      %5030 = vmatpush1.bf16.msra.mxu0 %v4686
      %5031 = vmatprep.subr.bf16.mxu0 0
      %5032 = vmatpush1.bf16.msra.mxu0 %v4687
      %5033 = vmatprep.subr.bf16.mxu0 0
      %5034 = vmatpush1.bf16.msra.mxu0 %v4688
      %5035 = vmatprep.subr.bf16.mxu0 0
      %5036 = vmatpush1.bf16.msra.mxu0 %v4689
      %5037 = vmatprep.subr.bf16.mxu0 0
      %5038 = vmatpush1.bf16.msra.mxu0 %v4690
      %5039 = vmatprep.subr.bf16.mxu0 0
      %5040 = vmatpush1.bf16.msra.mxu0 0
      %5041 = vmatprep.subr.bf16.mxu0 0
      %5042 = vmatpush1.bf16.msra.mxu0 0
      %5043 = vmatprep.subr.bf16.mxu0 0
      %5044 = vmatpush1.bf16.msra.mxu0 0
      %5045 = vmatprep.subr.bf16.mxu0 0
      %5046 = vmatpush1.bf16.msra.mxu0 0
      %5047 = vmatprep.subr.bf16.mxu0 0
      %5048 = vmatpush1.bf16.msra.mxu0 0
      %5049 = vmatprep.subr.bf16.mxu0 0
      %5050 = vmatpush1.bf16.msra.mxu0 0
      %5051 = vmatprep.subr.bf16.mxu0 0
      %5052 = vmatpush1.bf16.msra.mxu0 0
      %5053 = vmatprep.subr.bf16.mxu0 0
      %5054 = vmatpush1.bf16.msra.mxu0 0
      %5055 = vmatprep.mubr.bf16.mxu0 0
      %5056 = vmatmul.mubr.bf16.gmra.mrb[0].mxu0 %v4148
      %v5057 = vpop.f32.mrb[0].mxu0
      %v5058 = vadd.f32 %v4993, %v5057
      %v5059 = vpop.f32.mrb[0].mxu0
      %v5060 = vpop.f32.mrb[0].mxu0
      %v5061 = vadd.f32 %v4996, %v5060
      %v5062 = vpop.f32.mrb[0].mxu0
      %5063 = vmatprep.mubr.bf16.mxu0 0
      %5064 = vmatmul.mubr.bf16.gmra.mrb[0].mxu0 %v4149
      %v5065 = vpop.f32.mrb[0].mxu0
      %v5066 = vadd.f32 %v5001, %v5065
      %v5067 = vpop.f32.mrb[0].mxu0
      %v5068 = vpop.f32.mrb[0].mxu0
      %v5069 = vadd.f32 %v5004, %v5068
      %v5070 = vpop.f32.mrb[0].mxu0
      %5071 = vmatprep.mubr.bf16.mxu0 0
      %5072 = vmatmul.mubr.bf16.gmra.mrb[0].mxu0 %v4150
      %v5073 = vpop.f32.mrb[0].mxu0
      %v5074 = vadd.f32 %v5009, %v5073
      %v5075 = vpop.f32.mrb[0].mxu0
      %v5076 = vpop.f32.mrb[0].mxu0
      %v5077 = vadd.f32 %v5012, %v5076
      %v5078 = vpop.f32.mrb[0].mxu0
      %5079 = vmatprep.mubr.bf16.mxu0 0
      %5080 = vmatmul.mubr.bf16.gmra.mrb[0].mxu0 %v4185
      %v5081 = vpop.f32.mrb[0].mxu0
      %v5082 = vadd.f32 %v5017, %v5081
      %v5083 = vpop.f32.mrb[0].mxu0
      %v5084 = vpop.f32.mrb[0].mxu0
      %v5085 = vadd.f32 %v5020, %v5084
      %v5086 = vpop.f32.mrb[0].mxu0
      %5087 = vdwg.mxu0
      %v5088 = vld [vmem:[%s5] sm:$0x1]
      %v5090 = vlaneseq
      %v5091 = vshrl.u32 %v5090, 7
      %v5092 = vsub.s32 0, %v5091
      %v5093 = vrot.slane %v5088, %v5092
      %v5095 = vmul.f32 %v5058, %v5093
      %v5096 = vmul.f32 %v5061, %v5093
      %v5097 = vmul.f32 %v5066, %v5093
      %v5098 = vmul.f32 %v5069, %v5093
      %v5099 = vmul.f32 %v5074, %v5093
      %v5100 = vmul.f32 %v5077, %v5093
      %v5101 = vmul.f32 %v5082, %v5093
      %v5102 = vmul.f32 %v5085, %v5093
      %v5103 = vld [vmem:[%s6] sm:$0x1]
      %v5105 = vlaneseq
      %v5106 = vshrl.u32 %v5105, 7
      %v5107 = vsub.s32 0, %v5106
      %v5108 = vrot.slane %v5103, %v5107
      %v5110 = vadd.f32 %v5095, %v5108
      %v5111 = vadd.f32 %v5096, %v5108
      %v5112 = vadd.f32 %v5097, %v5108
      %v5113 = vadd.f32 %v5098, %v5108
      %v5114 = vadd.f32 %v5099, %v5108
      %v5115 = vadd.f32 %v5100, %v5108
      %v5116 = vadd.f32 %v5101, %v5108
      %v5117 = vadd.f32 %v5102, %v5108
      %v5118 = vmax.f32 %v5110, 0.0
      %v5119 = vmax.f32 %v5111, 0.0
      %v5120 = vmax.f32 %v5112, 0.0
      %v5121 = vmax.f32 %v5113, 0.0
      %v5122 = vmax.f32 %v5114, 0.0
      %v5123 = vmax.f32 %v5115, 0.0
      %v5124 = vmax.f32 %v5116, 0.0
      %v5125 = vmax.f32 %v5117, 0.0
      %v5134 = vrot.slane %v5118, 7
      %v5135 = vrot.slane %v5119, 7
      %v5136 = vrot.slane %v5120, 7
      %v5137 = vrot.slane %v5121, 7
      %v5138 = vrot.slane %v5122, 7
      %v5139 = vrot.slane %v5123, 7
      %v5140 = vrot.slane %v5124, 7
      %v5141 = vrot.slane %v5125, 7
      %v5150 = vsel %vm3874, 0.0, %v5134
      %v5151 = vsel %vm3874, 0.0, %v5135
      %v5152 = vsel %vm3874, 0.0, %v5136
      %v5153 = vsel %vm3874, 0.0, %v5137
      %v5154 = vsel %vm3874, 0.0, %v5138
      %v5155 = vsel %vm3874, 0.0, %v5139
      %v5156 = vsel %vm3874, 0.0, %v5140
      %v5157 = vsel %vm3874, 0.0, %v5141
      %v5158 = vsel %vm3874, %v5134, 0.0
      %v5159 = vsel %vm3874, %v5135, 0.0
      %v5160 = vsel %vm3874, %v5136, 0.0
      %v5161 = vsel %vm3874, %v5137, 0.0
      %v5162 = vsel %vm3874, %v5138, 0.0
      %v5163 = vsel %vm3874, %v5139, 0.0
      %v5164 = vsel %vm3874, %v5140, 0.0
      %v5165 = vsel %vm3874, %v5141, 0.0
      %v5166 = vld [vmem:[%s7] sm:$0xff]
      %v5167 = vld [vmem:[%s7 + $0x8] sm:$0x1]
      %v5168 = vlaneseq
      %v5169 = vshrl.u32 %v5168, 7
      %v5170 = vsub.s32 0, %v5169
      %v5171 = vrot.slane %v5166, %v5170
      %v5172 = vmul.f32 %v3875, %v5171
      %v5173 = vmul.f32 %v5150, %v5171
      %v5174 = vmul.f32 %v5151, %v5171
      %v5175 = vmul.f32 %v5152, %v5171
      %v5176 = vmul.f32 %v5153, %v5171
      %v5177 = vmul.f32 %v5154, %v5171
      %v5178 = vmul.f32 %v5155, %v5171
      %v5179 = vmul.f32 %v5156, %v5171
      %v5180 = vlaneseq
      %v5181 = vshrl.u32 %v5180, 7
      %v5182 = vsub.s32 1, %v5181
      %v5183 = vrot.slane %v5166, %v5182
      %v5184 = vmul.f32 %v3875, %v5183
      %v5185 = vmul.f32 %v3884, %v5183
      %v5186 = vmul.f32 %v5150, %v5183
      %v5187 = vmul.f32 %v5158, %v5183
      %v5188 = vmul.f32 %v5151, %v5183
      %v5189 = vmul.f32 %v5159, %v5183
      %v5190 = vmul.f32 %v5152, %v5183
      %v5191 = vmul.f32 %v5160, %v5183
      %v5192 = vmul.f32 %v5153, %v5183
      %v5193 = vmul.f32 %v5161, %v5183
      %v5194 = vmul.f32 %v5154, %v5183
      %v5195 = vmul.f32 %v5162, %v5183
      %v5196 = vmul.f32 %v5155, %v5183
      %v5197 = vmul.f32 %v5163, %v5183
      %v5198 = vmul.f32 %v5156, %v5183
      %v5199 = vmul.f32 %v5164, %v5183
      %v5216 = vrot.slane %v5184, 1
      %v5217 = vrot.slane %v5185, 1
      %v5218 = vsel %vm596, %v5216, %v5217
      %v5219 = vrot.slane %v5186, 1
      %v5220 = vrot.slane %v5187, 1
      %v5221 = vsel %vm596, %v5219, %v5220
      %v5222 = vrot.slane %v5188, 1
      %v5223 = vrot.slane %v5189, 1
      %v5224 = vsel %vm596, %v5222, %v5223
      %v5225 = vrot.slane %v5190, 1
      %v5226 = vrot.slane %v5191, 1
      %v5227 = vsel %vm596, %v5225, %v5226
      %v5228 = vrot.slane %v5192, 1
      %v5229 = vrot.slane %v5193, 1
      %v5230 = vsel %vm596, %v5228, %v5229
      %v5231 = vrot.slane %v5194, 1
      %v5232 = vrot.slane %v5195, 1
      %v5233 = vsel %vm596, %v5231, %v5232
      %v5234 = vrot.slane %v5196, 1
      %v5235 = vrot.slane %v5197, 1
      %v5236 = vsel %vm596, %v5234, %v5235
      %v5237 = vrot.slane %v5198, 1
      %v5238 = vrot.slane %v5199, 1
      %v5239 = vsel %vm596, %v5237, %v5238
      %v5248 = vadd.f32 %v5172, %v5218
      %v5249 = vadd.f32 %v5173, %v5221
      %v5250 = vadd.f32 %v5174, %v5224
      %v5251 = vadd.f32 %v5175, %v5227
      %v5252 = vadd.f32 %v5176, %v5230
      %v5253 = vadd.f32 %v5177, %v5233
      %v5254 = vadd.f32 %v5178, %v5236
      %v5255 = vadd.f32 %v5179, %v5239
      %v5256 = vlaneseq
      %v5257 = vshrl.u32 %v5256, 7
      %v5258 = vsub.s32 2, %v5257
      %v5259 = vrot.slane %v5166, %v5258
      %v5260 = vmul.f32 %v3875, %v5259
      %v5261 = vmul.f32 %v3884, %v5259
      %v5262 = vmul.f32 %v5150, %v5259
      %v5263 = vmul.f32 %v5158, %v5259
      %v5264 = vmul.f32 %v5151, %v5259
      %v5265 = vmul.f32 %v5159, %v5259
      %v5266 = vmul.f32 %v5152, %v5259
      %v5267 = vmul.f32 %v5160, %v5259
      %v5268 = vmul.f32 %v5153, %v5259
      %v5269 = vmul.f32 %v5161, %v5259
      %v5270 = vmul.f32 %v5154, %v5259
      %v5271 = vmul.f32 %v5162, %v5259
      %v5272 = vmul.f32 %v5155, %v5259
      %v5273 = vmul.f32 %v5163, %v5259
      %v5274 = vmul.f32 %v5156, %v5259
      %v5275 = vmul.f32 %v5164, %v5259
      %v5292 = vrot.slane %v5260, 2
      %v5293 = vrot.slane %v5261, 2
      %v5294 = vsel %vm677, %v5292, %v5293
      %v5295 = vrot.slane %v5262, 2
      %v5296 = vrot.slane %v5263, 2
      %v5297 = vsel %vm677, %v5295, %v5296
      %v5298 = vrot.slane %v5264, 2
      %v5299 = vrot.slane %v5265, 2
      %v5300 = vsel %vm677, %v5298, %v5299
      %v5301 = vrot.slane %v5266, 2
      %v5302 = vrot.slane %v5267, 2
      %v5303 = vsel %vm677, %v5301, %v5302
      %v5304 = vrot.slane %v5268, 2
      %v5305 = vrot.slane %v5269, 2
      %v5306 = vsel %vm677, %v5304, %v5305
      %v5307 = vrot.slane %v5270, 2
      %v5308 = vrot.slane %v5271, 2
      %v5309 = vsel %vm677, %v5307, %v5308
      %v5310 = vrot.slane %v5272, 2
      %v5311 = vrot.slane %v5273, 2
      %v5312 = vsel %vm677, %v5310, %v5311
      %v5313 = vrot.slane %v5274, 2
      %v5314 = vrot.slane %v5275, 2
      %v5315 = vsel %vm677, %v5313, %v5314
      %v5324 = vadd.f32 %v5248, %v5294
      %v5325 = vadd.f32 %v5249, %v5297
      %v5326 = vadd.f32 %v5250, %v5300
      %v5327 = vadd.f32 %v5251, %v5303
      %v5328 = vadd.f32 %v5252, %v5306
      %v5329 = vadd.f32 %v5253, %v5309
      %v5330 = vadd.f32 %v5254, %v5312
      %v5331 = vadd.f32 %v5255, %v5315
      %v5332 = vlaneseq
      %v5333 = vshrl.u32 %v5332, 7
      %v5334 = vsub.s32 3, %v5333
      %v5335 = vrot.slane %v5166, %v5334
      %v5336 = vmul.f32 %v5150, %v5335
      %v5337 = vmul.f32 %v5151, %v5335
      %v5338 = vmul.f32 %v5152, %v5335
      %v5339 = vmul.f32 %v5153, %v5335
      %v5340 = vmul.f32 %v5154, %v5335
      %v5341 = vmul.f32 %v5155, %v5335
      %v5342 = vmul.f32 %v5156, %v5335
      %v5343 = vmul.f32 %v5157, %v5335
      %v5344 = vadd.f32 %v5324, %v5336
      %v5345 = vadd.f32 %v5325, %v5337
      %v5346 = vadd.f32 %v5326, %v5338
      %v5347 = vadd.f32 %v5327, %v5339
      %v5348 = vadd.f32 %v5328, %v5340
      %v5349 = vadd.f32 %v5329, %v5341
      %v5350 = vadd.f32 %v5330, %v5342
      %v5351 = vadd.f32 %v5331, %v5343
      %v5352 = vlaneseq
      %v5353 = vshrl.u32 %v5352, 7
      %v5354 = vsub.s32 4, %v5353
      %v5355 = vrot.slane %v5166, %v5354
      %v5356 = vmul.f32 %v5150, %v5355
      %v5357 = vmul.f32 %v5158, %v5355
      %v5358 = vmul.f32 %v5151, %v5355
      %v5359 = vmul.f32 %v5159, %v5355
      %v5360 = vmul.f32 %v5152, %v5355
      %v5361 = vmul.f32 %v5160, %v5355
      %v5362 = vmul.f32 %v5153, %v5355
      %v5363 = vmul.f32 %v5161, %v5355
      %v5364 = vmul.f32 %v5154, %v5355
      %v5365 = vmul.f32 %v5162, %v5355
      %v5366 = vmul.f32 %v5155, %v5355
      %v5367 = vmul.f32 %v5163, %v5355
      %v5368 = vmul.f32 %v5156, %v5355
      %v5369 = vmul.f32 %v5164, %v5355
      %v5370 = vmul.f32 %v5157, %v5355
      %v5371 = vmul.f32 %v5165, %v5355
      %v5388 = vrot.slane %v5356, 1
      %v5389 = vrot.slane %v5357, 1
      %v5390 = vsel %vm596, %v5388, %v5389
      %v5391 = vrot.slane %v5358, 1
      %v5392 = vrot.slane %v5359, 1
      %v5393 = vsel %vm596, %v5391, %v5392
      %v5394 = vrot.slane %v5360, 1
      %v5395 = vrot.slane %v5361, 1
      %v5396 = vsel %vm596, %v5394, %v5395
      %v5397 = vrot.slane %v5362, 1
      %v5398 = vrot.slane %v5363, 1
      %v5399 = vsel %vm596, %v5397, %v5398
      %v5400 = vrot.slane %v5364, 1
      %v5401 = vrot.slane %v5365, 1
      %v5402 = vsel %vm596, %v5400, %v5401
      %v5403 = vrot.slane %v5366, 1
      %v5404 = vrot.slane %v5367, 1
      %v5405 = vsel %vm596, %v5403, %v5404
      %v5406 = vrot.slane %v5368, 1
      %v5407 = vrot.slane %v5369, 1
      %v5408 = vsel %vm596, %v5406, %v5407
      %v5409 = vrot.slane %v5370, 1
      %v5410 = vrot.slane %v5371, 1
      %v5411 = vsel %vm596, %v5409, %v5410
      %v5420 = vadd.f32 %v5344, %v5390
      %v5421 = vadd.f32 %v5345, %v5393
      %v5422 = vadd.f32 %v5346, %v5396
      %v5423 = vadd.f32 %v5347, %v5399
      %v5424 = vadd.f32 %v5348, %v5402
      %v5425 = vadd.f32 %v5349, %v5405
      %v5426 = vadd.f32 %v5350, %v5408
      %v5427 = vadd.f32 %v5351, %v5411
      %v5428 = vlaneseq
      %v5429 = vshrl.u32 %v5428, 7
      %v5430 = vsub.s32 5, %v5429
      %v5431 = vrot.slane %v5166, %v5430
      %v5432 = vmul.f32 %v5150, %v5431
      %v5433 = vmul.f32 %v5158, %v5431
      %v5434 = vmul.f32 %v5151, %v5431
      %v5435 = vmul.f32 %v5159, %v5431
      %v5436 = vmul.f32 %v5152, %v5431
      %v5437 = vmul.f32 %v5160, %v5431
      %v5438 = vmul.f32 %v5153, %v5431
      %v5439 = vmul.f32 %v5161, %v5431
      %v5440 = vmul.f32 %v5154, %v5431
      %v5441 = vmul.f32 %v5162, %v5431
      %v5442 = vmul.f32 %v5155, %v5431
      %v5443 = vmul.f32 %v5163, %v5431
      %v5444 = vmul.f32 %v5156, %v5431
      %v5445 = vmul.f32 %v5164, %v5431
      %v5446 = vmul.f32 %v5157, %v5431
      %v5447 = vmul.f32 %v5165, %v5431
      %v5464 = vrot.slane %v5432, 2
      %v5465 = vrot.slane %v5433, 2
      %v5466 = vsel %vm677, %v5464, %v5465
      %v5467 = vrot.slane %v5434, 2
      %v5468 = vrot.slane %v5435, 2
      %v5469 = vsel %vm677, %v5467, %v5468
      %v5470 = vrot.slane %v5436, 2
      %v5471 = vrot.slane %v5437, 2
      %v5472 = vsel %vm677, %v5470, %v5471
      %v5473 = vrot.slane %v5438, 2
      %v5474 = vrot.slane %v5439, 2
      %v5475 = vsel %vm677, %v5473, %v5474
      %v5476 = vrot.slane %v5440, 2
      %v5477 = vrot.slane %v5441, 2
      %v5478 = vsel %vm677, %v5476, %v5477
      %v5479 = vrot.slane %v5442, 2
      %v5480 = vrot.slane %v5443, 2
      %v5481 = vsel %vm677, %v5479, %v5480
      %v5482 = vrot.slane %v5444, 2
      %v5483 = vrot.slane %v5445, 2
      %v5484 = vsel %vm677, %v5482, %v5483
      %v5485 = vrot.slane %v5446, 2
      %v5486 = vrot.slane %v5447, 2
      %v5487 = vsel %vm677, %v5485, %v5486
      %v5496 = vadd.f32 %v5420, %v5466
      %v5497 = vadd.f32 %v5421, %v5469
      %v5498 = vadd.f32 %v5422, %v5472
      %v5499 = vadd.f32 %v5423, %v5475
      %v5500 = vadd.f32 %v5424, %v5478
      %v5501 = vadd.f32 %v5425, %v5481
      %v5502 = vadd.f32 %v5426, %v5484
      %v5503 = vadd.f32 %v5427, %v5487
      %v5504 = vlaneseq
      %v5505 = vshrl.u32 %v5504, 7
      %v5506 = vsub.s32 6, %v5505
      %v5507 = vrot.slane %v5166, %v5506
      %v5508 = vmul.f32 %v5151, %v5507
      %v5509 = vmul.f32 %v5152, %v5507
      %v5510 = vmul.f32 %v5153, %v5507
      %v5511 = vmul.f32 %v5154, %v5507
      %v5512 = vmul.f32 %v5155, %v5507
      %v5513 = vmul.f32 %v5156, %v5507
      %v5514 = vmul.f32 %v5157, %v5507
      %v5515 = vmul.f32 %v3875, %v5507
      %v5516 = vadd.f32 %v5496, %v5508
      %v5517 = vadd.f32 %v5497, %v5509
      %v5518 = vadd.f32 %v5498, %v5510
      %v5519 = vadd.f32 %v5499, %v5511
      %v5520 = vadd.f32 %v5500, %v5512
      %v5521 = vadd.f32 %v5501, %v5513
      %v5522 = vadd.f32 %v5502, %v5514
      %v5523 = vadd.f32 %v5503, %v5515
      %v5524 = vlaneseq
      %v5525 = vshrl.u32 %v5524, 7
      %v5526 = vsub.s32 7, %v5525
      %v5527 = vrot.slane %v5166, %v5526
      %v5528 = vmul.f32 %v5151, %v5527
      %v5529 = vmul.f32 %v5159, %v5527
      %v5530 = vmul.f32 %v5152, %v5527
      %v5531 = vmul.f32 %v5160, %v5527
      %v5532 = vmul.f32 %v5153, %v5527
      %v5533 = vmul.f32 %v5161, %v5527
      %v5534 = vmul.f32 %v5154, %v5527
      %v5535 = vmul.f32 %v5162, %v5527
      %v5536 = vmul.f32 %v5155, %v5527
      %v5537 = vmul.f32 %v5163, %v5527
      %v5538 = vmul.f32 %v5156, %v5527
      %v5539 = vmul.f32 %v5164, %v5527
      %v5540 = vmul.f32 %v5157, %v5527
      %v5541 = vmul.f32 %v5165, %v5527
      %v5542 = vmul.f32 %v3875, %v5527
      %v5543 = vmul.f32 %v3884, %v5527
      %v5560 = vrot.slane %v5528, 1
      %v5561 = vrot.slane %v5529, 1
      %v5562 = vsel %vm596, %v5560, %v5561
      %v5563 = vrot.slane %v5530, 1
      %v5564 = vrot.slane %v5531, 1
      %v5565 = vsel %vm596, %v5563, %v5564
      %v5566 = vrot.slane %v5532, 1
      %v5567 = vrot.slane %v5533, 1
      %v5568 = vsel %vm596, %v5566, %v5567
      %v5569 = vrot.slane %v5534, 1
      %v5570 = vrot.slane %v5535, 1
      %v5571 = vsel %vm596, %v5569, %v5570
      %v5572 = vrot.slane %v5536, 1
      %v5573 = vrot.slane %v5537, 1
      %v5574 = vsel %vm596, %v5572, %v5573
      %v5575 = vrot.slane %v5538, 1
      %v5576 = vrot.slane %v5539, 1
      %v5577 = vsel %vm596, %v5575, %v5576
      %v5578 = vrot.slane %v5540, 1
      %v5579 = vrot.slane %v5541, 1
      %v5580 = vsel %vm596, %v5578, %v5579
      %v5581 = vrot.slane %v5542, 1
      %v5582 = vrot.slane %v5543, 1
      %v5583 = vsel %vm596, %v5581, %v5582
      %v5592 = vadd.f32 %v5516, %v5562
      %v5593 = vadd.f32 %v5517, %v5565
      %v5594 = vadd.f32 %v5518, %v5568
      %v5595 = vadd.f32 %v5519, %v5571
      %v5596 = vadd.f32 %v5520, %v5574
      %v5597 = vadd.f32 %v5521, %v5577
      %v5598 = vadd.f32 %v5522, %v5580
      %v5599 = vadd.f32 %v5523, %v5583
      %v5600 = vlaneseq
      %v5601 = vshrl.u32 %v5600, 7
      %v5602 = vsub.s32 0, %v5601
      %v5603 = vrot.slane %v5167, %v5602
      %v5604 = vmul.f32 %v5151, %v5603
      %v5605 = vmul.f32 %v5159, %v5603
      %v5606 = vmul.f32 %v5152, %v5603
      %v5607 = vmul.f32 %v5160, %v5603
      %v5608 = vmul.f32 %v5153, %v5603
      %v5609 = vmul.f32 %v5161, %v5603
      %v5610 = vmul.f32 %v5154, %v5603
      %v5611 = vmul.f32 %v5162, %v5603
      %v5612 = vmul.f32 %v5155, %v5603
      %v5613 = vmul.f32 %v5163, %v5603
      %v5614 = vmul.f32 %v5156, %v5603
      %v5615 = vmul.f32 %v5164, %v5603
      %v5616 = vmul.f32 %v5157, %v5603
      %v5617 = vmul.f32 %v5165, %v5603
      %v5618 = vmul.f32 %v3875, %v5603
      %v5619 = vmul.f32 %v3884, %v5603
      %v5636 = vrot.slane %v5604, 2
      %v5637 = vrot.slane %v5605, 2
      %v5638 = vsel %vm677, %v5636, %v5637
      %v5639 = vrot.slane %v5606, 2
      %v5640 = vrot.slane %v5607, 2
      %v5641 = vsel %vm677, %v5639, %v5640
      %v5642 = vrot.slane %v5608, 2
      %v5643 = vrot.slane %v5609, 2
      %v5644 = vsel %vm677, %v5642, %v5643
      %v5645 = vrot.slane %v5610, 2
      %v5646 = vrot.slane %v5611, 2
      %v5647 = vsel %vm677, %v5645, %v5646
      %v5648 = vrot.slane %v5612, 2
      %v5649 = vrot.slane %v5613, 2
      %v5650 = vsel %vm677, %v5648, %v5649
      %v5651 = vrot.slane %v5614, 2
      %v5652 = vrot.slane %v5615, 2
      %v5653 = vsel %vm677, %v5651, %v5652
      %v5654 = vrot.slane %v5616, 2
      %v5655 = vrot.slane %v5617, 2
      %v5656 = vsel %vm677, %v5654, %v5655
      %v5657 = vrot.slane %v5618, 2
      %v5658 = vrot.slane %v5619, 2
      %v5659 = vsel %vm677, %v5657, %v5658
      %v5668 = vadd.f32 %v5592, %v5638
      %v5669 = vadd.f32 %v5593, %v5641
      %v5670 = vadd.f32 %v5594, %v5644
      %v5671 = vadd.f32 %v5595, %v5647
      %v5672 = vadd.f32 %v5596, %v5650
      %v5673 = vadd.f32 %v5597, %v5653
      %v5674 = vadd.f32 %v5598, %v5656
      %v5675 = vadd.f32 %v5599, %v5659
      %v5676 = vld [vmem:[%s8] sm:$0x1]
      %v5678 = vlaneseq
      %v5679 = vshrl.u32 %v5678, 7
      %v5680 = vsub.s32 0, %v5679
      %v5681 = vrot.slane %v5676, %v5680
      %v5683 = vadd.f32 %v5668, %v5681
      %v5684 = vadd.f32 %v5669, %v5681
      %v5685 = vadd.f32 %v5670, %v5681
      %v5686 = vadd.f32 %v5671, %v5681
      %v5687 = vadd.f32 %v5672, %v5681
      %v5688 = vadd.f32 %v5673, %v5681
      %v5689 = vadd.f32 %v5674, %v5681
      %v5690 = vadd.f32 %v5675, %v5681
      %v5691 = vpack.c.bf16 %v5684, %v5683
      %v5692 = vpack.c.bf16 %v5686, %v5685
      %v5693 = vpack.c.bf16 %v5688, %v5687
      %v5694 = vpack.c.bf16 %v5690, %v5689
      %v5695 = vld [vmem:[%s9] sm:$0xff]
      %v5696 = vld [vmem:[%s9 + $0x8] sm:$0xff]
      %v5697 = vld [vmem:[%s9 + $0x10] sm:$0xff]
      %v5698 = vld [vmem:[%s9 + $0x18] sm:$0xff]
      %v5699 = vld [vmem:[%s9 + $0x20] sm:$0xff]
      %v5700 = vld [vmem:[%s9 + $0x28] sm:$0xff]
      %v5701 = vld [vmem:[%s9 + $0x30] sm:$0xff]
      %v5702 = vld [vmem:[%s9 + $0x38] sm:$0xff]
      %v5703 = vld [vmem:[%s9 + $0x40] sm:$0xff]
      %v5704 = vld [vmem:[%s9 + $0x48] sm:$0xff]
      %v5705 = vld [vmem:[%s9 + $0x50] sm:$0xff]
      %v5706 = vld [vmem:[%s9 + $0x58] sm:$0xff]
      %v5707 = vld [vmem:[%s9 + $0x60] sm:$0xff]
      %v5708 = vld [vmem:[%s9 + $0x68] sm:$0xff]
      %v5709 = vld [vmem:[%s9 + $0x70] sm:$0xff]
      %v5710 = vld [vmem:[%s9 + $0x78] sm:$0xff]
      %v5711 = vld [vmem:[%s10] sm:$0x3]
      %v5713 = vlaneseq
      %v5714 = vshrl.u32 %v5713, 7
      %v5715 = vsub.s32 0, %v5714
      %v5716 = vrot.slane %v5711, %v5715
      %v5717 = vlaneseq
      %v5718 = vshrl.u32 %v5717, 7
      %v5719 = vsub.s32 1, %v5718
      %v5720 = vrot.slane %v5711, %v5719
      %v5739 = vunpack.c.l.b16 %v5695
      %v5740 = vunpack.c.h.b16 %v5695
      %v5741 = vunpack.c.l.b16 %v5696
      %v5742 = vunpack.c.h.b16 %v5696
      %v5743 = vunpack.c.l.b16 %v5697
      %v5744 = vunpack.c.h.b16 %v5697
      %v5745 = vunpack.c.l.b16 %v5698
      %v5746 = vunpack.c.h.b16 %v5698
      %v5747 = vunpack.c.l.b16 %v5699
      %v5748 = vunpack.c.h.b16 %v5699
      %v5749 = vunpack.c.l.b16 %v5700
      %v5750 = vunpack.c.h.b16 %v5700
      %v5751 = vunpack.c.l.b16 %v5701
      %v5752 = vunpack.c.h.b16 %v5701
      %v5753 = vunpack.c.l.b16 %v5702
      %v5754 = vunpack.c.h.b16 %v5702
      %v5755 = vunpack.c.l.b16 %v5703
      %v5756 = vunpack.c.h.b16 %v5703
      %v5757 = vunpack.c.l.b16 %v5704
      %v5758 = vunpack.c.h.b16 %v5704
      %v5759 = vunpack.c.l.b16 %v5705
      %v5760 = vunpack.c.h.b16 %v5705
      %v5761 = vunpack.c.l.b16 %v5706
      %v5762 = vunpack.c.h.b16 %v5706
      %v5763 = vunpack.c.l.b16 %v5707
      %v5764 = vunpack.c.h.b16 %v5707
      %v5765 = vunpack.c.l.b16 %v5708
      %v5766 = vunpack.c.h.b16 %v5708
      %v5767 = vunpack.c.l.b16 %v5709
      %v5768 = vunpack.c.h.b16 %v5709
      %v5769 = vunpack.c.l.b16 %v5710
      %v5770 = vunpack.c.h.b16 %v5710
      %v5771 = vpack.c.b16 %v5741, %v5739
      %v5772 = vpack.c.b16 %v5742, %v5740
      %v5773 = vpack.c.b16 %v5745, %v5743
      %v5774 = vpack.c.b16 %v5746, %v5744
      %v5775 = vpack.c.b16 %v5749, %v5747
      %v5776 = vpack.c.b16 %v5750, %v5748
      %v5777 = vpack.c.b16 %v5753, %v5751
      %v5778 = vpack.c.b16 %v5754, %v5752
      %v5779 = vpack.c.b16 %v5757, %v5755
      %v5780 = vpack.c.b16 %v5758, %v5756
      %v5781 = vpack.c.b16 %v5761, %v5759
      %v5782 = vpack.c.b16 %v5762, %v5760
      %v5783 = vpack.c.b16 %v5765, %v5763
      %v5784 = vpack.c.b16 %v5766, %v5764
      %v5785 = vpack.c.b16 %v5769, %v5767
      %v5786 = vpack.c.b16 %v5770, %v5768
      %5803 = vmatprep.subr.bf16.mxu0 %v5772
      %5804 = vmatpush1.bf16.msra.mxu0 %v5771
      %5805 = vmatprep.subr.bf16.mxu0 %v5774
      %5806 = vmatpush1.bf16.msra.mxu0 %v5773
      %5807 = vmatprep.subr.bf16.mxu0 %v5776
      %5808 = vmatpush1.bf16.msra.mxu0 %v5775
      %5809 = vmatprep.subr.bf16.mxu0 %v5778
      %5810 = vmatpush1.bf16.msra.mxu0 %v5777
      %5811 = vmatprep.subr.bf16.mxu0 %v5780
      %5812 = vmatpush1.bf16.msra.mxu0 %v5779
      %5813 = vmatprep.subr.bf16.mxu0 %v5782
      %5814 = vmatpush1.bf16.msra.mxu0 %v5781
      %5815 = vmatprep.subr.bf16.mxu0 %v5784
      %5816 = vmatpush1.bf16.msra.mxu0 %v5783
      %5817 = vmatprep.subr.bf16.mxu0 %v5786
      %5818 = vmatpush1.bf16.msra.mxu0 %v5785
      %5819 = vmatprep.subr.bf16.mxu0 0
      %5820 = vmatpush1.bf16.msra.mxu0 0
      %5821 = vmatprep.subr.bf16.mxu0 0
      %5822 = vmatpush1.bf16.msra.mxu0 0
      %5823 = vmatprep.subr.bf16.mxu0 0
      %5824 = vmatpush1.bf16.msra.mxu0 0
      %5825 = vmatprep.subr.bf16.mxu0 0
      %5826 = vmatpush1.bf16.msra.mxu0 0
      %5827 = vmatprep.subr.bf16.mxu0 0
      %5828 = vmatpush1.bf16.msra.mxu0 0
      %5829 = vmatprep.subr.bf16.mxu0 0
      %5830 = vmatpush1.bf16.msra.mxu0 0
      %5831 = vmatprep.subr.bf16.mxu0 0
      %5832 = vmatpush1.bf16.msra.mxu0 0
      %5833 = vmatprep.subr.bf16.mxu0 0
      %5834 = vmatpush1.bf16.msra.mxu0 0
      %5835 = vmatprep.mubr.bf16.mxu0 0
      %5836 = vmatmul.mubr.bf16.gmra.mrb[0].mxu0 %v5691
      %v5837 = vpop.f32.mrb[0].mxu0
      %v5838 = vadd.f32 %v5716, %v5837
      %v5839 = vpop.f32.mrb[0].mxu0
      %v5840 = vadd.f32 %v5720, %v5839
      %v5841 = vpop.f32.mrb[0].mxu0
      %v5842 = vadd.f32 %v5716, %v5841
      %v5843 = vpop.f32.mrb[0].mxu0
      %v5844 = vadd.f32 %v5720, %v5843
      %5845 = vmatprep.mubr.bf16.mxu0 0
      %5846 = vmatmul.mubr.bf16.gmra.mrb[0].mxu0 %v5692
      %v5847 = vpop.f32.mrb[0].mxu0
      %v5848 = vadd.f32 %v5716, %v5847
      %v5849 = vpop.f32.mrb[0].mxu0
      %v5850 = vadd.f32 %v5720, %v5849
      %v5851 = vpop.f32.mrb[0].mxu0
      %v5852 = vadd.f32 %v5716, %v5851
      %v5853 = vpop.f32.mrb[0].mxu0
      %v5854 = vadd.f32 %v5720, %v5853
      %5855 = vmatprep.mubr.bf16.mxu0 0
      %5856 = vmatmul.mubr.bf16.gmra.mrb[0].mxu0 %v5693
      %v5857 = vpop.f32.mrb[0].mxu0
      %v5858 = vadd.f32 %v5716, %v5857
      %v5859 = vpop.f32.mrb[0].mxu0
      %v5860 = vadd.f32 %v5720, %v5859
      %v5861 = vpop.f32.mrb[0].mxu0
      %v5862 = vadd.f32 %v5716, %v5861
      %v5863 = vpop.f32.mrb[0].mxu0
      %v5864 = vadd.f32 %v5720, %v5863
      %5865 = vmatprep.mubr.bf16.mxu0 0
      %5866 = vmatmul.mubr.bf16.gmra.mrb[0].mxu0 %v5694
      %v5867 = vpop.f32.mrb[0].mxu0
      %v5868 = vadd.f32 %v5716, %v5867
      %v5869 = vpop.f32.mrb[0].mxu0
      %v5870 = vadd.f32 %v5720, %v5869
      %v5871 = vpop.f32.mrb[0].mxu0
      %v5872 = vadd.f32 %v5716, %v5871
      %v5873 = vpop.f32.mrb[0].mxu0
      %v5874 = vadd.f32 %v5720, %v5873
      %5875 = vdwg.mxu0
      %v5876 = vadd.f32 %v5838, %v5842
      %v5877 = vadd.f32 %v5876, %v5848
      %v5878 = vadd.f32 %v5877, %v5852
      %v5879 = vadd.f32 %v5878, %v5858
      %v5880 = vadd.f32 %v5879, %v5862
      %v5881 = vadd.f32 %v5880, %v5868
      %v5882 = vadd.f32 %v5881, %v5872
      %v5883 = vrot.slane %v5882, 4
      %v5884 = vadd.f32 %v5882, %v5883
      %v5885 = vrot.slane %v5884, 2
      %v5886 = vadd.f32 %v5884, %v5885
      %v5887 = vrot.slane %v5886, 1
      %v5888 = vadd.f32 %v5886, %v5887
      %v5889 = vsel %vm1783, %v5840, 0.0
      %v5890 = vsel %vm1783, %v5844, 0.0
      %v5891 = vadd.f32 %v5889, %v5890
      %v5892 = vsel %vm1783, %v5850, 0.0
      %v5893 = vadd.f32 %v5891, %v5892
      %v5894 = vsel %vm1783, %v5854, 0.0
      %v5895 = vadd.f32 %v5893, %v5894
      %v5896 = vsel %vm1783, %v5860, 0.0
      %v5897 = vadd.f32 %v5895, %v5896
      %v5898 = vsel %vm1783, %v5864, 0.0
      %v5899 = vadd.f32 %v5897, %v5898
      %v5900 = vsel %vm1783, %v5870, 0.0
      %v5901 = vadd.f32 %v5899, %v5900
      %v5902 = vsel %vm1783, %v5874, 0.0
      %v5903 = vadd.f32 %v5901, %v5902
      %v5904 = vrot.slane %v5903, 4
      %v5905 = vadd.f32 %v5903, %v5904
      %v5906 = vrot.slane %v5905, 2
      %v5907 = vadd.f32 %v5905, %v5906
      %v5908 = vrot.slane %v5907, 1
      %v5909 = vadd.f32 %v5907, %v5908
      %v5910 = vrcp.pop 64.0
      %v5911 = vmul.f32 %v5888, %v5910
      %v5912 = vmul.f32 %v5909, %v5910
      %v5913 = vpack.c.bf16 %v5911, %v5911
      %v5914 = vpack.c.bf16 %v5912, %v5912
      %v5915 = vld [vmem:[%s11] sm:$0xff]
      %v5916 = vld [vmem:[%s11 + $0x8] sm:$0xff]
      %v5917 = vld [vmem:[%s11 + $0x10] sm:$0xff]
      %v5918 = vld [vmem:[%s11 + $0x18] sm:$0xff]
      %v5919 = vld [vmem:[%s11 + $0x20] sm:$0xff]
      %v5920 = vld [vmem:[%s11 + $0x28] sm:$0xff]
      %v5921 = vld [vmem:[%s11 + $0x30] sm:$0xff]
      %v5922 = vld [vmem:[%s11 + $0x38] sm:$0xff]
      %v5923 = vld [vmem:[%s11 + $0x40] sm:$0xff]
      %v5924 = vld [vmem:[%s11 + $0x48] sm:$0xff]
      %v5925 = vld [vmem:[%s11 + $0x50] sm:$0xff]
      %v5926 = vld [vmem:[%s11 + $0x58] sm:$0xff]
      %v5927 = vld [vmem:[%s11 + $0x60] sm:$0xff]
      %v5928 = vld [vmem:[%s11 + $0x68] sm:$0xff]
      %v5929 = vld [vmem:[%s11 + $0x70] sm:$0xff]
      %v5930 = vld [vmem:[%s11 + $0x78] sm:$0xff]
      %v5931 = vld [vmem:[%s11 + $0x80] sm:$0xff]
      %v5932 = vld [vmem:[%s11 + $0x88] sm:$0xff]
      %v5933 = vld [vmem:[%s11 + $0x90] sm:$0xff]
      %v5934 = vld [vmem:[%s11 + $0x98] sm:$0xff]
      %v5935 = vld [vmem:[%s11 + $0xa0] sm:$0xff]
      %v5936 = vld [vmem:[%s11 + $0xa8] sm:$0xff]
      %v5937 = vld [vmem:[%s11 + $0xb0] sm:$0xff]
      %v5938 = vld [vmem:[%s11 + $0xb8] sm:$0xff]
      %v5939 = vld [vmem:[%s11 + $0xc0] sm:$0xff]
      %v5940 = vld [vmem:[%s11 + $0xc8] sm:$0xff]
      %v5941 = vld [vmem:[%s11 + $0xd0] sm:$0xff]
      %v5942 = vld [vmem:[%s11 + $0xd8] sm:$0xff]
      %v5943 = vld [vmem:[%s11 + $0xe0] sm:$0xff]
      %v5944 = vld [vmem:[%s11 + $0xe8] sm:$0xff]
      %v5945 = vld [vmem:[%s11 + $0xf0] sm:$0xff]
      %v5946 = vld [vmem:[%s11 + $0xf8] sm:$0xff]
      %v5947 = vld [vmem:[%s11 + $0x100] sm:$0xff]
      %v5948 = vld [vmem:[%s11 + $0x108] sm:$0xff]
      %v5949 = vld [vmem:[%s11 + $0x110] sm:$0xff]
      %v5950 = vld [vmem:[%s11 + $0x118] sm:$0xff]
      %v5951 = vld [vmem:[%s11 + $0x120] sm:$0xff]
      %v5952 = vld [vmem:[%s11 + $0x128] sm:$0xff]
      %v5953 = vld [vmem:[%s11 + $0x130] sm:$0xff]
      %v5954 = vld [vmem:[%s11 + $0x138] sm:$0xff]
      %v5955 = vld [vmem:[%s11 + $0x140] sm:$0xff]
      %v5956 = vld [vmem:[%s11 + $0x148] sm:$0xff]
      %v5957 = vld [vmem:[%s11 + $0x150] sm:$0xff]
      %v5958 = vld [vmem:[%s11 + $0x158] sm:$0xff]
      %v5959 = vld [vmem:[%s11 + $0x160] sm:$0xff]
      %v5960 = vld [vmem:[%s11 + $0x168] sm:$0xff]
      %v5961 = vld [vmem:[%s11 + $0x170] sm:$0xff]
      %v5962 = vld [vmem:[%s11 + $0x178] sm:$0xff]
      %v5963 = vld [vmem:[%s11 + $0x180] sm:$0xff]
      %v5964 = vld [vmem:[%s11 + $0x188] sm:$0xff]
      %v5965 = vld [vmem:[%s11 + $0x190] sm:$0xff]
      %v5966 = vld [vmem:[%s11 + $0x198] sm:$0xff]
      %v5967 = vld [vmem:[%s11 + $0x1a0] sm:$0xff]
      %v5968 = vld [vmem:[%s11 + $0x1a8] sm:$0xff]
      %v5969 = vld [vmem:[%s11 + $0x1b0] sm:$0xff]
      %v5970 = vld [vmem:[%s11 + $0x1b8] sm:$0xff]
      %v5971 = vld [vmem:[%s11 + $0x1c0] sm:$0xff]
      %v5972 = vld [vmem:[%s11 + $0x1c8] sm:$0xff]
      %v5973 = vld [vmem:[%s11 + $0x1d0] sm:$0xff]
      %v5974 = vld [vmem:[%s11 + $0x1d8] sm:$0xff]
      %v5975 = vld [vmem:[%s11 + $0x1e0] sm:$0xff]
      %v5976 = vld [vmem:[%s11 + $0x1e8] sm:$0xff]
      %v5977 = vld [vmem:[%s11 + $0x1f0] sm:$0xff]
      %v5978 = vld [vmem:[%s11 + $0x1f8] sm:$0xff]
      %v5979 = vld [vmem:[%s11 + $0x200] sm:$0xff]
      %v5980 = vld [vmem:[%s11 + $0x208] sm:$0xff]
      %v5981 = vld [vmem:[%s11 + $0x210] sm:$0xff]
      %v5982 = vld [vmem:[%s11 + $0x218] sm:$0xff]
      %v5983 = vld [vmem:[%s11 + $0x220] sm:$0xff]
      %v5984 = vld [vmem:[%s11 + $0x228] sm:$0xff]
      %v5985 = vld [vmem:[%s11 + $0x230] sm:$0xff]
      %v5986 = vld [vmem:[%s11 + $0x238] sm:$0xff]
      %v5987 = vld [vmem:[%s11 + $0x240] sm:$0xff]
      %v5988 = vld [vmem:[%s11 + $0x248] sm:$0xff]
      %v5989 = vld [vmem:[%s11 + $0x250] sm:$0xff]
      %v5990 = vld [vmem:[%s11 + $0x258] sm:$0xff]
      %v5991 = vld [vmem:[%s11 + $0x260] sm:$0xff]
      %v5992 = vld [vmem:[%s11 + $0x268] sm:$0xff]
      %v5993 = vld [vmem:[%s11 + $0x270] sm:$0xff]
      %v5994 = vld [vmem:[%s11 + $0x278] sm:$0xff]
      %v5995 = vld [vmem:[%s11 + $0x280] sm:$0xff]
      %v5996 = vld [vmem:[%s11 + $0x288] sm:$0xff]
      %v5997 = vld [vmem:[%s11 + $0x290] sm:$0xff]
      %v5998 = vld [vmem:[%s11 + $0x298] sm:$0xff]
      %v5999 = vld [vmem:[%s11 + $0x2a0] sm:$0xff]
      %v6000 = vld [vmem:[%s11 + $0x2a8] sm:$0xff]
      %v6001 = vld [vmem:[%s11 + $0x2b0] sm:$0xff]
      %v6002 = vld [vmem:[%s11 + $0x2b8] sm:$0xff]
      %v6003 = vld [vmem:[%s11 + $0x2c0] sm:$0xff]
      %v6004 = vld [vmem:[%s11 + $0x2c8] sm:$0xff]
      %v6005 = vld [vmem:[%s11 + $0x2d0] sm:$0xff]
      %v6006 = vld [vmem:[%s11 + $0x2d8] sm:$0xff]
      %v6007 = vld [vmem:[%s11 + $0x2e0] sm:$0xff]
      %v6008 = vld [vmem:[%s11 + $0x2e8] sm:$0xff]
      %v6009 = vld [vmem:[%s11 + $0x2f0] sm:$0xff]
      %v6010 = vld [vmem:[%s11 + $0x2f8] sm:$0xff]
      %v6011 = vld [vmem:[%s12] sm:$0xff]
      %v6108 = vunpack.c.l.b16 %v5915
      %v6109 = vunpack.c.h.b16 %v5915
      %v6110 = vunpack.c.l.b16 %v5916
      %v6111 = vunpack.c.h.b16 %v5916
      %v6112 = vunpack.c.l.b16 %v5917
      %v6113 = vunpack.c.h.b16 %v5917
      %v6114 = vunpack.c.l.b16 %v5918
      %v6115 = vunpack.c.h.b16 %v5918
      %v6116 = vunpack.c.l.b16 %v5919
      %v6117 = vunpack.c.h.b16 %v5919
      %v6118 = vunpack.c.l.b16 %v5920
      %v6119 = vunpack.c.h.b16 %v5920
      %v6120 = vunpack.c.l.b16 %v5921
      %v6121 = vunpack.c.h.b16 %v5921
      %v6122 = vunpack.c.l.b16 %v5922
      %v6123 = vunpack.c.h.b16 %v5922
      %v6124 = vunpack.c.l.b16 %v5923
      %v6125 = vunpack.c.h.b16 %v5923
      %v6126 = vunpack.c.l.b16 %v5924
      %v6127 = vunpack.c.h.b16 %v5924
      %v6128 = vunpack.c.l.b16 %v5925
      %v6129 = vunpack.c.h.b16 %v5925
      %v6130 = vunpack.c.l.b16 %v5926
      %v6131 = vunpack.c.h.b16 %v5926
      %v6132 = vunpack.c.l.b16 %v5927
      %v6133 = vunpack.c.h.b16 %v5927
      %v6134 = vunpack.c.l.b16 %v5928
      %v6135 = vunpack.c.h.b16 %v5928
      %v6136 = vunpack.c.l.b16 %v5929
      %v6137 = vunpack.c.h.b16 %v5929
      %v6138 = vunpack.c.l.b16 %v5930
      %v6139 = vunpack.c.h.b16 %v5930
      %v6140 = vunpack.c.l.b16 %v5931
      %v6141 = vunpack.c.h.b16 %v5931
      %v6142 = vunpack.c.l.b16 %v5932
      %v6143 = vunpack.c.h.b16 %v5932
      %v6144 = vunpack.c.l.b16 %v5933
      %v6145 = vunpack.c.h.b16 %v5933
      %v6146 = vunpack.c.l.b16 %v5934
      %v6147 = vunpack.c.h.b16 %v5934
      %v6148 = vunpack.c.l.b16 %v5935
      %v6149 = vunpack.c.h.b16 %v5935
      %v6150 = vunpack.c.l.b16 %v5936
      %v6151 = vunpack.c.h.b16 %v5936
      %v6152 = vunpack.c.l.b16 %v5937
      %v6153 = vunpack.c.h.b16 %v5937
      %v6154 = vunpack.c.l.b16 %v5938
      %v6155 = vunpack.c.h.b16 %v5938
      %v6156 = vunpack.c.l.b16 %v5939
      %v6157 = vunpack.c.h.b16 %v5939
      %v6158 = vunpack.c.l.b16 %v5940
      %v6159 = vunpack.c.h.b16 %v5940
      %v6160 = vunpack.c.l.b16 %v5941
      %v6161 = vunpack.c.h.b16 %v5941
      %v6162 = vunpack.c.l.b16 %v5942
      %v6163 = vunpack.c.h.b16 %v5942
      %v6164 = vunpack.c.l.b16 %v5943
      %v6165 = vunpack.c.h.b16 %v5943
      %v6166 = vunpack.c.l.b16 %v5944
      %v6167 = vunpack.c.h.b16 %v5944
      %v6168 = vunpack.c.l.b16 %v5945
      %v6169 = vunpack.c.h.b16 %v5945
      %v6170 = vunpack.c.l.b16 %v5946
      %v6171 = vunpack.c.h.b16 %v5946
      %v6172 = vunpack.c.l.b16 %v5947
      %v6173 = vunpack.c.h.b16 %v5947
      %v6174 = vunpack.c.l.b16 %v5948
      %v6175 = vunpack.c.h.b16 %v5948
      %v6176 = vunpack.c.l.b16 %v5949
      %v6177 = vunpack.c.h.b16 %v5949
      %v6178 = vunpack.c.l.b16 %v5950
      %v6179 = vunpack.c.h.b16 %v5950
      %v6180 = vunpack.c.l.b16 %v5951
      %v6181 = vunpack.c.h.b16 %v5951
      %v6182 = vunpack.c.l.b16 %v5952
      %v6183 = vunpack.c.h.b16 %v5952
      %v6184 = vunpack.c.l.b16 %v5953
      %v6185 = vunpack.c.h.b16 %v5953
      %v6186 = vunpack.c.l.b16 %v5954
      %v6187 = vunpack.c.h.b16 %v5954
      %v6188 = vunpack.c.l.b16 %v5955
      %v6189 = vunpack.c.h.b16 %v5955
      %v6190 = vunpack.c.l.b16 %v5956
      %v6191 = vunpack.c.h.b16 %v5956
      %v6192 = vunpack.c.l.b16 %v5957
      %v6193 = vunpack.c.h.b16 %v5957
      %v6194 = vunpack.c.l.b16 %v5958
      %v6195 = vunpack.c.h.b16 %v5958
      %v6196 = vunpack.c.l.b16 %v5959
      %v6197 = vunpack.c.h.b16 %v5959
      %v6198 = vunpack.c.l.b16 %v5960
      %v6199 = vunpack.c.h.b16 %v5960
      %v6200 = vunpack.c.l.b16 %v5961
      %v6201 = vunpack.c.h.b16 %v5961
      %v6202 = vunpack.c.l.b16 %v5962
      %v6203 = vunpack.c.h.b16 %v5962
      %v6204 = vunpack.c.l.b16 %v5963
      %v6205 = vunpack.c.h.b16 %v5963
      %v6206 = vunpack.c.l.b16 %v5964
      %v6207 = vunpack.c.h.b16 %v5964
      %v6208 = vunpack.c.l.b16 %v5965
      %v6209 = vunpack.c.h.b16 %v5965
      %v6210 = vunpack.c.l.b16 %v5966
      %v6211 = vunpack.c.h.b16 %v5966
      %v6212 = vunpack.c.l.b16 %v5967
      %v6213 = vunpack.c.h.b16 %v5967
      %v6214 = vunpack.c.l.b16 %v5968
      %v6215 = vunpack.c.h.b16 %v5968
      %v6216 = vunpack.c.l.b16 %v5969
      %v6217 = vunpack.c.h.b16 %v5969
      %v6218 = vunpack.c.l.b16 %v5970
      %v6219 = vunpack.c.h.b16 %v5970
      %v6220 = vunpack.c.l.b16 %v5971
      %v6221 = vunpack.c.h.b16 %v5971
      %v6222 = vunpack.c.l.b16 %v5972
      %v6223 = vunpack.c.h.b16 %v5972
      %v6224 = vunpack.c.l.b16 %v5973
      %v6225 = vunpack.c.h.b16 %v5973
      %v6226 = vunpack.c.l.b16 %v5974
      %v6227 = vunpack.c.h.b16 %v5974
      %v6228 = vunpack.c.l.b16 %v5975
      %v6229 = vunpack.c.h.b16 %v5975
      %v6230 = vunpack.c.l.b16 %v5976
      %v6231 = vunpack.c.h.b16 %v5976
      %v6232 = vunpack.c.l.b16 %v5977
      %v6233 = vunpack.c.h.b16 %v5977
      %v6234 = vunpack.c.l.b16 %v5978
      %v6235 = vunpack.c.h.b16 %v5978
      %v6236 = vunpack.c.l.b16 %v5979
      %v6237 = vunpack.c.h.b16 %v5979
      %v6238 = vunpack.c.l.b16 %v5980
      %v6239 = vunpack.c.h.b16 %v5980
      %v6240 = vunpack.c.l.b16 %v5981
      %v6241 = vunpack.c.h.b16 %v5981
      %v6242 = vunpack.c.l.b16 %v5982
      %v6243 = vunpack.c.h.b16 %v5982
      %v6244 = vunpack.c.l.b16 %v5983
      %v6245 = vunpack.c.h.b16 %v5983
      %v6246 = vunpack.c.l.b16 %v5984
      %v6247 = vunpack.c.h.b16 %v5984
      %v6248 = vunpack.c.l.b16 %v5985
      %v6249 = vunpack.c.h.b16 %v5985
      %v6250 = vunpack.c.l.b16 %v5986
      %v6251 = vunpack.c.h.b16 %v5986
      %v6252 = vunpack.c.l.b16 %v5987
      %v6253 = vunpack.c.h.b16 %v5987
      %v6254 = vunpack.c.l.b16 %v5988
      %v6255 = vunpack.c.h.b16 %v5988
      %v6256 = vunpack.c.l.b16 %v5989
      %v6257 = vunpack.c.h.b16 %v5989
      %v6258 = vunpack.c.l.b16 %v5990
      %v6259 = vunpack.c.h.b16 %v5990
      %v6260 = vunpack.c.l.b16 %v5991
      %v6261 = vunpack.c.h.b16 %v5991
      %v6262 = vunpack.c.l.b16 %v5992
      %v6263 = vunpack.c.h.b16 %v5992
      %v6264 = vunpack.c.l.b16 %v5993
      %v6265 = vunpack.c.h.b16 %v5993
      %v6266 = vunpack.c.l.b16 %v5994
      %v6267 = vunpack.c.h.b16 %v5994
      %v6268 = vunpack.c.l.b16 %v5995
      %v6269 = vunpack.c.h.b16 %v5995
      %v6270 = vunpack.c.l.b16 %v5996
      %v6271 = vunpack.c.h.b16 %v5996
      %v6272 = vunpack.c.l.b16 %v5997
      %v6273 = vunpack.c.h.b16 %v5997
      %v6274 = vunpack.c.l.b16 %v5998
      %v6275 = vunpack.c.h.b16 %v5998
      %v6276 = vunpack.c.l.b16 %v5999
      %v6277 = vunpack.c.h.b16 %v5999
      %v6278 = vunpack.c.l.b16 %v6000
      %v6279 = vunpack.c.h.b16 %v6000
      %v6280 = vunpack.c.l.b16 %v6001
      %v6281 = vunpack.c.h.b16 %v6001
      %v6282 = vunpack.c.l.b16 %v6002
      %v6283 = vunpack.c.h.b16 %v6002
      %v6284 = vunpack.c.l.b16 %v6003
      %v6285 = vunpack.c.h.b16 %v6003
      %v6286 = vunpack.c.l.b16 %v6004
      %v6287 = vunpack.c.h.b16 %v6004
      %v6288 = vunpack.c.l.b16 %v6005
      %v6289 = vunpack.c.h.b16 %v6005
      %v6290 = vunpack.c.l.b16 %v6006
      %v6291 = vunpack.c.h.b16 %v6006
      %v6292 = vunpack.c.l.b16 %v6007
      %v6293 = vunpack.c.h.b16 %v6007
      %v6294 = vunpack.c.l.b16 %v6008
      %v6295 = vunpack.c.h.b16 %v6008
      %v6296 = vunpack.c.l.b16 %v6009
      %v6297 = vunpack.c.h.b16 %v6009
      %v6298 = vunpack.c.l.b16 %v6010
      %v6299 = vunpack.c.h.b16 %v6010
      %v6300 = vpack.c.b16 %v6116, %v6108
      %v6301 = vpack.c.b16 %v6117, %v6109
      %v6302 = vpack.c.b16 %v6118, %v6110
      %v6303 = vpack.c.b16 %v6119, %v6111
      %v6304 = vpack.c.b16 %v6120, %v6112
      %v6305 = vpack.c.b16 %v6121, %v6113
      %v6306 = vpack.c.b16 %v6122, %v6114
      %v6307 = vpack.c.b16 %v6123, %v6115
      %v6308 = vpack.c.b16 %v6132, %v6124
      %v6309 = vpack.c.b16 %v6133, %v6125
      %v6310 = vpack.c.b16 %v6134, %v6126
      %v6311 = vpack.c.b16 %v6135, %v6127
      %v6312 = vpack.c.b16 %v6136, %v6128
      %v6313 = vpack.c.b16 %v6137, %v6129
      %v6314 = vpack.c.b16 %v6138, %v6130
      %v6315 = vpack.c.b16 %v6139, %v6131
      %v6316 = vpack.c.b16 %v6148, %v6140
      %v6317 = vpack.c.b16 %v6149, %v6141
      %v6318 = vpack.c.b16 %v6150, %v6142
      %v6319 = vpack.c.b16 %v6151, %v6143
      %v6320 = vpack.c.b16 %v6152, %v6144
      %v6321 = vpack.c.b16 %v6153, %v6145
      %v6322 = vpack.c.b16 %v6154, %v6146
      %v6323 = vpack.c.b16 %v6155, %v6147
      %v6324 = vpack.c.b16 %v6164, %v6156
      %v6325 = vpack.c.b16 %v6165, %v6157
      %v6326 = vpack.c.b16 %v6166, %v6158
      %v6327 = vpack.c.b16 %v6167, %v6159
      %v6328 = vpack.c.b16 %v6168, %v6160
      %v6329 = vpack.c.b16 %v6169, %v6161
      %v6330 = vpack.c.b16 %v6170, %v6162
      %v6331 = vpack.c.b16 %v6171, %v6163
      %v6332 = vpack.c.b16 %v6180, %v6172
      %v6333 = vpack.c.b16 %v6181, %v6173
      %v6334 = vpack.c.b16 %v6182, %v6174
      %v6335 = vpack.c.b16 %v6183, %v6175
      %v6336 = vpack.c.b16 %v6184, %v6176
      %v6337 = vpack.c.b16 %v6185, %v6177
      %v6338 = vpack.c.b16 %v6186, %v6178
      %v6339 = vpack.c.b16 %v6187, %v6179
      %v6340 = vpack.c.b16 %v6196, %v6188
      %v6341 = vpack.c.b16 %v6197, %v6189
      %v6342 = vpack.c.b16 %v6198, %v6190
      %v6343 = vpack.c.b16 %v6199, %v6191
      %v6344 = vpack.c.b16 %v6200, %v6192
      %v6345 = vpack.c.b16 %v6201, %v6193
      %v6346 = vpack.c.b16 %v6202, %v6194
      %v6347 = vpack.c.b16 %v6203, %v6195
      %v6348 = vpack.c.b16 %v6212, %v6204
      %v6349 = vpack.c.b16 %v6213, %v6205
      %v6350 = vpack.c.b16 %v6214, %v6206
      %v6351 = vpack.c.b16 %v6215, %v6207
      %v6352 = vpack.c.b16 %v6216, %v6208
      %v6353 = vpack.c.b16 %v6217, %v6209
      %v6354 = vpack.c.b16 %v6218, %v6210
      %v6355 = vpack.c.b16 %v6219, %v6211
      %v6356 = vpack.c.b16 %v6228, %v6220
      %v6357 = vpack.c.b16 %v6229, %v6221
      %v6358 = vpack.c.b16 %v6230, %v6222
      %v6359 = vpack.c.b16 %v6231, %v6223
      %v6360 = vpack.c.b16 %v6232, %v6224
      %v6361 = vpack.c.b16 %v6233, %v6225
      %v6362 = vpack.c.b16 %v6234, %v6226
      %v6363 = vpack.c.b16 %v6235, %v6227
      %v6364 = vpack.c.b16 %v6244, %v6236
      %v6365 = vpack.c.b16 %v6245, %v6237
      %v6366 = vpack.c.b16 %v6246, %v6238
      %v6367 = vpack.c.b16 %v6247, %v6239
      %v6368 = vpack.c.b16 %v6248, %v6240
      %v6369 = vpack.c.b16 %v6249, %v6241
      %v6370 = vpack.c.b16 %v6250, %v6242
      %v6371 = vpack.c.b16 %v6251, %v6243
      %v6372 = vpack.c.b16 %v6260, %v6252
      %v6373 = vpack.c.b16 %v6261, %v6253
      %v6374 = vpack.c.b16 %v6262, %v6254
      %v6375 = vpack.c.b16 %v6263, %v6255
      %v6376 = vpack.c.b16 %v6264, %v6256
      %v6377 = vpack.c.b16 %v6265, %v6257
      %v6378 = vpack.c.b16 %v6266, %v6258
      %v6379 = vpack.c.b16 %v6267, %v6259
      %v6380 = vpack.c.b16 %v6276, %v6268
      %v6381 = vpack.c.b16 %v6277, %v6269
      %v6382 = vpack.c.b16 %v6278, %v6270
      %v6383 = vpack.c.b16 %v6279, %v6271
      %v6384 = vpack.c.b16 %v6280, %v6272
      %v6385 = vpack.c.b16 %v6281, %v6273
      %v6386 = vpack.c.b16 %v6282, %v6274
      %v6387 = vpack.c.b16 %v6283, %v6275
      %v6388 = vpack.c.b16 %v6292, %v6284
      %v6389 = vpack.c.b16 %v6293, %v6285
      %v6390 = vpack.c.b16 %v6294, %v6286
      %v6391 = vpack.c.b16 %v6295, %v6287
      %v6392 = vpack.c.b16 %v6296, %v6288
      %v6393 = vpack.c.b16 %v6297, %v6289
      %v6394 = vpack.c.b16 %v6298, %v6290
      %v6395 = vpack.c.b16 %v6299, %v6291
      %v6493 = vlaneseq
      %v6494 = vshrl.u32 %v6493, 7
      %v6495 = vsub.s32 0, %v6494
      %v6496 = vrot.slane %v6011, %v6495
      %v6497 = vlaneseq
      %v6498 = vshrl.u32 %v6497, 7
      %v6499 = vsub.s32 1, %v6498
      %v6500 = vrot.slane %v6011, %v6499
      %v6501 = vlaneseq
      %v6502 = vshrl.u32 %v6501, 7
      %v6503 = vsub.s32 2, %v6502
      %v6504 = vrot.slane %v6011, %v6503
      %v6505 = vlaneseq
      %v6506 = vshrl.u32 %v6505, 7
      %v6507 = vsub.s32 3, %v6506
      %v6508 = vrot.slane %v6011, %v6507
      %v6509 = vlaneseq
      %v6510 = vshrl.u32 %v6509, 7
      %v6511 = vsub.s32 4, %v6510
      %v6512 = vrot.slane %v6011, %v6511
      %v6513 = vlaneseq
      %v6514 = vshrl.u32 %v6513, 7
      %v6515 = vsub.s32 5, %v6514
      %v6516 = vrot.slane %v6011, %v6515
      %v6517 = vlaneseq
      %v6518 = vshrl.u32 %v6517, 7
      %v6519 = vsub.s32 6, %v6518
      %v6520 = vrot.slane %v6011, %v6519
      %v6521 = vlaneseq
      %v6522 = vshrl.u32 %v6521, 7
      %v6523 = vsub.s32 7, %v6522
      %v6524 = vrot.slane %v6011, %v6523
      %v6534 = vsel %vm1783, %v5914, 0
      %6536 = vmatprep.subr.bf16.mxu0 %v6301
      %6537 = vmatpush1.bf16.msra.mxu0 %v6300
      %6538 = vmatprep.subr.bf16.mxu0 %v6309
      %6539 = vmatpush1.bf16.msra.mxu0 %v6308
      %6540 = vmatprep.subr.bf16.mxu0 %v6317
      %6541 = vmatpush1.bf16.msra.mxu0 %v6316
      %6542 = vmatprep.subr.bf16.mxu0 %v6325
      %6543 = vmatpush1.bf16.msra.mxu0 %v6324
      %6544 = vmatprep.subr.bf16.mxu0 %v6333
      %6545 = vmatpush1.bf16.msra.mxu0 %v6332
      %6546 = vmatprep.subr.bf16.mxu0 %v6341
      %6547 = vmatpush1.bf16.msra.mxu0 %v6340
      %6548 = vmatprep.subr.bf16.mxu0 %v6349
      %6549 = vmatpush1.bf16.msra.mxu0 %v6348
      %6550 = vmatprep.subr.bf16.mxu0 %v6357
      %6551 = vmatpush1.bf16.msra.mxu0 %v6356
      %6552 = vmatprep.subr.bf16.mxu0 %v6365
      %6553 = vmatpush1.bf16.msra.mxu0 %v6364
      %6554 = vmatprep.subr.bf16.mxu0 %v6373
      %6555 = vmatpush1.bf16.msra.mxu0 %v6372
      %6556 = vmatprep.subr.bf16.mxu0 %v6381
      %6557 = vmatpush1.bf16.msra.mxu0 %v6380
      %6558 = vmatprep.subr.bf16.mxu0 %v6389
      %6559 = vmatpush1.bf16.msra.mxu0 %v6388
      %6560 = vmatprep.subr.bf16.mxu0 0
      %6561 = vmatpush1.bf16.msra.mxu0 0
      %6562 = vmatprep.subr.bf16.mxu0 0
      %6563 = vmatpush1.bf16.msra.mxu0 0
      %6564 = vmatprep.subr.bf16.mxu0 0
      %6565 = vmatpush1.bf16.msra.mxu0 0
      %6566 = vmatprep.subr.bf16.mxu0 0
      %6567 = vmatpush1.bf16.msra.mxu0 0
      %6568 = vmatprep.mubr.bf16.mxu0 %v6534
      %6569 = vmatmul.mubr.bf16.gmra.mrb[0].mxu0 %v5913
      %v6570 = vpop.f32.mrb[0].mxu0
      %v6571 = vadd.f32 %v6496, %v6570
      %v6572 = vpop.f32.mrb[0].mxu0
      %v6573 = vadd.f32 %v6500, %v6572
      %v6574 = vpop.f32.mrb[0].mxu0
      %v6575 = vpop.f32.mrb[0].mxu0
      %6576 = vdwg.mxu0
      %6577 = vmatprep.subr.bf16.mxu0 %v6303
      %6578 = vmatpush1.bf16.msra.mxu0 %v6302
      %6579 = vmatprep.subr.bf16.mxu0 %v6311
      %6580 = vmatpush1.bf16.msra.mxu0 %v6310
      %6581 = vmatprep.subr.bf16.mxu0 %v6319
      %6582 = vmatpush1.bf16.msra.mxu0 %v6318
      %6583 = vmatprep.subr.bf16.mxu0 %v6327
      %6584 = vmatpush1.bf16.msra.mxu0 %v6326
      %6585 = vmatprep.subr.bf16.mxu0 %v6335
      %6586 = vmatpush1.bf16.msra.mxu0 %v6334
      %6587 = vmatprep.subr.bf16.mxu0 %v6343
      %6588 = vmatpush1.bf16.msra.mxu0 %v6342
      %6589 = vmatprep.subr.bf16.mxu0 %v6351
      %6590 = vmatpush1.bf16.msra.mxu0 %v6350
      %6591 = vmatprep.subr.bf16.mxu0 %v6359
      %6592 = vmatpush1.bf16.msra.mxu0 %v6358
      %6593 = vmatprep.subr.bf16.mxu0 %v6367
      %6594 = vmatpush1.bf16.msra.mxu0 %v6366
      %6595 = vmatprep.subr.bf16.mxu0 %v6375
      %6596 = vmatpush1.bf16.msra.mxu0 %v6374
      %6597 = vmatprep.subr.bf16.mxu0 %v6383
      %6598 = vmatpush1.bf16.msra.mxu0 %v6382
      %6599 = vmatprep.subr.bf16.mxu0 %v6391
      %6600 = vmatpush1.bf16.msra.mxu0 %v6390
      %6601 = vmatprep.subr.bf16.mxu0 0
      %6602 = vmatpush1.bf16.msra.mxu0 0
      %6603 = vmatprep.subr.bf16.mxu0 0
      %6604 = vmatpush1.bf16.msra.mxu0 0
      %6605 = vmatprep.subr.bf16.mxu0 0
      %6606 = vmatpush1.bf16.msra.mxu0 0
      %6607 = vmatprep.subr.bf16.mxu0 0
      %6608 = vmatpush1.bf16.msra.mxu0 0
      %6609 = vmatprep.mubr.bf16.mxu0 %v6534
      %6610 = vmatmul.mubr.bf16.gmra.mrb[0].mxu0 %v5913
      %v6611 = vpop.f32.mrb[0].mxu0
      %v6612 = vadd.f32 %v6504, %v6611
      %v6613 = vpop.f32.mrb[0].mxu0
      %v6614 = vadd.f32 %v6508, %v6613
      %v6615 = vpop.f32.mrb[0].mxu0
      %v6616 = vpop.f32.mrb[0].mxu0
      %6617 = vdwg.mxu0
      %6618 = vmatprep.subr.bf16.mxu0 %v6305
      %6619 = vmatpush1.bf16.msra.mxu0 %v6304
      %6620 = vmatprep.subr.bf16.mxu0 %v6313
      %6621 = vmatpush1.bf16.msra.mxu0 %v6312
      %6622 = vmatprep.subr.bf16.mxu0 %v6321
      %6623 = vmatpush1.bf16.msra.mxu0 %v6320
      %6624 = vmatprep.subr.bf16.mxu0 %v6329
      %6625 = vmatpush1.bf16.msra.mxu0 %v6328
      %6626 = vmatprep.subr.bf16.mxu0 %v6337
      %6627 = vmatpush1.bf16.msra.mxu0 %v6336
      %6628 = vmatprep.subr.bf16.mxu0 %v6345
      %6629 = vmatpush1.bf16.msra.mxu0 %v6344
      %6630 = vmatprep.subr.bf16.mxu0 %v6353
      %6631 = vmatpush1.bf16.msra.mxu0 %v6352
      %6632 = vmatprep.subr.bf16.mxu0 %v6361
      %6633 = vmatpush1.bf16.msra.mxu0 %v6360
      %6634 = vmatprep.subr.bf16.mxu0 %v6369
      %6635 = vmatpush1.bf16.msra.mxu0 %v6368
      %6636 = vmatprep.subr.bf16.mxu0 %v6377
      %6637 = vmatpush1.bf16.msra.mxu0 %v6376
      %6638 = vmatprep.subr.bf16.mxu0 %v6385
      %6639 = vmatpush1.bf16.msra.mxu0 %v6384
      %6640 = vmatprep.subr.bf16.mxu0 %v6393
      %6641 = vmatpush1.bf16.msra.mxu0 %v6392
      %6642 = vmatprep.subr.bf16.mxu0 0
      %6643 = vmatpush1.bf16.msra.mxu0 0
      %6644 = vmatprep.subr.bf16.mxu0 0
      %6645 = vmatpush1.bf16.msra.mxu0 0
      %6646 = vmatprep.subr.bf16.mxu0 0
      %6647 = vmatpush1.bf16.msra.mxu0 0
      %6648 = vmatprep.subr.bf16.mxu0 0
      %6649 = vmatpush1.bf16.msra.mxu0 0
      %6650 = vmatprep.mubr.bf16.mxu0 %v6534
      %6651 = vmatmul.mubr.bf16.gmra.mrb[0].mxu0 %v5913
      %v6652 = vpop.f32.mrb[0].mxu0
      %v6653 = vadd.f32 %v6512, %v6652
      %v6654 = vpop.f32.mrb[0].mxu0
      %v6655 = vadd.f32 %v6516, %v6654
      %v6656 = vpop.f32.mrb[0].mxu0
      %v6657 = vpop.f32.mrb[0].mxu0
      %6658 = vdwg.mxu0
      %6659 = vmatprep.subr.bf16.mxu0 %v6307
      %6660 = vmatpush1.bf16.msra.mxu0 %v6306
      %6661 = vmatprep.subr.bf16.mxu0 %v6315
      %6662 = vmatpush1.bf16.msra.mxu0 %v6314
      %6663 = vmatprep.subr.bf16.mxu0 %v6323
      %6664 = vmatpush1.bf16.msra.mxu0 %v6322
      %6665 = vmatprep.subr.bf16.mxu0 %v6331
      %6666 = vmatpush1.bf16.msra.mxu0 %v6330
      %6667 = vmatprep.subr.bf16.mxu0 %v6339
      %6668 = vmatpush1.bf16.msra.mxu0 %v6338
      %6669 = vmatprep.subr.bf16.mxu0 %v6347
      %6670 = vmatpush1.bf16.msra.mxu0 %v6346
      %6671 = vmatprep.subr.bf16.mxu0 %v6355
      %6672 = vmatpush1.bf16.msra.mxu0 %v6354
      %6673 = vmatprep.subr.bf16.mxu0 %v6363
      %6674 = vmatpush1.bf16.msra.mxu0 %v6362
      %6675 = vmatprep.subr.bf16.mxu0 %v6371
      %6676 = vmatpush1.bf16.msra.mxu0 %v6370
      %6677 = vmatprep.subr.bf16.mxu0 %v6379
      %6678 = vmatpush1.bf16.msra.mxu0 %v6378
      %6679 = vmatprep.subr.bf16.mxu0 %v6387
      %6680 = vmatpush1.bf16.msra.mxu0 %v6386
      %6681 = vmatprep.subr.bf16.mxu0 %v6395
      %6682 = vmatpush1.bf16.msra.mxu0 %v6394
      %6683 = vmatprep.subr.bf16.mxu0 0
      %6684 = vmatpush1.bf16.msra.mxu0 0
      %6685 = vmatprep.subr.bf16.mxu0 0
      %6686 = vmatpush1.bf16.msra.mxu0 0
      %6687 = vmatprep.subr.bf16.mxu0 0
      %6688 = vmatpush1.bf16.msra.mxu0 0
      %6689 = vmatprep.subr.bf16.mxu0 0
      %6690 = vmatpush1.bf16.msra.mxu0 0
      %6691 = vmatprep.mubr.bf16.mxu0 %v6534
      %6692 = vmatmul.mubr.bf16.gmra.mrb[0].mxu0 %v5913
      %v6693 = vpop.f32.mrb[0].mxu0
      %v6694 = vadd.f32 %v6520, %v6693
      %v6695 = vpop.f32.mrb[0].mxu0
      %v6696 = vadd.f32 %v6524, %v6695
      %v6697 = vpop.f32.mrb[0].mxu0
      %v6698 = vpop.f32.mrb[0].mxu0
      %6699 = vdwg.mxu0
      %v6700 = vmax.f32 %v6571, 0.0
      %v6701 = vmax.f32 %v6573, 0.0
      %v6702 = vmax.f32 %v6612, 0.0
      %v6703 = vmax.f32 %v6614, 0.0
      %v6704 = vmax.f32 %v6653, 0.0
      %v6705 = vmax.f32 %v6655, 0.0
      %v6706 = vmax.f32 %v6694, 0.0
      %v6707 = vmax.f32 %v6696, 0.0
      %v6708 = vpack.c.bf16 %v6700, %v6700
      %v6709 = vpack.c.bf16 %v6701, %v6701
      %v6710 = vpack.c.bf16 %v6702, %v6702
      %v6711 = vpack.c.bf16 %v6703, %v6703
      %v6712 = vpack.c.bf16 %v6704, %v6704
      %v6713 = vpack.c.bf16 %v6705, %v6705
      %v6714 = vpack.c.bf16 %v6706, %v6706
      %v6715 = vpack.c.bf16 %v6707, %v6707
      %v6716 = vld [vmem:[%s13] sm:$0xf]
      %v6717 = vld [vmem:[%s13 + $0x4] sm:$0xf]
      %v6718 = vld [vmem:[%s13 + $0x8] sm:$0xf]
      %v6719 = vld [vmem:[%s13 + $0xc] sm:$0xf]
      %v6720 = vld [vmem:[%s13 + $0x10] sm:$0xf]
      %v6721 = vld [vmem:[%s13 + $0x14] sm:$0xf]
      %v6722 = vld [vmem:[%s13 + $0x18] sm:$0xf]
      %v6723 = vld [vmem:[%s13 + $0x1c] sm:$0xf]
      %v6724 = vld [vmem:[%s13 + $0x20] sm:$0xf]
      %v6725 = vld [vmem:[%s13 + $0x24] sm:$0xf]
      %v6726 = vld [vmem:[%s13 + $0x28] sm:$0xf]
      %v6727 = vld [vmem:[%s13 + $0x2c] sm:$0xf]
      %v6728 = vld [vmem:[%s13 + $0x30] sm:$0xf]
      %v6729 = vld [vmem:[%s13 + $0x34] sm:$0xf]
      %v6730 = vld [vmem:[%s13 + $0x38] sm:$0xf]
      %v6731 = vld [vmem:[%s13 + $0x3c] sm:$0xf]
      %v6732 = vld [vmem:[%s13 + $0x40] sm:$0xf]
      %v6733 = vld [vmem:[%s13 + $0x44] sm:$0xf]
      %v6734 = vld [vmem:[%s13 + $0x48] sm:$0xf]
      %v6735 = vld [vmem:[%s13 + $0x4c] sm:$0xf]
      %v6736 = vld [vmem:[%s13 + $0x50] sm:$0xf]
      %v6737 = vld [vmem:[%s13 + $0x54] sm:$0xf]
      %v6738 = vld [vmem:[%s13 + $0x58] sm:$0xf]
      %v6739 = vld [vmem:[%s13 + $0x5c] sm:$0xf]
      %v6740 = vld [vmem:[%s13 + $0x60] sm:$0xf]
      %v6741 = vld [vmem:[%s13 + $0x64] sm:$0xf]
      %v6742 = vld [vmem:[%s13 + $0x68] sm:$0xf]
      %v6743 = vld [vmem:[%s13 + $0x6c] sm:$0xf]
      %v6744 = vld [vmem:[%s13 + $0x70] sm:$0xf]
      %v6745 = vld [vmem:[%s13 + $0x74] sm:$0xf]
      %v6746 = vld [vmem:[%s13 + $0x78] sm:$0xf]
      %v6747 = vld [vmem:[%s13 + $0x7c] sm:$0xf]
      %v6748 = vld [vmem:[%s13 + $0x80] sm:$0xf]
      %v6749 = vld [vmem:[%s13 + $0x84] sm:$0xf]
      %v6750 = vld [vmem:[%s13 + $0x88] sm:$0xf]
      %v6751 = vld [vmem:[%s13 + $0x8c] sm:$0xf]
      %v6752 = vld [vmem:[%s13 + $0x90] sm:$0xf]
      %v6753 = vld [vmem:[%s13 + $0x94] sm:$0xf]
      %v6754 = vld [vmem:[%s13 + $0x98] sm:$0xf]
      %v6755 = vld [vmem:[%s13 + $0x9c] sm:$0xf]
      %v6756 = vld [vmem:[%s13 + $0xa0] sm:$0xf]
      %v6757 = vld [vmem:[%s13 + $0xa4] sm:$0xf]
      %v6758 = vld [vmem:[%s13 + $0xa8] sm:$0xf]
      %v6759 = vld [vmem:[%s13 + $0xac] sm:$0xf]
      %v6760 = vld [vmem:[%s13 + $0xb0] sm:$0xf]
      %v6761 = vld [vmem:[%s13 + $0xb4] sm:$0xf]
      %v6762 = vld [vmem:[%s13 + $0xb8] sm:$0xf]
      %v6763 = vld [vmem:[%s13 + $0xbc] sm:$0xf]
      %v6764 = vld [vmem:[%s13 + $0xc0] sm:$0xf]
      %v6765 = vld [vmem:[%s13 + $0xc4] sm:$0xf]
      %v6766 = vld [vmem:[%s13 + $0xc8] sm:$0xf]
      %v6767 = vld [vmem:[%s13 + $0xcc] sm:$0xf]
      %v6768 = vld [vmem:[%s13 + $0xd0] sm:$0xf]
      %v6769 = vld [vmem:[%s13 + $0xd4] sm:$0xf]
      %v6770 = vld [vmem:[%s13 + $0xd8] sm:$0xf]
      %v6771 = vld [vmem:[%s13 + $0xdc] sm:$0xf]
      %v6772 = vld [vmem:[%s13 + $0xe0] sm:$0xf]
      %v6773 = vld [vmem:[%s13 + $0xe4] sm:$0xf]
      %v6774 = vld [vmem:[%s13 + $0xe8] sm:$0xf]
      %v6775 = vld [vmem:[%s13 + $0xec] sm:$0xf]
      %v6776 = vld [vmem:[%s13 + $0xf0] sm:$0xf]
      %v6777 = vld [vmem:[%s13 + $0xf4] sm:$0xf]
      %v6778 = vld [vmem:[%s13 + $0xf8] sm:$0xf]
      %v6779 = vld [vmem:[%s13 + $0xfc] sm:$0xf]
      %v6780 = vld [vmem:[%s13 + $0x100] sm:$0xf]
      %v6781 = vld [vmem:[%s13 + $0x104] sm:$0xf]
      %v6782 = vld [vmem:[%s13 + $0x108] sm:$0xf]
      %v6783 = vld [vmem:[%s13 + $0x10c] sm:$0xf]
      %v6784 = vld [vmem:[%s13 + $0x110] sm:$0xf]
      %v6785 = vld [vmem:[%s13 + $0x114] sm:$0xf]
      %v6786 = vld [vmem:[%s13 + $0x118] sm:$0xf]
      %v6787 = vld [vmem:[%s13 + $0x11c] sm:$0xf]
      %v6788 = vld [vmem:[%s13 + $0x120] sm:$0xf]
      %v6789 = vld [vmem:[%s13 + $0x124] sm:$0xf]
      %v6790 = vld [vmem:[%s13 + $0x128] sm:$0xf]
      %v6791 = vld [vmem:[%s13 + $0x12c] sm:$0xf]
      %v6792 = vld [vmem:[%s13 + $0x130] sm:$0xf]
      %v6793 = vld [vmem:[%s13 + $0x134] sm:$0xf]
      %v6794 = vld [vmem:[%s13 + $0x138] sm:$0xf]
      %v6795 = vld [vmem:[%s13 + $0x13c] sm:$0xf]
      %v6796 = vld [vmem:[%s13 + $0x140] sm:$0xf]
      %v6797 = vld [vmem:[%s13 + $0x144] sm:$0xf]
      %v6798 = vld [vmem:[%s13 + $0x148] sm:$0xf]
      %v6799 = vld [vmem:[%s13 + $0x14c] sm:$0xf]
      %v6800 = vld [vmem:[%s13 + $0x150] sm:$0xf]
      %v6801 = vld [vmem:[%s13 + $0x154] sm:$0xf]
      %v6802 = vld [vmem:[%s13 + $0x158] sm:$0xf]
      %v6803 = vld [vmem:[%s13 + $0x15c] sm:$0xf]
      %v6804 = vld [vmem:[%s13 + $0x160] sm:$0xf]
      %v6805 = vld [vmem:[%s13 + $0x164] sm:$0xf]
      %v6806 = vld [vmem:[%s13 + $0x168] sm:$0xf]
      %v6807 = vld [vmem:[%s13 + $0x16c] sm:$0xf]
      %v6808 = vld [vmem:[%s13 + $0x170] sm:$0xf]
      %v6809 = vld [vmem:[%s13 + $0x174] sm:$0xf]
      %v6810 = vld [vmem:[%s13 + $0x178] sm:$0xf]
      %v6811 = vld [vmem:[%s13 + $0x17c] sm:$0xf]
      %v6812 = vld [vmem:[%s13 + $0x180] sm:$0xf]
      %v6813 = vld [vmem:[%s13 + $0x184] sm:$0xf]
      %v6814 = vld [vmem:[%s13 + $0x188] sm:$0xf]
      %v6815 = vld [vmem:[%s13 + $0x18c] sm:$0xf]
      %v6816 = vld [vmem:[%s13 + $0x190] sm:$0xf]
      %v6817 = vld [vmem:[%s13 + $0x194] sm:$0xf]
      %v6818 = vld [vmem:[%s13 + $0x198] sm:$0xf]
      %v6819 = vld [vmem:[%s13 + $0x19c] sm:$0xf]
      %v6820 = vld [vmem:[%s13 + $0x1a0] sm:$0xf]
      %v6821 = vld [vmem:[%s13 + $0x1a4] sm:$0xf]
      %v6822 = vld [vmem:[%s13 + $0x1a8] sm:$0xf]
      %v6823 = vld [vmem:[%s13 + $0x1ac] sm:$0xf]
      %v6824 = vld [vmem:[%s13 + $0x1b0] sm:$0xf]
      %v6825 = vld [vmem:[%s13 + $0x1b4] sm:$0xf]
      %v6826 = vld [vmem:[%s13 + $0x1b8] sm:$0xf]
      %v6827 = vld [vmem:[%s13 + $0x1bc] sm:$0xf]
      %v6828 = vld [vmem:[%s13 + $0x1c0] sm:$0xf]
      %v6829 = vld [vmem:[%s13 + $0x1c4] sm:$0xf]
      %v6830 = vld [vmem:[%s13 + $0x1c8] sm:$0xf]
      %v6831 = vld [vmem:[%s13 + $0x1cc] sm:$0xf]
      %v6832 = vld [vmem:[%s13 + $0x1d0] sm:$0xf]
      %v6833 = vld [vmem:[%s13 + $0x1d4] sm:$0xf]
      %v6834 = vld [vmem:[%s13 + $0x1d8] sm:$0xf]
      %v6835 = vld [vmem:[%s13 + $0x1dc] sm:$0xf]
      %v6836 = vld [vmem:[%s13 + $0x1e0] sm:$0xf]
      %v6837 = vld [vmem:[%s13 + $0x1e4] sm:$0xf]
      %v6838 = vld [vmem:[%s13 + $0x1e8] sm:$0xf]
      %v6839 = vld [vmem:[%s13 + $0x1ec] sm:$0xf]
      %v6840 = vld [vmem:[%s13 + $0x1f0] sm:$0xf]
      %v6841 = vld [vmem:[%s13 + $0x1f4] sm:$0xf]
      %v6842 = vld [vmem:[%s13 + $0x1f8] sm:$0xf]
      %v6843 = vld [vmem:[%s13 + $0x1fc] sm:$0xf]
      %v6844 = vld [vmem:[%s14] sm:$0x1]
      %v6973 = vunpack.c.l.b16 %v6716
      %v6974 = vunpack.c.l.b16 %v6717
      %v6975 = vunpack.c.l.b16 %v6718
      %v6976 = vunpack.c.l.b16 %v6719
      %v6977 = vunpack.c.l.b16 %v6720
      %v6978 = vunpack.c.l.b16 %v6721
      %v6979 = vunpack.c.l.b16 %v6722
      %v6980 = vunpack.c.l.b16 %v6723
      %v6981 = vunpack.c.l.b16 %v6724
      %v6982 = vunpack.c.l.b16 %v6725
      %v6983 = vunpack.c.l.b16 %v6726
      %v6984 = vunpack.c.l.b16 %v6727
      %v6985 = vunpack.c.l.b16 %v6728
      %v6986 = vunpack.c.l.b16 %v6729
      %v6987 = vunpack.c.l.b16 %v6730
      %v6988 = vunpack.c.l.b16 %v6731
      %v6989 = vunpack.c.l.b16 %v6732
      %v6990 = vunpack.c.l.b16 %v6733
      %v6991 = vunpack.c.l.b16 %v6734
      %v6992 = vunpack.c.l.b16 %v6735
      %v6993 = vunpack.c.l.b16 %v6736
      %v6994 = vunpack.c.l.b16 %v6737
      %v6995 = vunpack.c.l.b16 %v6738
      %v6996 = vunpack.c.l.b16 %v6739
      %v6997 = vunpack.c.l.b16 %v6740
      %v6998 = vunpack.c.l.b16 %v6741
      %v6999 = vunpack.c.l.b16 %v6742
      %v7000 = vunpack.c.l.b16 %v6743
      %v7001 = vunpack.c.l.b16 %v6744
      %v7002 = vunpack.c.l.b16 %v6745
      %v7003 = vunpack.c.l.b16 %v6746
      %v7004 = vunpack.c.l.b16 %v6747
      %v7005 = vunpack.c.l.b16 %v6748
      %v7006 = vunpack.c.l.b16 %v6749
      %v7007 = vunpack.c.l.b16 %v6750
      %v7008 = vunpack.c.l.b16 %v6751
      %v7009 = vunpack.c.l.b16 %v6752
      %v7010 = vunpack.c.l.b16 %v6753
      %v7011 = vunpack.c.l.b16 %v6754
      %v7012 = vunpack.c.l.b16 %v6755
      %v7013 = vunpack.c.l.b16 %v6756
      %v7014 = vunpack.c.l.b16 %v6757
      %v7015 = vunpack.c.l.b16 %v6758
      %v7016 = vunpack.c.l.b16 %v6759
      %v7017 = vunpack.c.l.b16 %v6760
      %v7018 = vunpack.c.l.b16 %v6761
      %v7019 = vunpack.c.l.b16 %v6762
      %v7020 = vunpack.c.l.b16 %v6763
      %v7021 = vunpack.c.l.b16 %v6764
      %v7022 = vunpack.c.l.b16 %v6765
      %v7023 = vunpack.c.l.b16 %v6766
      %v7024 = vunpack.c.l.b16 %v6767
      %v7025 = vunpack.c.l.b16 %v6768
      %v7026 = vunpack.c.l.b16 %v6769
      %v7027 = vunpack.c.l.b16 %v6770
      %v7028 = vunpack.c.l.b16 %v6771
      %v7029 = vunpack.c.l.b16 %v6772
      %v7030 = vunpack.c.l.b16 %v6773
      %v7031 = vunpack.c.l.b16 %v6774
      %v7032 = vunpack.c.l.b16 %v6775
      %v7033 = vunpack.c.l.b16 %v6776
      %v7034 = vunpack.c.l.b16 %v6777
      %v7035 = vunpack.c.l.b16 %v6778
      %v7036 = vunpack.c.l.b16 %v6779
      %v7037 = vunpack.c.l.b16 %v6780
      %v7038 = vunpack.c.l.b16 %v6781
      %v7039 = vunpack.c.l.b16 %v6782
      %v7040 = vunpack.c.l.b16 %v6783
      %v7041 = vunpack.c.l.b16 %v6784
      %v7042 = vunpack.c.l.b16 %v6785
      %v7043 = vunpack.c.l.b16 %v6786
      %v7044 = vunpack.c.l.b16 %v6787
      %v7045 = vunpack.c.l.b16 %v6788
      %v7046 = vunpack.c.l.b16 %v6789
      %v7047 = vunpack.c.l.b16 %v6790
      %v7048 = vunpack.c.l.b16 %v6791
      %v7049 = vunpack.c.l.b16 %v6792
      %v7050 = vunpack.c.l.b16 %v6793
      %v7051 = vunpack.c.l.b16 %v6794
      %v7052 = vunpack.c.l.b16 %v6795
      %v7053 = vunpack.c.l.b16 %v6796
      %v7054 = vunpack.c.l.b16 %v6797
      %v7055 = vunpack.c.l.b16 %v6798
      %v7056 = vunpack.c.l.b16 %v6799
      %v7057 = vunpack.c.l.b16 %v6800
      %v7058 = vunpack.c.l.b16 %v6801
      %v7059 = vunpack.c.l.b16 %v6802
      %v7060 = vunpack.c.l.b16 %v6803
      %v7061 = vunpack.c.l.b16 %v6804
      %v7062 = vunpack.c.l.b16 %v6805
      %v7063 = vunpack.c.l.b16 %v6806
      %v7064 = vunpack.c.l.b16 %v6807
      %v7065 = vunpack.c.l.b16 %v6808
      %v7066 = vunpack.c.l.b16 %v6809
      %v7067 = vunpack.c.l.b16 %v6810
      %v7068 = vunpack.c.l.b16 %v6811
      %v7069 = vunpack.c.l.b16 %v6812
      %v7070 = vunpack.c.l.b16 %v6813
      %v7071 = vunpack.c.l.b16 %v6814
      %v7072 = vunpack.c.l.b16 %v6815
      %v7073 = vunpack.c.l.b16 %v6816
      %v7074 = vunpack.c.l.b16 %v6817
      %v7075 = vunpack.c.l.b16 %v6818
      %v7076 = vunpack.c.l.b16 %v6819
      %v7077 = vunpack.c.l.b16 %v6820
      %v7078 = vunpack.c.l.b16 %v6821
      %v7079 = vunpack.c.l.b16 %v6822
      %v7080 = vunpack.c.l.b16 %v6823
      %v7081 = vunpack.c.l.b16 %v6824
      %v7082 = vunpack.c.l.b16 %v6825
      %v7083 = vunpack.c.l.b16 %v6826
      %v7084 = vunpack.c.l.b16 %v6827
      %v7085 = vunpack.c.l.b16 %v6828
      %v7086 = vunpack.c.l.b16 %v6829
      %v7087 = vunpack.c.l.b16 %v6830
      %v7088 = vunpack.c.l.b16 %v6831
      %v7089 = vunpack.c.l.b16 %v6832
      %v7090 = vunpack.c.l.b16 %v6833
      %v7091 = vunpack.c.l.b16 %v6834
      %v7092 = vunpack.c.l.b16 %v6835
      %v7093 = vunpack.c.l.b16 %v6836
      %v7094 = vunpack.c.l.b16 %v6837
      %v7095 = vunpack.c.l.b16 %v6838
      %v7096 = vunpack.c.l.b16 %v6839
      %v7097 = vunpack.c.l.b16 %v6840
      %v7098 = vunpack.c.l.b16 %v6841
      %v7099 = vunpack.c.l.b16 %v6842
      %v7100 = vunpack.c.l.b16 %v6843
      %v7101 = vpack.c.b16 %v6974, %v6973
      %v7102 = vpack.c.b16 %v6976, %v6975
      %v7103 = vpack.c.b16 %v6978, %v6977
      %v7104 = vpack.c.b16 %v6980, %v6979
      %v7105 = vpack.c.b16 %v6982, %v6981
      %v7106 = vpack.c.b16 %v6984, %v6983
      %v7107 = vpack.c.b16 %v6986, %v6985
      %v7108 = vpack.c.b16 %v6988, %v6987
      %v7109 = vpack.c.b16 %v6990, %v6989
      %v7110 = vpack.c.b16 %v6992, %v6991
      %v7111 = vpack.c.b16 %v6994, %v6993
      %v7112 = vpack.c.b16 %v6996, %v6995
      %v7113 = vpack.c.b16 %v6998, %v6997
      %v7114 = vpack.c.b16 %v7000, %v6999
      %v7115 = vpack.c.b16 %v7002, %v7001
      %v7116 = vpack.c.b16 %v7004, %v7003
      %v7117 = vpack.c.b16 %v7006, %v7005
      %v7118 = vpack.c.b16 %v7008, %v7007
      %v7119 = vpack.c.b16 %v7010, %v7009
      %v7120 = vpack.c.b16 %v7012, %v7011
      %v7121 = vpack.c.b16 %v7014, %v7013
      %v7122 = vpack.c.b16 %v7016, %v7015
      %v7123 = vpack.c.b16 %v7018, %v7017
      %v7124 = vpack.c.b16 %v7020, %v7019
      %v7125 = vpack.c.b16 %v7022, %v7021
      %v7126 = vpack.c.b16 %v7024, %v7023
      %v7127 = vpack.c.b16 %v7026, %v7025
      %v7128 = vpack.c.b16 %v7028, %v7027
      %v7129 = vpack.c.b16 %v7030, %v7029
      %v7130 = vpack.c.b16 %v7032, %v7031
      %v7131 = vpack.c.b16 %v7034, %v7033
      %v7132 = vpack.c.b16 %v7036, %v7035
      %v7133 = vpack.c.b16 %v7038, %v7037
      %v7134 = vpack.c.b16 %v7040, %v7039
      %v7135 = vpack.c.b16 %v7042, %v7041
      %v7136 = vpack.c.b16 %v7044, %v7043
      %v7137 = vpack.c.b16 %v7046, %v7045
      %v7138 = vpack.c.b16 %v7048, %v7047
      %v7139 = vpack.c.b16 %v7050, %v7049
      %v7140 = vpack.c.b16 %v7052, %v7051
      %v7141 = vpack.c.b16 %v7054, %v7053
      %v7142 = vpack.c.b16 %v7056, %v7055
      %v7143 = vpack.c.b16 %v7058, %v7057
      %v7144 = vpack.c.b16 %v7060, %v7059
      %v7145 = vpack.c.b16 %v7062, %v7061
      %v7146 = vpack.c.b16 %v7064, %v7063
      %v7147 = vpack.c.b16 %v7066, %v7065
      %v7148 = vpack.c.b16 %v7068, %v7067
      %v7149 = vpack.c.b16 %v7070, %v7069
      %v7150 = vpack.c.b16 %v7072, %v7071
      %v7151 = vpack.c.b16 %v7074, %v7073
      %v7152 = vpack.c.b16 %v7076, %v7075
      %v7153 = vpack.c.b16 %v7078, %v7077
      %v7154 = vpack.c.b16 %v7080, %v7079
      %v7155 = vpack.c.b16 %v7082, %v7081
      %v7156 = vpack.c.b16 %v7084, %v7083
      %v7157 = vpack.c.b16 %v7086, %v7085
      %v7158 = vpack.c.b16 %v7088, %v7087
      %v7159 = vpack.c.b16 %v7090, %v7089
      %v7160 = vpack.c.b16 %v7092, %v7091
      %v7161 = vpack.c.b16 %v7094, %v7093
      %v7162 = vpack.c.b16 %v7096, %v7095
      %v7163 = vpack.c.b16 %v7098, %v7097
      %v7164 = vpack.c.b16 %v7100, %v7099
      %7229 = vmatprep.subr.bf16.mxu0 0
      %7230 = vmatpush1.bf16.msra.mxu0 %v7101
      %7231 = vmatprep.subr.bf16.mxu0 0
      %7232 = vmatpush1.bf16.msra.mxu0 %v7102
      %7233 = vmatprep.subr.bf16.mxu0 0
      %7234 = vmatpush1.bf16.msra.mxu0 %v7103
      %7235 = vmatprep.subr.bf16.mxu0 0
      %7236 = vmatpush1.bf16.msra.mxu0 %v7104
      %7237 = vmatprep.subr.bf16.mxu0 0
      %7238 = vmatpush1.bf16.msra.mxu0 %v7105
      %7239 = vmatprep.subr.bf16.mxu0 0
      %7240 = vmatpush1.bf16.msra.mxu0 %v7106
      %7241 = vmatprep.subr.bf16.mxu0 0
      %7242 = vmatpush1.bf16.msra.mxu0 %v7107
      %7243 = vmatprep.subr.bf16.mxu0 0
      %7244 = vmatpush1.bf16.msra.mxu0 %v7108
      %7245 = vmatprep.subr.bf16.mxu0 0
      %7246 = vmatpush1.bf16.msra.mxu0 %v7109
      %7247 = vmatprep.subr.bf16.mxu0 0
      %7248 = vmatpush1.bf16.msra.mxu0 %v7110
      %7249 = vmatprep.subr.bf16.mxu0 0
      %7250 = vmatpush1.bf16.msra.mxu0 %v7111
      %7251 = vmatprep.subr.bf16.mxu0 0
      %7252 = vmatpush1.bf16.msra.mxu0 %v7112
      %7253 = vmatprep.subr.bf16.mxu0 0
      %7254 = vmatpush1.bf16.msra.mxu0 %v7113
      %7255 = vmatprep.subr.bf16.mxu0 0
      %7256 = vmatpush1.bf16.msra.mxu0 %v7114
      %7257 = vmatprep.subr.bf16.mxu0 0
      %7258 = vmatpush1.bf16.msra.mxu0 %v7115
      %7259 = vmatprep.subr.bf16.mxu0 0
      %7260 = vmatpush1.bf16.msra.mxu0 %v7116
      %7261 = vmatprep.mubr.bf16.mxu0 %v6709
      %7262 = vmatmul.mubr.bf16.gmra.mrb[0].mxu0 %v6708
      %v7263 = vpop.f32.mrb[0].mxu0
      %v7264 = vadd.f32 %v6844, %v7263
      %v7265 = vpop.f32.mrb[0].mxu0
      %v7266 = vpop.f32.mrb[0].mxu0
      %v7267 = vpop.f32.mrb[0].mxu0
      %7268 = vdwg.mxu0
      %7269 = vmatprep.subr.bf16.mxu0 0
      %7270 = vmatpush1.bf16.msra.mxu0 %v7117
      %7271 = vmatprep.subr.bf16.mxu0 0
      %7272 = vmatpush1.bf16.msra.mxu0 %v7118
      %7273 = vmatprep.subr.bf16.mxu0 0
      %7274 = vmatpush1.bf16.msra.mxu0 %v7119
      %7275 = vmatprep.subr.bf16.mxu0 0
      %7276 = vmatpush1.bf16.msra.mxu0 %v7120
      %7277 = vmatprep.subr.bf16.mxu0 0
      %7278 = vmatpush1.bf16.msra.mxu0 %v7121
      %7279 = vmatprep.subr.bf16.mxu0 0
      %7280 = vmatpush1.bf16.msra.mxu0 %v7122
      %7281 = vmatprep.subr.bf16.mxu0 0
      %7282 = vmatpush1.bf16.msra.mxu0 %v7123
      %7283 = vmatprep.subr.bf16.mxu0 0
      %7284 = vmatpush1.bf16.msra.mxu0 %v7124
      %7285 = vmatprep.subr.bf16.mxu0 0
      %7286 = vmatpush1.bf16.msra.mxu0 %v7125
      %7287 = vmatprep.subr.bf16.mxu0 0
      %7288 = vmatpush1.bf16.msra.mxu0 %v7126
      %7289 = vmatprep.subr.bf16.mxu0 0
      %7290 = vmatpush1.bf16.msra.mxu0 %v7127
      %7291 = vmatprep.subr.bf16.mxu0 0
      %7292 = vmatpush1.bf16.msra.mxu0 %v7128
      %7293 = vmatprep.subr.bf16.mxu0 0
      %7294 = vmatpush1.bf16.msra.mxu0 %v7129
      %7295 = vmatprep.subr.bf16.mxu0 0
      %7296 = vmatpush1.bf16.msra.mxu0 %v7130
      %7297 = vmatprep.subr.bf16.mxu0 0
      %7298 = vmatpush1.bf16.msra.mxu0 %v7131
      %7299 = vmatprep.subr.bf16.mxu0 0
      %7300 = vmatpush1.bf16.msra.mxu0 %v7132
      %7301 = vmatprep.mubr.bf16.mxu0 %v6711
      %7302 = vmatmul.mubr.bf16.gmra.mrb[0].mxu0 %v6710
      %v7303 = vpop.f32.mrb[0].mxu0
      %v7304 = vadd.f32 %v7264, %v7303
      %v7305 = vpop.f32.mrb[0].mxu0
      %v7306 = vpop.f32.mrb[0].mxu0
      %v7307 = vpop.f32.mrb[0].mxu0
      %7308 = vdwg.mxu0
      %7309 = vmatprep.subr.bf16.mxu0 0
      %7310 = vmatpush1.bf16.msra.mxu0 %v7133
      %7311 = vmatprep.subr.bf16.mxu0 0
      %7312 = vmatpush1.bf16.msra.mxu0 %v7134
      %7313 = vmatprep.subr.bf16.mxu0 0
      %7314 = vmatpush1.bf16.msra.mxu0 %v7135
      %7315 = vmatprep.subr.bf16.mxu0 0
      %7316 = vmatpush1.bf16.msra.mxu0 %v7136
      %7317 = vmatprep.subr.bf16.mxu0 0
      %7318 = vmatpush1.bf16.msra.mxu0 %v7137
      %7319 = vmatprep.subr.bf16.mxu0 0
      %7320 = vmatpush1.bf16.msra.mxu0 %v7138
      %7321 = vmatprep.subr.bf16.mxu0 0
      %7322 = vmatpush1.bf16.msra.mxu0 %v7139
      %7323 = vmatprep.subr.bf16.mxu0 0
      %7324 = vmatpush1.bf16.msra.mxu0 %v7140
      %7325 = vmatprep.subr.bf16.mxu0 0
      %7326 = vmatpush1.bf16.msra.mxu0 %v7141
      %7327 = vmatprep.subr.bf16.mxu0 0
      %7328 = vmatpush1.bf16.msra.mxu0 %v7142
      %7329 = vmatprep.subr.bf16.mxu0 0
      %7330 = vmatpush1.bf16.msra.mxu0 %v7143
      %7331 = vmatprep.subr.bf16.mxu0 0
      %7332 = vmatpush1.bf16.msra.mxu0 %v7144
      %7333 = vmatprep.subr.bf16.mxu0 0
      %7334 = vmatpush1.bf16.msra.mxu0 %v7145
      %7335 = vmatprep.subr.bf16.mxu0 0
      %7336 = vmatpush1.bf16.msra.mxu0 %v7146
      %7337 = vmatprep.subr.bf16.mxu0 0
      %7338 = vmatpush1.bf16.msra.mxu0 %v7147
      %7339 = vmatprep.subr.bf16.mxu0 0
      %7340 = vmatpush1.bf16.msra.mxu0 %v7148
      %7341 = vmatprep.mubr.bf16.mxu0 %v6713
      %7342 = vmatmul.mubr.bf16.gmra.mrb[0].mxu0 %v6712
      %v7343 = vpop.f32.mrb[0].mxu0
      %v7344 = vadd.f32 %v7304, %v7343
      %v7345 = vpop.f32.mrb[0].mxu0
      %v7346 = vpop.f32.mrb[0].mxu0
      %v7347 = vpop.f32.mrb[0].mxu0
      %7348 = vdwg.mxu0
      %7349 = vmatprep.subr.bf16.mxu0 0
      %7350 = vmatpush1.bf16.msra.mxu0 %v7149
      %7351 = vmatprep.subr.bf16.mxu0 0
      %7352 = vmatpush1.bf16.msra.mxu0 %v7150
      %7353 = vmatprep.subr.bf16.mxu0 0
      %7354 = vmatpush1.bf16.msra.mxu0 %v7151
      %7355 = vmatprep.subr.bf16.mxu0 0
      %7356 = vmatpush1.bf16.msra.mxu0 %v7152
      %7357 = vmatprep.subr.bf16.mxu0 0
      %7358 = vmatpush1.bf16.msra.mxu0 %v7153
      %7359 = vmatprep.subr.bf16.mxu0 0
      %7360 = vmatpush1.bf16.msra.mxu0 %v7154
      %7361 = vmatprep.subr.bf16.mxu0 0
      %7362 = vmatpush1.bf16.msra.mxu0 %v7155
      %7363 = vmatprep.subr.bf16.mxu0 0
      %7364 = vmatpush1.bf16.msra.mxu0 %v7156
      %7365 = vmatprep.subr.bf16.mxu0 0
      %7366 = vmatpush1.bf16.msra.mxu0 %v7157
      %7367 = vmatprep.subr.bf16.mxu0 0
      %7368 = vmatpush1.bf16.msra.mxu0 %v7158
      %7369 = vmatprep.subr.bf16.mxu0 0
      %7370 = vmatpush1.bf16.msra.mxu0 %v7159
      %7371 = vmatprep.subr.bf16.mxu0 0
      %7372 = vmatpush1.bf16.msra.mxu0 %v7160
      %7373 = vmatprep.subr.bf16.mxu0 0
      %7374 = vmatpush1.bf16.msra.mxu0 %v7161
      %7375 = vmatprep.subr.bf16.mxu0 0
      %7376 = vmatpush1.bf16.msra.mxu0 %v7162
      %7377 = vmatprep.subr.bf16.mxu0 0
      %7378 = vmatpush1.bf16.msra.mxu0 %v7163
      %7379 = vmatprep.subr.bf16.mxu0 0
      %7380 = vmatpush1.bf16.msra.mxu0 %v7164
      %7381 = vmatprep.mubr.bf16.mxu0 %v6715
      %7382 = vmatmul.mubr.bf16.gmra.mrb[0].mxu0 %v6714
      %v7383 = vpop.f32.mrb[0].mxu0
      %v7384 = vadd.f32 %v7344, %v7383
      %v7385 = vpop.f32.mrb[0].mxu0
      %v7386 = vpop.f32.mrb[0].mxu0
      %v7387 = vpop.f32.mrb[0].mxu0
      %7388 = vdwg.mxu0
      %v7389 = vlaneseq
      %v7390 = vshrl.u32 %v7389, 7
      %v7391 = vsub.s32 0, %v7390
      %v7392 = vrot.slane %v7384, %v7391
      %7393 = vst [vmem:[%s492] sm:$0xff] %v7392
      %p7394 = scmp.lt.s32.totalorder %s26, 1
      %s7395 = scalar_select %p7394, %s26, 1
      %s7396 = smul.addr %s7395, 8
      %s7397 = scalar_lea.vmem %s15, %s7396
      // Predicated region
      $region81: #{efficientnet_b4_forward.1} parent=79 // pred_check
        %p7398 = pneg %p364
      $region82: #{efficientnet_b4_forward.1} parent=79 // pred_check_branch
        %7400 = sbr.rel (%p7398) target = $region84
      $region83: #{efficientnet_b4_forward.1} parent=79 // pred_region
        _
      $region84: #{efficientnet_b4_forward.1} parent=79 // pred_fallthru
        _
    $region80: #{efficientnet_b4_forward.1} parent=5 // pred_fallthru
      _
    %p7401 = scmp.le.s32.totalorder 2, %s21
    // Predicated region
    $region85: #{efficientnet_b4_forward.1} parent=5 // pred_check
      %p7402 = pneg %p7401
    $region86: #{efficientnet_b4_forward.1} parent=5 // pred_check_branch
      %7404 = sbr.rel (%p7402) target = $region88
    $region87: #{efficientnet_b4_forward.1} parent=5 // pred_region
      %s7405 = ssub.s32 %s21, 2
      // Predicated region
      $region89: #{efficientnet_b4_forward.1} parent=87 // pred_check
        %p7406 = pneg %p370
      $region90: #{efficientnet_b4_forward.1} parent=87 // pred_check_branch
        %7408 = sbr.rel (%p7406) target = $region92
      $region91: #{efficientnet_b4_forward.1} parent=87 // pred_region
        %p7409 = scmp.lt.s32.totalorder %s27, 1
        %s7410 = scalar_select %p7409, %s27, 1
        %s7411 = smul.addr %s7410, 8
        %s7412 = scalar_lea.vmem %s15, %s7411
      $region92: #{efficientnet_b4_forward.1} parent=87 // pred_fallthru
        _
    $region88: #{efficientnet_b4_forward.1} parent=5 // pred_fallthru
      _
  $region6: #{efficientnet_b4_forward.1} parent=0 // loop_footer
    %s25 = sadd.s32 1, %s21
  $region7: #{efficientnet_b4_forward.1} parent=0 // loop_footer_branch
    %20 = sbr.rel target = $region3
  $region8: #{efficientnet_b4_forward.1} parent=0 // loop_exit
    _

</llo_original>
